<compile_context>
chip_gen: v6e
topology: v6e:2x2x1
jax: 0.10.0
libtpu: 0.0.40
codegen_flags: <defaults>
</compile_context>

<pallas_src>
import math
import functools

import jax
import jax.numpy as jnp
from jax.experimental import pallas as pl
from jax.experimental.pallas import tpu as pltpu

_VMEM_LIMIT = 32 * 1024 * 1024


# ----------------------------- in-kernel helpers ----------------------------

def _mxu(a, b):
    """MXU matmul with bf16 operands, f32 accumulation."""
    return jnp.dot(a.astype(jnp.bfloat16), b.astype(jnp.bfloat16),
                   preferred_element_type=jnp.float32)


def _mxu_t(a, b):
    """a @ b.T (contract last dims, rhs transposed) with bf16 operands."""
    return jax.lax.dot_general(a.astype(jnp.bfloat16), b.astype(jnp.bfloat16),
                               (((1,), (1,)), ((), ())),
                               preferred_element_type=jnp.float32)


def _softmax_last(s):
    s = s - jnp.max(s, axis=-1, keepdims=True)
    e = jnp.exp(s)
    return e * pl.reciprocal(jnp.sum(e, axis=-1, keepdims=True))   # exact


def _layernorm(x, g, b, eps=1e-5):
    mean = jnp.mean(x, axis=-1, keepdims=True)
    c = x - mean
    var = jnp.mean(c * c, axis=-1, keepdims=True)
    return c * jax.lax.rsqrt(var + eps) * g + b


def _gelu_exact(x):
    # exact-GELU via A&S 7.1.26 erf polynomial (VPU/EUP ops only, f32).
    z = x * 0.7071067811865476
    a = jnp.abs(z)
    t = 1.0 / (1.0 + 0.3275911 * a)
    poly = ((((1.061405429 * t - 1.453152027) * t + 1.421413741) * t
             - 0.284496736) * t + 0.254829592) * t
    erf_abs = 1.0 - poly * jnp.exp(-a * a)
    erf = jnp.where(z < 0.0, -erf_abs, erf_abs)
    return 0.5 * x * (1.0 + erf)


# ------------------------------ fused Pallas kernel --------------------------

def _fused_forward_kernel(
        patch_ref, pe_ref, maskkv_ref, seg_ref,
        conv_w_ref, conv_b_ref, fus_w_ref, fus_b_ref,
        aqkv_w_ref, aqkv_b_ref, aout_w_ref, aout_b_ref,
        lin_w_ref, lin_b_ref, lout_w_ref, lout_b_ref,
        ln1_g_ref, ln1_b_ref, ff1_w_ref, ff1_b_ref,
        ff2_w_ref, ff2_b_ref, ln2_g_ref, ln2_b_ref,
        attn_w_ref, attn_b_ref,
        h0_w_ref, h0_b_ref, h0_g_ref, h0_e_ref,
        h1_w_ref, h1_b_ref, h1_g_ref, h1_e_ref,
        h2_w_ref, h2_b_ref, h2_g_ref, h2_e_ref,
        h3_w_ref, h3_b_ref,
        o_ref, *, d_model, nhead, num_layers):
    """Entire MetaLearningTransformer forward for one batch element (grid=(B,))."""
    D, H, L = d_model, nhead, num_layers
    Dh = D // H

    # ---- multi-scale feature processor (merged conv im2col matmul) + fusion -
    p = patch_ref[0]                                              # [S, 35]
    combined = _mxu(p, conv_w_ref[...]) + conv_b_ref[...]         # [S, 6D]
    x = _mxu(combined, fus_w_ref[...]) + fus_b_ref[...]           # [S, D]

    # ---- AdaptiveAttention + positional encoding ----------------------------
    qkv = _mxu(x, aqkv_w_ref[...]) + aqkv_b_ref[...]              # [S, 3D]
    q, k, v = qkv[:, :D], qkv[:, D:2 * D], qkv[:, 2 * D:]
    attn = _softmax_last(_mxu_t(q, k) * (D ** -0.5))              # [S, S]
    ctx = _mxu(attn, v)                                           # [S, D]
    x = _mxu(ctx, aout_w_ref[...]) + aout_b_ref[...] + pe_ref[...]

    # ---- transformer encoder layers (block-diagonal batched-head attention) -
    mask_kv = maskkv_ref[...]                                     # [H*S, D]
    seg = seg_ref[...]                                            # [H*S, H*S]
    scale = Dh ** -0.5
    for l in range(L):
        qkv = _mxu(x, lin_w_ref[l]) + lin_b_ref[l]                # [S, 3D]
        q = qkv[:, :D]
        k = qkv[:, D:2 * D]
        v = qkv[:, 2 * D:]
        # block-diagonal stacked K / V: row h*S+s, cols of head h only.
        k_rep = jnp.concatenate([k] * H, axis=0) * mask_kv        # [H*S, D]
        v_rep = jnp.concatenate([v] * H, axis=0) * mask_kv        # [H*S, D]
        s = _mxu_t(q, k_rep) * scale                              # [S, H*S]
        # row max is a valid shift for the per-segment softmax (cancels).
        s = s - jnp.max(s, axis=-1, keepdims=True)
        e = jnp.exp(s)                                            # one EUP pass
        # segment sums broadcast across each head's S columns (f32 matmul).
        denom = jnp.dot(e, seg, preferred_element_type=jnp.float32)
        pr = e * pl.reciprocal(denom)                             # exact
        ctx = _mxu(pr, v_rep)                                     # [S, D] merged heads
        att = _mxu(ctx, lout_w_ref[l]) + lout_b_ref[l]            # out-projection
        y1 = _layernorm(x + att, ln1_g_ref[l], ln1_b_ref[l])
        ff = jnp.maximum(_mxu(y1, ff1_w_ref[l]) + ff1_b_ref[l], 0.0)
        ff = _mxu(ff, ff2_w_ref[l]) + ff2_b_ref[l]
        x = _layernorm(y1 + ff, ln2_g_ref[l], ln2_b_ref[l])

    # ---- attention pooling over the sequence ---------------------------------
    sc = _mxu(x, attn_w_ref[...]) + attn_b_ref[...]               # [S, 1]
    sc = sc - jnp.max(sc, axis=0, keepdims=True)
    ew = jnp.exp(sc)
    pw = ew * pl.reciprocal(jnp.sum(ew, axis=0, keepdims=True))   # [S, 1]
    # (kept as a sublane reduce: transposed-lhs MXU contraction is not
    #  guaranteed to lower; this is off the critical matmul path anyway)
    h = jnp.sum(pw * x, axis=0, keepdims=True)                    # [1, D]

    # ---- prediction head ------------------------------------------------------
    for w_r, b_r, g_r, e_r in ((h0_w_ref, h0_b_ref, h0_g_ref, h0_e_ref),
                               (h1_w_ref, h1_b_ref, h1_g_ref, h1_e_ref),
                               (h2_w_ref, h2_b_ref, h2_g_ref, h2_e_ref)):
        h = _gelu_exact(_layernorm(_mxu(h, w_r[...]) + b_r[...],
                                   g_r[...], e_r[...]))
    o_ref[0] = jnp.tanh(_mxu(h, h3_w_ref[...]) + h3_b_ref[...])   # [1, 1]


# ------------------------------ call wrapper ----------------------------------

def _rep_spec(shape):
    """Full-array block, replicated across the 1-D grid."""
    zeros = (0,) * len(shape)
    return pl.BlockSpec(shape, lambda b, _z=zeros: _z)


def _im2col7(x):
    """k=7 'same'-padded im2col: [B,S,C] -> [B,S,7*C] (index = j*C + c)."""
    B, S, C = x.shape
    xp = jnp.pad(x, ((0, 0), (3, 3), (0, 0)))
    return jnp.concatenate([xp[:, j:j + S, :] for j in range(7)], axis=-1)


def positional_encoding(max_len, d_model):
    pos = jnp.arange(max_len, dtype=jnp.float32)[:, None]
    div = jnp.exp(jnp.arange(0, d_model, 2, dtype=jnp.float32)
                  * (-math.log(10000.0) / d_model))
    pe = jnp.zeros((max_len, d_model), jnp.float32)
    pe = pe.at[:, 0::2].set(jnp.sin(pos * div))
    pe = pe.at[:, 1::2].set(jnp.cos(pos * div))
    return pe


def meta_learning_transformer_forward(kp, prices, volumes, *, d_model, nhead):
    B, S, _ = prices.shape
    D = d_model
    num_layers = kp["lyr_in_w"].shape[0]
    Dh = D // nhead
    HS = nhead * S

    patches = jnp.concatenate([_im2col7(prices.astype(jnp.float32)),
                               _im2col7(volumes.astype(jnp.float32))],
                              axis=-1)                              # [B, S, 35]
    pe = positional_encoding(78, D)[:S]                             # [S, D]

    # Block-diagonal masks (constants, folded by XLA; no in-kernel int div).
    row = jnp.arange(HS, dtype=jnp.int32)[:, None]
    mask_kv = ((row // S) ==
               (jnp.arange(D, dtype=jnp.int32)[None, :] // Dh)).astype(jnp.float32)
    seg_ones = ((row // S) ==
                (jnp.arange(HS, dtype=jnp.int32)[None, :] // S)).astype(jnp.float32)

    ws = [pe, mask_kv, seg_ones,
          kp["conv_w"], kp["conv_b"], kp["fus_w"], kp["fus_b"],
          kp["ada_qkv_w"], kp["ada_qkv_b"], kp["ada_out_w"], kp["ada_out_b"],
          kp["lyr_in_w"], kp["lyr_in_b"], kp["lyr_out_w"], kp["lyr_out_b"],
          kp["lyr_ln1_g"], kp["lyr_ln1_b"], kp["lyr_ff1_w"], kp["lyr_ff1_b"],
          kp["lyr_ff2_w"], kp["lyr_ff2_b"], kp["lyr_ln2_g"], kp["lyr_ln2_b"],
          kp["attn_w"], kp["attn_b"]]
    for i in range(3):
        h = kp["head"][i]
        ws += [h["w"], h["b"], h["g"], h["be"]]
    ws += [kp["head"][3]["w"], kp["head"][3]["b"]]

    P = patches.shape[-1]
    in_specs = [pl.BlockSpec((1, S, P), lambda b: (b, 0, 0))]
    in_specs += [_rep_spec(w.shape) for w in ws]

    out = pl.pallas_call(
        functools.partial(_fused_forward_kernel, d_model=D,
                          nhead=nhead, num_layers=num_layers),
        out_shape=jax.ShapeDtypeStruct((B, 1, 1), jnp.float32),
        grid=(B,),
        in_specs=in_specs,
        out_specs=pl.BlockSpec((1, 1, 1), lambda b: (b, 0, 0)),
        compiler_params=pltpu.CompilerParams(
            dimension_semantics=("parallel",),
            vmem_limit_bytes=_VMEM_LIMIT),
    )(patches, *ws)
    return out.reshape(B, 1)


# ----------------------------- parameter setup --------------------------------

def init_params(key, d_model, nhead, num_layers, dff):
    keys = iter(jax.random.split(key, 64))

    def rnd(shape, scale=0.05):
        return jax.random.normal(next(keys), shape, jnp.float32) * scale

    p = {}
    p["price_convs"] = [(rnd((d_model, 4, k)), rnd((d_model,))) for k in (3, 5, 7)]
    p["volume_convs"] = [(rnd((d_model, 1, k)), rnd((d_model,))) for k in (3, 5, 7)]
    p["fusion"] = (rnd((6 * d_model, d_model)), rnd((d_model,)))
    p["ada_qkv"] = (rnd((d_model, 3 * d_model)), rnd((3 * d_model,)))
    p["ada_out"] = (rnd((d_model, d_model)), rnd((d_model,)))
    p["layers"] = []
    for _ in range(num_layers):
        p["layers"].append(dict(
            in_proj_w=rnd((d_model, 3 * d_model)), in_proj_b=rnd((3 * d_model,)),
            out_proj_w=rnd((d_model, d_model)), out_proj_b=rnd((d_model,)),
            ln1_g=jnp.ones((d_model,), jnp.float32), ln1_b=jnp.zeros((d_model,), jnp.float32),
            lin1_w=rnd((d_model, dff)), lin1_b=rnd((dff,)),
            lin2_w=rnd((dff, d_model)), lin2_b=rnd((d_model,)),
            ln2_g=jnp.ones((d_model,), jnp.float32), ln2_b=jnp.zeros((d_model,), jnp.float32),
        ))
    p["attn_weights"] = (rnd((d_model, 1)), rnd((1,)))
    dims = [(d_model, d_model), (d_model, d_model // 2),
            (d_model // 2, d_model // 4), (d_model // 4, 1)]
    p["head_lin"] = [(rnd((a, b)), rnd((b,))) for a, b in dims]
    p["head_ln"] = [(jnp.ones((d,), jnp.float32), jnp.zeros((d,), jnp.float32))
                    for d in (d_model, d_model // 2, d_model // 4)]
    return p


def prepare_params(p, d_model):
    """Merge Conv1d weights into one block matrix, stack per-layer weights along
    a leading axis, pre-cast matmul weights to bf16, reshape biases to 2-D."""
    D = d_model
    bf16 = jnp.bfloat16

    def r2(b):
        return b.reshape(1, -1).astype(jnp.float32)

    def merge_convs(convs, cin):
        W = jnp.zeros((7 * cin, 3 * D), jnp.float32)
        bs = []
        for idx, ((w, b), k) in enumerate(zip(convs, (3, 5, 7))):
            off = (7 - k) // 2                       # align inside the k=7 im2col
            wt = jnp.transpose(w, (2, 1, 0)).reshape(k * cin, D)
            W = W.at[off * cin:(off + k) * cin, idx * D:(idx + 1) * D].set(wt)
            bs.append(b)
        return W, jnp.concatenate(bs)

    Wp, bp = merge_convs(p["price_convs"], 4)        # [28, 3D]
    Wv, bv = merge_convs(p["volume_convs"], 1)       # [7, 3D]
    W_all = jnp.zeros((35, 6 * D), jnp.float32)
    W_all = W_all.at[:28, :3 * D].set(Wp)
    W_all = W_all.at[28:, 3 * D:].set(Wv)
    b_all = jnp.concatenate([bp, bv])

    def stack_w(key):
        return jnp.stack([l[key] for l in p["layers"]]).astype(bf16)

    def stack_b(key):
        return jnp.stack([r2(l[key]) for l in p["layers"]])

    kp = dict(
        conv_w=W_all.astype(bf16), conv_b=r2(b_all),
        fus_w=p["fusion"][0].astype(bf16), fus_b=r2(p["fusion"][1]),
        ada_qkv_w=p["ada_qkv"][0].astype(bf16), ada_qkv_b=r2(p["ada_qkv"][1]),
        ada_out_w=p["ada_out"][0].astype(bf16), ada_out_b=r2(p["ada_out"][1]),
        lyr_in_w=stack_w("in_proj_w"), lyr_in_b=stack_b("in_proj_b"),
        lyr_out_w=stack_w("out_proj_w"), lyr_out_b=stack_b("out_proj_b"),
        lyr_ln1_g=stack_b("ln1_g"), lyr_ln1_b=stack_b("ln1_b"),
        lyr_ff1_w=stack_w("lin1_w"), lyr_ff1_b=stack_b("lin1_b"),
        lyr_ff2_w=stack_w("lin2_w"), lyr_ff2_b=stack_b("lin2_b"),
        lyr_ln2_g=stack_b("ln2_g"), lyr_ln2_b=stack_b("ln2_b"),
        attn_w=p["attn_weights"][0].astype(bf16),     # [D, 1]
        attn_b=r2(p["attn_weights"][1]),              # [1, 1]
        head=[],
    )
    for i in range(4):
        w, b = p["head_lin"][i]
        entry = dict(w=w.astype(bf16), b=r2(b))
        if i < 3:
            g, be = p["head_ln"][i]
            entry["g"] = r2(g)
            entry["be"] = r2(be)
        kp["head"].append(entry)
    return kp


# ----------------------------------- main --------------------------------------

if __name__ == "__main__":
    D, H, L, DFF = 64, 8, 2, 128     # small, structurally-faithful hyper-params
    B, S = 2, 8

    key = jax.random.PRNGKey(0)
    kpr, kvo, kpar = jax.random.split(key, 3)
    prices = jax.random.normal(kpr, (B, S, 4), jnp.float32)
    volumes = jax.random.normal(kvo, (B, S, 1), jnp.float32)

    raw = init_params(kpar, D, H, L, DFF)
    kparams = prepare_params(raw, D)

    fwd = jax.jit(functools.partial(meta_learning_transformer_forward,
                                    d_model=D, nhead=H))
    out = jax.block_until_ready(fwd(kparams, prices, volumes))
    assert out.shape == (B, 1) and out.dtype == jnp.float32
    print("KERNEL_OK")
</pallas_src>

<mosaic_0001>
module attributes {stable_mosaic.version = 11 : i64} {
  func.func @_fused_forward_kernel(%arg0: i32, %arg1: memref<1x8x35xf32, #tpu.memory_space<vmem>>, %arg2: memref<8x64xf32, #tpu.memory_space<vmem>>, %arg3: memref<64x64xf32, #tpu.memory_space<vmem>>, %arg4: memref<64x64xf32, #tpu.memory_space<vmem>>, %arg5: memref<35x384xbf16, #tpu.memory_space<vmem>>, %arg6: memref<1x384xf32, #tpu.memory_space<vmem>>, %arg7: memref<384x64xbf16, #tpu.memory_space<vmem>>, %arg8: memref<1x64xf32, #tpu.memory_space<vmem>>, %arg9: memref<64x192xbf16, #tpu.memory_space<vmem>>, %arg10: memref<1x192xf32, #tpu.memory_space<vmem>>, %arg11: memref<64x64xbf16, #tpu.memory_space<vmem>>, %arg12: memref<1x64xf32, #tpu.memory_space<vmem>>, %arg13: memref<2x64x192xbf16, #tpu.memory_space<vmem>>, %arg14: memref<2x1x192xf32, #tpu.memory_space<vmem>>, %arg15: memref<2x64x64xbf16, #tpu.memory_space<vmem>>, %arg16: memref<2x1x64xf32, #tpu.memory_space<vmem>>, %arg17: memref<2x1x64xf32, #tpu.memory_space<vmem>>, %arg18: memref<2x1x64xf32, #tpu.memory_space<vmem>>, %arg19: memref<2x64x128xbf16, #tpu.memory_space<vmem>>, %arg20: memref<2x1x128xf32, #tpu.memory_space<vmem>>, %arg21: memref<2x128x64xbf16, #tpu.memory_space<vmem>>, %arg22: memref<2x1x64xf32, #tpu.memory_space<vmem>>, %arg23: memref<2x1x64xf32, #tpu.memory_space<vmem>>, %arg24: memref<2x1x64xf32, #tpu.memory_space<vmem>>, %arg25: memref<64x1xbf16, #tpu.memory_space<vmem>>, %arg26: memref<1x1xf32, #tpu.memory_space<vmem>>, %arg27: memref<64x64xbf16, #tpu.memory_space<vmem>>, %arg28: memref<1x64xf32, #tpu.memory_space<vmem>>, %arg29: memref<1x64xf32, #tpu.memory_space<vmem>>, %arg30: memref<1x64xf32, #tpu.memory_space<vmem>>, %arg31: memref<64x32xbf16, #tpu.memory_space<vmem>>, %arg32: memref<1x32xf32, #tpu.memory_space<vmem>>, %arg33: memref<1x32xf32, #tpu.memory_space<vmem>>, %arg34: memref<1x32xf32, #tpu.memory_space<vmem>>, %arg35: memref<32x16xbf16, #tpu.memory_space<vmem>>, %arg36: memref<1x16xf32, #tpu.memory_space<vmem>>, %arg37: memref<1x16xf32, #tpu.memory_space<vmem>>, %arg38: memref<1x16xf32, #tpu.memory_space<vmem>>, %arg39: memref<16x1xbf16, #tpu.memory_space<vmem>>, %arg40: memref<1x1xf32, #tpu.memory_space<vmem>>, %arg41: memref<1x1x1xf32, #tpu.memory_space<vmem>>) attributes {dimension_semantics = [#tpu.dimension_semantics<parallel>], iteration_bounds = array<i64: 2>, scalar_prefetch = 0 : i64, scratch_operands = 0 : i64, tpu.core_type = #tpu.core_type<tc>, window_params = [{transform_indices = @transform_0, window_bounds = array<i64: 1, 8, 35>}, {pipeline_mode = #tpu.pipeline_mode<synchronous>, transform_indices = @transform_1, window_bounds = array<i64: 8, 64>}, {pipeline_mode = #tpu.pipeline_mode<synchronous>, transform_indices = @transform_2, window_bounds = array<i64: 64, 64>}, {pipeline_mode = #tpu.pipeline_mode<synchronous>, transform_indices = @transform_3, window_bounds = array<i64: 64, 64>}, {pipeline_mode = #tpu.pipeline_mode<synchronous>, transform_indices = @transform_4, window_bounds = array<i64: 35, 384>}, {pipeline_mode = #tpu.pipeline_mode<synchronous>, transform_indices = @transform_5, window_bounds = array<i64: 1, 384>}, {pipeline_mode = #tpu.pipeline_mode<synchronous>, transform_indices = @transform_6, window_bounds = array<i64: 384, 64>}, {pipeline_mode = #tpu.pipeline_mode<synchronous>, transform_indices = @transform_7, window_bounds = array<i64: 1, 64>}, {pipeline_mode = #tpu.pipeline_mode<synchronous>, transform_indices = @transform_8, window_bounds = array<i64: 64, 192>}, {pipeline_mode = #tpu.pipeline_mode<synchronous>, transform_indices = @transform_9, window_bounds = array<i64: 1, 192>}, {pipeline_mode = #tpu.pipeline_mode<synchronous>, transform_indices = @transform_10, window_bounds = array<i64: 64, 64>}, {pipeline_mode = #tpu.pipeline_mode<synchronous>, transform_indices = @transform_11, window_bounds = array<i64: 1, 64>}, {pipeline_mode = #tpu.pipeline_mode<synchronous>, transform_indices = @transform_12, window_bounds = array<i64: 2, 64, 192>}, {pipeline_mode = #tpu.pipeline_mode<synchronous>, transform_indices = @transform_13, window_bounds = array<i64: 2, 1, 192>}, {pipeline_mode = #tpu.pipeline_mode<synchronous>, transform_indices = @transform_14, window_bounds = array<i64: 2, 64, 64>}, {pipeline_mode = #tpu.pipeline_mode<synchronous>, transform_indices = @transform_15, window_bounds = array<i64: 2, 1, 64>}, {pipeline_mode = #tpu.pipeline_mode<synchronous>, transform_indices = @transform_16, window_bounds = array<i64: 2, 1, 64>}, {pipeline_mode = #tpu.pipeline_mode<synchronous>, transform_indices = @transform_17, window_bounds = array<i64: 2, 1, 64>}, {pipeline_mode = #tpu.pipeline_mode<synchronous>, transform_indices = @transform_18, window_bounds = array<i64: 2, 64, 128>}, {pipeline_mode = #tpu.pipeline_mode<synchronous>, transform_indices = @transform_19, window_bounds = array<i64: 2, 1, 128>}, {pipeline_mode = #tpu.pipeline_mode<synchronous>, transform_indices = @transform_20, window_bounds = array<i64: 2, 128, 64>}, {pipeline_mode = #tpu.pipeline_mode<synchronous>, transform_indices = @transform_21, window_bounds = array<i64: 2, 1, 64>}, {pipeline_mode = #tpu.pipeline_mode<synchronous>, transform_indices = @transform_22, window_bounds = array<i64: 2, 1, 64>}, {pipeline_mode = #tpu.pipeline_mode<synchronous>, transform_indices = @transform_23, window_bounds = array<i64: 2, 1, 64>}, {pipeline_mode = #tpu.pipeline_mode<synchronous>, transform_indices = @transform_24, window_bounds = array<i64: 64, 1>}, {pipeline_mode = #tpu.pipeline_mode<synchronous>, transform_indices = @transform_25, window_bounds = array<i64: 1, 1>}, {pipeline_mode = #tpu.pipeline_mode<synchronous>, transform_indices = @transform_26, window_bounds = array<i64: 64, 64>}, {pipeline_mode = #tpu.pipeline_mode<synchronous>, transform_indices = @transform_27, window_bounds = array<i64: 1, 64>}, {pipeline_mode = #tpu.pipeline_mode<synchronous>, transform_indices = @transform_28, window_bounds = array<i64: 1, 64>}, {pipeline_mode = #tpu.pipeline_mode<synchronous>, transform_indices = @transform_29, window_bounds = array<i64: 1, 64>}, {pipeline_mode = #tpu.pipeline_mode<synchronous>, transform_indices = @transform_30, window_bounds = array<i64: 64, 32>}, {pipeline_mode = #tpu.pipeline_mode<synchronous>, transform_indices = @transform_31, window_bounds = array<i64: 1, 32>}, {pipeline_mode = #tpu.pipeline_mode<synchronous>, transform_indices = @transform_32, window_bounds = array<i64: 1, 32>}, {pipeline_mode = #tpu.pipeline_mode<synchronous>, transform_indices = @transform_33, window_bounds = array<i64: 1, 32>}, {pipeline_mode = #tpu.pipeline_mode<synchronous>, transform_indices = @transform_34, window_bounds = array<i64: 32, 16>}, {pipeline_mode = #tpu.pipeline_mode<synchronous>, transform_indices = @transform_35, window_bounds = array<i64: 1, 16>}, {pipeline_mode = #tpu.pipeline_mode<synchronous>, transform_indices = @transform_36, window_bounds = array<i64: 1, 16>}, {pipeline_mode = #tpu.pipeline_mode<synchronous>, transform_indices = @transform_37, window_bounds = array<i64: 1, 16>}, {pipeline_mode = #tpu.pipeline_mode<synchronous>, transform_indices = @transform_38, window_bounds = array<i64: 16, 1>}, {pipeline_mode = #tpu.pipeline_mode<synchronous>, transform_indices = @transform_39, window_bounds = array<i64: 1, 1>}, {transform_indices = @transform_40, window_bounds = array<i64: 1, 1, 1>}]} {
    %c0 = arith.constant 0 : index
    %c0_0 = arith.constant 0 : index
    %c0_1 = arith.constant 0 : index
    %0 = vector.load %arg1[%c0, %c0_0, %c0_1] : memref<1x8x35xf32, #tpu.memory_space<vmem>>, vector<1x8x35xf32>
    %1 = vector.shape_cast %0 : vector<1x8x35xf32> to vector<8x35xf32>
    %c0_2 = arith.constant 0 : index
    %c0_3 = arith.constant 0 : index
    %2 = vector.load %arg5[%c0_2, %c0_3] : memref<35x384xbf16, #tpu.memory_space<vmem>>, vector<35x384xbf16>
    %3 = arith.truncf %1 : vector<8x35xf32> to vector<8x35xbf16>
    %cst = arith.constant dense<0.000000e+00> : vector<8x384xf32>
    %4 = tpu.matmul %3, %2, %cst {dimension_numbers = #tpu.dot_dimension_numbers<[1], [0], [0], [1], [0, 0, 1, 1], [], []>} : vector<8x35xbf16>, vector<35x384xbf16>, vector<8x384xf32> -> vector<8x384xf32>
    %c0_4 = arith.constant 0 : index
    %c0_5 = arith.constant 0 : index
    %5 = vector.load %arg6[%c0_4, %c0_5] : memref<1x384xf32, #tpu.memory_space<vmem>>, vector<1x384xf32>
    %6 = vector.broadcast %5 : vector<1x384xf32> to vector<8x384xf32>
    %7 = arith.addf %4, %6 : vector<8x384xf32>
    %c0_6 = arith.constant 0 : index
    %c0_7 = arith.constant 0 : index
    %8 = vector.load %arg7[%c0_6, %c0_7] : memref<384x64xbf16, #tpu.memory_space<vmem>>, vector<384x64xbf16>
    %9 = arith.truncf %7 : vector<8x384xf32> to vector<8x384xbf16>
    %cst_8 = arith.constant dense<0.000000e+00> : vector<8x64xf32>
    %10 = tpu.matmul %9, %8, %cst_8 {dimension_numbers = #tpu.dot_dimension_numbers<[1], [0], [0], [1], [0, 0, 1, 1], [], []>} : vector<8x384xbf16>, vector<384x64xbf16>, vector<8x64xf32> -> vector<8x64xf32>
    %c0_9 = arith.constant 0 : index
    %c0_10 = arith.constant 0 : index
    %11 = vector.load %arg8[%c0_9, %c0_10] : memref<1x64xf32, #tpu.memory_space<vmem>>, vector<1x64xf32>
    %12 = vector.broadcast %11 : vector<1x64xf32> to vector<8x64xf32>
    %13 = arith.addf %10, %12 : vector<8x64xf32>
    %c0_11 = arith.constant 0 : index
    %c0_12 = arith.constant 0 : index
    %14 = vector.load %arg9[%c0_11, %c0_12] : memref<64x192xbf16, #tpu.memory_space<vmem>>, vector<64x192xbf16>
    %15 = arith.truncf %13 : vector<8x64xf32> to vector<8x64xbf16>
    %cst_13 = arith.constant dense<0.000000e+00> : vector<8x192xf32>
    %16 = tpu.matmul %15, %14, %cst_13 {dimension_numbers = #tpu.dot_dimension_numbers<[1], [0], [0], [1], [0, 0, 1, 1], [], []>} : vector<8x64xbf16>, vector<64x192xbf16>, vector<8x192xf32> -> vector<8x192xf32>
    %c0_14 = arith.constant 0 : index
    %c0_15 = arith.constant 0 : index
    %17 = vector.load %arg10[%c0_14, %c0_15] : memref<1x192xf32, #tpu.memory_space<vmem>>, vector<1x192xf32>
    %18 = vector.broadcast %17 : vector<1x192xf32> to vector<8x192xf32>
    %19 = arith.addf %16, %18 : vector<8x192xf32>
    %20 = vector.extract_strided_slice %19 {offsets = [0, 0], sizes = [8, 64], strides = [1, 1]} : vector<8x192xf32> to vector<8x64xf32>
    %21 = vector.extract_strided_slice %19 {offsets = [0, 64], sizes = [8, 64], strides = [1, 1]} : vector<8x192xf32> to vector<8x64xf32>
    %22 = vector.extract_strided_slice %19 {offsets = [0, 128], sizes = [8, 64], strides = [1, 1]} : vector<8x192xf32> to vector<8x64xf32>
    %23 = arith.truncf %20 : vector<8x64xf32> to vector<8x64xbf16>
    %24 = arith.truncf %21 : vector<8x64xf32> to vector<8x64xbf16>
    %cst_16 = arith.constant dense<0.000000e+00> : vector<8x8xf32>
    %25 = tpu.matmul %23, %24, %cst_16 {dimension_numbers = #tpu.dot_dimension_numbers<[1], [1], [0], [0], [0, 0, 1, 0], [], []>} : vector<8x64xbf16>, vector<8x64xbf16>, vector<8x8xf32> -> vector<8x8xf32>
    %cst_17 = arith.constant 1.250000e-01 : f32
    %26 = vector.broadcast %cst_17 : f32 to vector<8x8xf32>
    %27 = arith.mulf %25, %26 : vector<8x8xf32>
    %cst_18 = arith.constant dense<0xFF800000> : vector<8xf32>
    %28 = vector.multi_reduction <maximumf>, %27, %cst_18 [1] : vector<8x8xf32> to vector<8xf32>
    %29 = vector.shape_cast %28 : vector<8xf32> to vector<8x1xf32>
    %30 = vector.broadcast %29 : vector<8x1xf32> to vector<8x8xf32>
    %31 = arith.subf %27, %30 : vector<8x8xf32>
    %32 = math.exp %31 : vector<8x8xf32>
    %cst_19 = arith.constant dense<0.000000e+00> : vector<8xf32>
    %33 = vector.multi_reduction <add>, %32, %cst_19 [1] : vector<8x8xf32> to vector<8xf32>
    %34 = vector.shape_cast %33 : vector<8xf32> to vector<8x1xf32>
    %35 = tpu.reciprocal %34 : vector<8x1xf32> -> vector<8x1xf32>
    %36 = vector.broadcast %35 : vector<8x1xf32> to vector<8x8xf32>
    %37 = arith.mulf %32, %36 : vector<8x8xf32>
    %38 = arith.truncf %37 : vector<8x8xf32> to vector<8x8xbf16>
    %39 = arith.truncf %22 : vector<8x64xf32> to vector<8x64xbf16>
    %cst_20 = arith.constant dense<0.000000e+00> : vector<8x64xf32>
    %40 = tpu.matmul %38, %39, %cst_20 {dimension_numbers = #tpu.dot_dimension_numbers<[1], [0], [0], [1], [0, 0, 1, 1], [], []>} : vector<8x8xbf16>, vector<8x64xbf16>, vector<8x64xf32> -> vector<8x64xf32>
    %c0_21 = arith.constant 0 : index
    %c0_22 = arith.constant 0 : index
    %41 = vector.load %arg11[%c0_21, %c0_22] : memref<64x64xbf16, #tpu.memory_space<vmem>>, vector<64x64xbf16>
    %42 = arith.truncf %40 : vector<8x64xf32> to vector<8x64xbf16>
    %cst_23 = arith.constant dense<0.000000e+00> : vector<8x64xf32>
    %43 = tpu.matmul %42, %41, %cst_23 {dimension_numbers = #tpu.dot_dimension_numbers<[1], [0], [0], [1], [0, 0, 1, 1], [], []>} : vector<8x64xbf16>, vector<64x64xbf16>, vector<8x64xf32> -> vector<8x64xf32>
    %c0_24 = arith.constant 0 : index
    %c0_25 = arith.constant 0 : index
    %44 = vector.load %arg12[%c0_24, %c0_25] : memref<1x64xf32, #tpu.memory_space<vmem>>, vector<1x64xf32>
    %45 = vector.broadcast %44 : vector<1x64xf32> to vector<8x64xf32>
    %46 = arith.addf %43, %45 : vector<8x64xf32>
    %c0_26 = arith.constant 0 : index
    %c0_27 = arith.constant 0 : index
    %47 = vector.load %arg2[%c0_26, %c0_27] : memref<8x64xf32, #tpu.memory_space<vmem>>, vector<8x64xf32>
    %48 = arith.addf %46, %47 : vector<8x64xf32>
    %c0_28 = arith.constant 0 : index
    %c0_29 = arith.constant 0 : index
    %49 = vector.load %arg3[%c0_28, %c0_29] : memref<64x64xf32, #tpu.memory_space<vmem>>, vector<64x64xf32>
    %c0_30 = arith.constant 0 : index
    %c0_31 = arith.constant 0 : index
    %50 = vector.load %arg4[%c0_30, %c0_31] : memref<64x64xf32, #tpu.memory_space<vmem>>, vector<64x64xf32>
    %c0_32 = arith.constant 0 : index
    %c0_33 = arith.constant 0 : index
    %c0_34 = arith.constant 0 : index
    %51 = vector.load %arg13[%c0_32, %c0_33, %c0_34] : memref<2x64x192xbf16, #tpu.memory_space<vmem>>, vector<1x64x192xbf16>
    %52 = vector.shape_cast %51 : vector<1x64x192xbf16> to vector<64x192xbf16>
    %53 = arith.truncf %48 : vector<8x64xf32> to vector<8x64xbf16>
    %cst_35 = arith.constant dense<0.000000e+00> : vector<8x192xf32>
    %54 = tpu.matmul %53, %52, %cst_35 {dimension_numbers = #tpu.dot_dimension_numbers<[1], [0], [0], [1], [0, 0, 1, 1], [], []>} : vector<8x64xbf16>, vector<64x192xbf16>, vector<8x192xf32> -> vector<8x192xf32>
    %c0_36 = arith.constant 0 : index
    %c0_37 = arith.constant 0 : index
    %c0_38 = arith.constant 0 : index
    %55 = vector.load %arg14[%c0_36, %c0_37, %c0_38] : memref<2x1x192xf32, #tpu.memory_space<vmem>>, vector<1x1x192xf32>
    %56 = vector.shape_cast %55 : vector<1x1x192xf32> to vector<1x192xf32>
    %57 = vector.broadcast %56 : vector<1x192xf32> to vector<8x192xf32>
    %58 = arith.addf %54, %57 : vector<8x192xf32>
    %59 = vector.extract_strided_slice %58 {offsets = [0, 0], sizes = [8, 64], strides = [1, 1]} : vector<8x192xf32> to vector<8x64xf32>
    %60 = vector.extract_strided_slice %58 {offsets = [0, 64], sizes = [8, 64], strides = [1, 1]} : vector<8x192xf32> to vector<8x64xf32>
    %61 = vector.extract_strided_slice %58 {offsets = [0, 128], sizes = [8, 64], strides = [1, 1]} : vector<8x192xf32> to vector<8x64xf32>
    %62 = tpu.concatenate %60, %60, %60, %60, %60, %60, %60, %60 in 0 : vector<8x64xf32>, vector<8x64xf32>, vector<8x64xf32>, vector<8x64xf32>, vector<8x64xf32>, vector<8x64xf32>, vector<8x64xf32>, vector<8x64xf32> -> vector<64x64xf32>
    %63 = arith.mulf %62, %49 : vector<64x64xf32>
    %64 = tpu.concatenate %61, %61, %61, %61, %61, %61, %61, %61 in 0 : vector<8x64xf32>, vector<8x64xf32>, vector<8x64xf32>, vector<8x64xf32>, vector<8x64xf32>, vector<8x64xf32>, vector<8x64xf32>, vector<8x64xf32> -> vector<64x64xf32>
    %65 = arith.mulf %64, %49 : vector<64x64xf32>
    %66 = arith.truncf %59 : vector<8x64xf32> to vector<8x64xbf16>
    %67 = arith.truncf %63 : vector<64x64xf32> to vector<64x64xbf16>
    %cst_39 = arith.constant dense<0.000000e+00> : vector<8x64xf32>
    %68 = tpu.matmul %66, %67, %cst_39 {dimension_numbers = #tpu.dot_dimension_numbers<[1], [1], [0], [0], [0, 0, 1, 0], [], []>} : vector<8x64xbf16>, vector<64x64xbf16>, vector<8x64xf32> -> vector<8x64xf32>
    %cst_40 = arith.constant 0.353553385 : f32
    %69 = vector.broadcast %cst_40 : f32 to vector<8x64xf32>
    %70 = arith.mulf %68, %69 : vector<8x64xf32>
    %cst_41 = arith.constant dense<0xFF800000> : vector<8xf32>
    %71 = vector.multi_reduction <maximumf>, %70, %cst_41 [1] : vector<8x64xf32> to vector<8xf32>
    %72 = vector.shape_cast %71 : vector<8xf32> to vector<8x1xf32>
    %73 = vector.broadcast %72 : vector<8x1xf32> to vector<8x64xf32>
    %74 = arith.subf %70, %73 : vector<8x64xf32>
    %75 = math.exp %74 : vector<8x64xf32>
    %cst_42 = arith.constant dense<0.000000e+00> : vector<8x64xf32>
    %76 = tpu.matmul %75, %50, %cst_42 {dimension_numbers = #tpu.dot_dimension_numbers<[1], [0], [0], [1], [0, 0, 1, 1], [], []>} : vector<8x64xf32>, vector<64x64xf32>, vector<8x64xf32> -> vector<8x64xf32>
    %77 = tpu.reciprocal %76 : vector<8x64xf32> -> vector<8x64xf32>
    %78 = arith.mulf %75, %77 : vector<8x64xf32>
    %79 = arith.truncf %78 : vector<8x64xf32> to vector<8x64xbf16>
    %80 = arith.truncf %65 : vector<64x64xf32> to vector<64x64xbf16>
    %cst_43 = arith.constant dense<0.000000e+00> : vector<8x64xf32>
    %81 = tpu.matmul %79, %80, %cst_43 {dimension_numbers = #tpu.dot_dimension_numbers<[1], [0], [0], [1], [0, 0, 1, 1], [], []>} : vector<8x64xbf16>, vector<64x64xbf16>, vector<8x64xf32> -> vector<8x64xf32>
    %c0_44 = arith.constant 0 : index
    %c0_45 = arith.constant 0 : index
    %c0_46 = arith.constant 0 : index
    %82 = vector.load %arg15[%c0_44, %c0_45, %c0_46] : memref<2x64x64xbf16, #tpu.memory_space<vmem>>, vector<1x64x64xbf16>
    %83 = vector.shape_cast %82 : vector<1x64x64xbf16> to vector<64x64xbf16>
    %84 = arith.truncf %81 : vector<8x64xf32> to vector<8x64xbf16>
    %cst_47 = arith.constant dense<0.000000e+00> : vector<8x64xf32>
    %85 = tpu.matmul %84, %83, %cst_47 {dimension_numbers = #tpu.dot_dimension_numbers<[1], [0], [0], [1], [0, 0, 1, 1], [], []>} : vector<8x64xbf16>, vector<64x64xbf16>, vector<8x64xf32> -> vector<8x64xf32>
    %c0_48 = arith.constant 0 : index
    %c0_49 = arith.constant 0 : index
    %c0_50 = arith.constant 0 : index
    %86 = vector.load %arg16[%c0_48, %c0_49, %c0_50] : memref<2x1x64xf32, #tpu.memory_space<vmem>>, vector<1x1x64xf32>
    %87 = vector.shape_cast %86 : vector<1x1x64xf32> to vector<1x64xf32>
    %88 = vector.broadcast %87 : vector<1x64xf32> to vector<8x64xf32>
    %89 = arith.addf %85, %88 : vector<8x64xf32>
    %90 = arith.addf %48, %89 : vector<8x64xf32>
    %c0_51 = arith.constant 0 : index
    %c0_52 = arith.constant 0 : index
    %c0_53 = arith.constant 0 : index
    %91 = vector.load %arg17[%c0_51, %c0_52, %c0_53] : memref<2x1x64xf32, #tpu.memory_space<vmem>>, vector<1x1x64xf32>
    %92 = vector.shape_cast %91 : vector<1x1x64xf32> to vector<1x64xf32>
    %c0_54 = arith.constant 0 : index
    %c0_55 = arith.constant 0 : index
    %c0_56 = arith.constant 0 : index
    %93 = vector.load %arg18[%c0_54, %c0_55, %c0_56] : memref<2x1x64xf32, #tpu.memory_space<vmem>>, vector<1x1x64xf32>
    %94 = vector.shape_cast %93 : vector<1x1x64xf32> to vector<1x64xf32>
    %cst_57 = arith.constant dense<0.000000e+00> : vector<8xf32>
    %95 = vector.multi_reduction <add>, %90, %cst_57 [1] : vector<8x64xf32> to vector<8xf32>
    %96 = vector.shape_cast %95 : vector<8xf32> to vector<8x1xf32>
    %cst_58 = arith.constant 6.400000e+01 : f32
    %97 = vector.broadcast %cst_58 : f32 to vector<8x1xf32>
    %98 = arith.divf %96, %97 : vector<8x1xf32>
    %99 = vector.broadcast %98 : vector<8x1xf32> to vector<8x64xf32>
    %100 = arith.subf %90, %99 : vector<8x64xf32>
    %101 = arith.mulf %100, %100 : vector<8x64xf32>
    %cst_59 = arith.constant dense<0.000000e+00> : vector<8xf32>
    %102 = vector.multi_reduction <add>, %101, %cst_59 [1] : vector<8x64xf32> to vector<8xf32>
    %103 = vector.shape_cast %102 : vector<8xf32> to vector<8x1xf32>
    %cst_60 = arith.constant 6.400000e+01 : f32
    %104 = vector.broadcast %cst_60 : f32 to vector<8x1xf32>
    %105 = arith.divf %103, %104 : vector<8x1xf32>
    %cst_61 = arith.constant 9.99999974E-6 : f32
    %106 = vector.broadcast %cst_61 : f32 to vector<8x1xf32>
    %107 = arith.addf %105, %106 : vector<8x1xf32>
    %108 = math.rsqrt %107 : vector<8x1xf32>
    %109 = vector.broadcast %108 : vector<8x1xf32> to vector<8x64xf32>
    %110 = arith.mulf %100, %109 : vector<8x64xf32>
    %111 = vector.broadcast %92 : vector<1x64xf32> to vector<8x64xf32>
    %112 = arith.mulf %110, %111 : vector<8x64xf32>
    %113 = vector.broadcast %94 : vector<1x64xf32> to vector<8x64xf32>
    %114 = arith.addf %112, %113 : vector<8x64xf32>
    %c0_62 = arith.constant 0 : index
    %c0_63 = arith.constant 0 : index
    %c0_64 = arith.constant 0 : index
    %115 = vector.load %arg19[%c0_62, %c0_63, %c0_64] : memref<2x64x128xbf16, #tpu.memory_space<vmem>>, vector<1x64x128xbf16>
    %116 = vector.shape_cast %115 : vector<1x64x128xbf16> to vector<64x128xbf16>
    %117 = arith.truncf %114 : vector<8x64xf32> to vector<8x64xbf16>
    %cst_65 = arith.constant dense<0.000000e+00> : vector<8x128xf32>
    %118 = tpu.matmul %117, %116, %cst_65 {dimension_numbers = #tpu.dot_dimension_numbers<[1], [0], [0], [1], [0, 0, 1, 1], [], []>} : vector<8x64xbf16>, vector<64x128xbf16>, vector<8x128xf32> -> vector<8x128xf32>
    %c0_66 = arith.constant 0 : index
    %c0_67 = arith.constant 0 : index
    %c0_68 = arith.constant 0 : index
    %119 = vector.load %arg20[%c0_66, %c0_67, %c0_68] : memref<2x1x128xf32, #tpu.memory_space<vmem>>, vector<1x1x128xf32>
    %120 = vector.shape_cast %119 : vector<1x1x128xf32> to vector<1x128xf32>
    %121 = vector.broadcast %120 : vector<1x128xf32> to vector<8x128xf32>
    %122 = arith.addf %118, %121 : vector<8x128xf32>
    %cst_69 = arith.constant 0.000000e+00 : f32
    %123 = vector.broadcast %cst_69 : f32 to vector<8x128xf32>
    %124 = arith.maximumf %122, %123 : vector<8x128xf32>
    %c0_70 = arith.constant 0 : index
    %c0_71 = arith.constant 0 : index
    %c0_72 = arith.constant 0 : index
    %125 = vector.load %arg21[%c0_70, %c0_71, %c0_72] : memref<2x128x64xbf16, #tpu.memory_space<vmem>>, vector<1x128x64xbf16>
    %126 = vector.shape_cast %125 : vector<1x128x64xbf16> to vector<128x64xbf16>
    %127 = arith.truncf %124 : vector<8x128xf32> to vector<8x128xbf16>
    %cst_73 = arith.constant dense<0.000000e+00> : vector<8x64xf32>
    %128 = tpu.matmul %127, %126, %cst_73 {dimension_numbers = #tpu.dot_dimension_numbers<[1], [0], [0], [1], [0, 0, 1, 1], [], []>} : vector<8x128xbf16>, vector<128x64xbf16>, vector<8x64xf32> -> vector<8x64xf32>
    %c0_74 = arith.constant 0 : index
    %c0_75 = arith.constant 0 : index
    %c0_76 = arith.constant 0 : index
    %129 = vector.load %arg22[%c0_74, %c0_75, %c0_76] : memref<2x1x64xf32, #tpu.memory_space<vmem>>, vector<1x1x64xf32>
    %130 = vector.shape_cast %129 : vector<1x1x64xf32> to vector<1x64xf32>
    %131 = vector.broadcast %130 : vector<1x64xf32> to vector<8x64xf32>
    %132 = arith.addf %128, %131 : vector<8x64xf32>
    %133 = arith.addf %114, %132 : vector<8x64xf32>
    %c0_77 = arith.constant 0 : index
    %c0_78 = arith.constant 0 : index
    %c0_79 = arith.constant 0 : index
    %134 = vector.load %arg23[%c0_77, %c0_78, %c0_79] : memref<2x1x64xf32, #tpu.memory_space<vmem>>, vector<1x1x64xf32>
    %135 = vector.shape_cast %134 : vector<1x1x64xf32> to vector<1x64xf32>
    %c0_80 = arith.constant 0 : index
    %c0_81 = arith.constant 0 : index
    %c0_82 = arith.constant 0 : index
    %136 = vector.load %arg24[%c0_80, %c0_81, %c0_82] : memref<2x1x64xf32, #tpu.memory_space<vmem>>, vector<1x1x64xf32>
    %137 = vector.shape_cast %136 : vector<1x1x64xf32> to vector<1x64xf32>
    %cst_83 = arith.constant dense<0.000000e+00> : vector<8xf32>
    %138 = vector.multi_reduction <add>, %133, %cst_83 [1] : vector<8x64xf32> to vector<8xf32>
    %139 = vector.shape_cast %138 : vector<8xf32> to vector<8x1xf32>
    %cst_84 = arith.constant 6.400000e+01 : f32
    %140 = vector.broadcast %cst_84 : f32 to vector<8x1xf32>
    %141 = arith.divf %139, %140 : vector<8x1xf32>
    %142 = vector.broadcast %141 : vector<8x1xf32> to vector<8x64xf32>
    %143 = arith.subf %133, %142 : vector<8x64xf32>
    %144 = arith.mulf %143, %143 : vector<8x64xf32>
    %cst_85 = arith.constant dense<0.000000e+00> : vector<8xf32>
    %145 = vector.multi_reduction <add>, %144, %cst_85 [1] : vector<8x64xf32> to vector<8xf32>
    %146 = vector.shape_cast %145 : vector<8xf32> to vector<8x1xf32>
    %cst_86 = arith.constant 6.400000e+01 : f32
    %147 = vector.broadcast %cst_86 : f32 to vector<8x1xf32>
    %148 = arith.divf %146, %147 : vector<8x1xf32>
    %cst_87 = arith.constant 9.99999974E-6 : f32
    %149 = vector.broadcast %cst_87 : f32 to vector<8x1xf32>
    %150 = arith.addf %148, %149 : vector<8x1xf32>
    %151 = math.rsqrt %150 : vector<8x1xf32>
    %152 = vector.broadcast %151 : vector<8x1xf32> to vector<8x64xf32>
    %153 = arith.mulf %143, %152 : vector<8x64xf32>
    %154 = vector.broadcast %135 : vector<1x64xf32> to vector<8x64xf32>
    %155 = arith.mulf %153, %154 : vector<8x64xf32>
    %156 = vector.broadcast %137 : vector<1x64xf32> to vector<8x64xf32>
    %157 = arith.addf %155, %156 : vector<8x64xf32>
    %c1 = arith.constant 1 : index
    %c0_88 = arith.constant 0 : index
    %c0_89 = arith.constant 0 : index
    %158 = vector.load %arg13[%c1, %c0_88, %c0_89] : memref<2x64x192xbf16, #tpu.memory_space<vmem>>, vector<1x64x192xbf16>
    %159 = vector.shape_cast %158 : vector<1x64x192xbf16> to vector<64x192xbf16>
    %160 = arith.truncf %157 : vector<8x64xf32> to vector<8x64xbf16>
    %cst_90 = arith.constant dense<0.000000e+00> : vector<8x192xf32>
    %161 = tpu.matmul %160, %159, %cst_90 {dimension_numbers = #tpu.dot_dimension_numbers<[1], [0], [0], [1], [0, 0, 1, 1], [], []>} : vector<8x64xbf16>, vector<64x192xbf16>, vector<8x192xf32> -> vector<8x192xf32>
    %c1_91 = arith.constant 1 : index
    %c0_92 = arith.constant 0 : index
    %c0_93 = arith.constant 0 : index
    %162 = vector.load %arg14[%c1_91, %c0_92, %c0_93] : memref<2x1x192xf32, #tpu.memory_space<vmem>>, vector<1x1x192xf32>
    %163 = vector.shape_cast %162 : vector<1x1x192xf32> to vector<1x192xf32>
    %164 = vector.broadcast %163 : vector<1x192xf32> to vector<8x192xf32>
    %165 = arith.addf %161, %164 : vector<8x192xf32>
    %166 = vector.extract_strided_slice %165 {offsets = [0, 0], sizes = [8, 64], strides = [1, 1]} : vector<8x192xf32> to vector<8x64xf32>
    %167 = vector.extract_strided_slice %165 {offsets = [0, 64], sizes = [8, 64], strides = [1, 1]} : vector<8x192xf32> to vector<8x64xf32>
    %168 = vector.extract_strided_slice %165 {offsets = [0, 128], sizes = [8, 64], strides = [1, 1]} : vector<8x192xf32> to vector<8x64xf32>
    %169 = tpu.concatenate %167, %167, %167, %167, %167, %167, %167, %167 in 0 : vector<8x64xf32>, vector<8x64xf32>, vector<8x64xf32>, vector<8x64xf32>, vector<8x64xf32>, vector<8x64xf32>, vector<8x64xf32>, vector<8x64xf32> -> vector<64x64xf32>
    %170 = arith.mulf %169, %49 : vector<64x64xf32>
    %171 = tpu.concatenate %168, %168, %168, %168, %168, %168, %168, %168 in 0 : vector<8x64xf32>, vector<8x64xf32>, vector<8x64xf32>, vector<8x64xf32>, vector<8x64xf32>, vector<8x64xf32>, vector<8x64xf32>, vector<8x64xf32> -> vector<64x64xf32>
    %172 = arith.mulf %171, %49 : vector<64x64xf32>
    %173 = arith.truncf %166 : vector<8x64xf32> to vector<8x64xbf16>
    %174 = arith.truncf %170 : vector<64x64xf32> to vector<64x64xbf16>
    %cst_94 = arith.constant dense<0.000000e+00> : vector<8x64xf32>
    %175 = tpu.matmul %173, %174, %cst_94 {dimension_numbers = #tpu.dot_dimension_numbers<[1], [1], [0], [0], [0, 0, 1, 0], [], []>} : vector<8x64xbf16>, vector<64x64xbf16>, vector<8x64xf32> -> vector<8x64xf32>
    %cst_95 = arith.constant 0.353553385 : f32
    %176 = vector.broadcast %cst_95 : f32 to vector<8x64xf32>
    %177 = arith.mulf %175, %176 : vector<8x64xf32>
    %cst_96 = arith.constant dense<0xFF800000> : vector<8xf32>
    %178 = vector.multi_reduction <maximumf>, %177, %cst_96 [1] : vector<8x64xf32> to vector<8xf32>
    %179 = vector.shape_cast %178 : vector<8xf32> to vector<8x1xf32>
    %180 = vector.broadcast %179 : vector<8x1xf32> to vector<8x64xf32>
    %181 = arith.subf %177, %180 : vector<8x64xf32>
    %182 = math.exp %181 : vector<8x64xf32>
    %cst_97 = arith.constant dense<0.000000e+00> : vector<8x64xf32>
    %183 = tpu.matmul %182, %50, %cst_97 {dimension_numbers = #tpu.dot_dimension_numbers<[1], [0], [0], [1], [0, 0, 1, 1], [], []>} : vector<8x64xf32>, vector<64x64xf32>, vector<8x64xf32> -> vector<8x64xf32>
    %184 = tpu.reciprocal %183 : vector<8x64xf32> -> vector<8x64xf32>
    %185 = arith.mulf %182, %184 : vector<8x64xf32>
    %186 = arith.truncf %185 : vector<8x64xf32> to vector<8x64xbf16>
    %187 = arith.truncf %172 : vector<64x64xf32> to vector<64x64xbf16>
    %cst_98 = arith.constant dense<0.000000e+00> : vector<8x64xf32>
    %188 = tpu.matmul %186, %187, %cst_98 {dimension_numbers = #tpu.dot_dimension_numbers<[1], [0], [0], [1], [0, 0, 1, 1], [], []>} : vector<8x64xbf16>, vector<64x64xbf16>, vector<8x64xf32> -> vector<8x64xf32>
    %c1_99 = arith.constant 1 : index
    %c0_100 = arith.constant 0 : index
    %c0_101 = arith.constant 0 : index
    %189 = vector.load %arg15[%c1_99, %c0_100, %c0_101] : memref<2x64x64xbf16, #tpu.memory_space<vmem>>, vector<1x64x64xbf16>
    %190 = vector.shape_cast %189 : vector<1x64x64xbf16> to vector<64x64xbf16>
    %191 = arith.truncf %188 : vector<8x64xf32> to vector<8x64xbf16>
    %cst_102 = arith.constant dense<0.000000e+00> : vector<8x64xf32>
    %192 = tpu.matmul %191, %190, %cst_102 {dimension_numbers = #tpu.dot_dimension_numbers<[1], [0], [0], [1], [0, 0, 1, 1], [], []>} : vector<8x64xbf16>, vector<64x64xbf16>, vector<8x64xf32> -> vector<8x64xf32>
    %c1_103 = arith.constant 1 : index
    %c0_104 = arith.constant 0 : index
    %c0_105 = arith.constant 0 : index
    %193 = vector.load %arg16[%c1_103, %c0_104, %c0_105] : memref<2x1x64xf32, #tpu.memory_space<vmem>>, vector<1x1x64xf32>
    %194 = vector.shape_cast %193 : vector<1x1x64xf32> to vector<1x64xf32>
    %195 = vector.broadcast %194 : vector<1x64xf32> to vector<8x64xf32>
    %196 = arith.addf %192, %195 : vector<8x64xf32>
    %197 = arith.addf %157, %196 : vector<8x64xf32>
    %c1_106 = arith.constant 1 : index
    %c0_107 = arith.constant 0 : index
    %c0_108 = arith.constant 0 : index
    %198 = vector.load %arg17[%c1_106, %c0_107, %c0_108] : memref<2x1x64xf32, #tpu.memory_space<vmem>>, vector<1x1x64xf32>
    %199 = vector.shape_cast %198 : vector<1x1x64xf32> to vector<1x64xf32>
    %c1_109 = arith.constant 1 : index
    %c0_110 = arith.constant 0 : index
    %c0_111 = arith.constant 0 : index
    %200 = vector.load %arg18[%c1_109, %c0_110, %c0_111] : memref<2x1x64xf32, #tpu.memory_space<vmem>>, vector<1x1x64xf32>
    %201 = vector.shape_cast %200 : vector<1x1x64xf32> to vector<1x64xf32>
    %cst_112 = arith.constant dense<0.000000e+00> : vector<8xf32>
    %202 = vector.multi_reduction <add>, %197, %cst_112 [1] : vector<8x64xf32> to vector<8xf32>
    %203 = vector.shape_cast %202 : vector<8xf32> to vector<8x1xf32>
    %cst_113 = arith.constant 6.400000e+01 : f32
    %204 = vector.broadcast %cst_113 : f32 to vector<8x1xf32>
    %205 = arith.divf %203, %204 : vector<8x1xf32>
    %206 = vector.broadcast %205 : vector<8x1xf32> to vector<8x64xf32>
    %207 = arith.subf %197, %206 : vector<8x64xf32>
    %208 = arith.mulf %207, %207 : vector<8x64xf32>
    %cst_114 = arith.constant dense<0.000000e+00> : vector<8xf32>
    %209 = vector.multi_reduction <add>, %208, %cst_114 [1] : vector<8x64xf32> to vector<8xf32>
    %210 = vector.shape_cast %209 : vector<8xf32> to vector<8x1xf32>
    %cst_115 = arith.constant 6.400000e+01 : f32
    %211 = vector.broadcast %cst_115 : f32 to vector<8x1xf32>
    %212 = arith.divf %210, %211 : vector<8x1xf32>
    %cst_116 = arith.constant 9.99999974E-6 : f32
    %213 = vector.broadcast %cst_116 : f32 to vector<8x1xf32>
    %214 = arith.addf %212, %213 : vector<8x1xf32>
    %215 = math.rsqrt %214 : vector<8x1xf32>
    %216 = vector.broadcast %215 : vector<8x1xf32> to vector<8x64xf32>
    %217 = arith.mulf %207, %216 : vector<8x64xf32>
    %218 = vector.broadcast %199 : vector<1x64xf32> to vector<8x64xf32>
    %219 = arith.mulf %217, %218 : vector<8x64xf32>
    %220 = vector.broadcast %201 : vector<1x64xf32> to vector<8x64xf32>
    %221 = arith.addf %219, %220 : vector<8x64xf32>
    %c1_117 = arith.constant 1 : index
    %c0_118 = arith.constant 0 : index
    %c0_119 = arith.constant 0 : index
    %222 = vector.load %arg19[%c1_117, %c0_118, %c0_119] : memref<2x64x128xbf16, #tpu.memory_space<vmem>>, vector<1x64x128xbf16>
    %223 = vector.shape_cast %222 : vector<1x64x128xbf16> to vector<64x128xbf16>
    %224 = arith.truncf %221 : vector<8x64xf32> to vector<8x64xbf16>
    %cst_120 = arith.constant dense<0.000000e+00> : vector<8x128xf32>
    %225 = tpu.matmul %224, %223, %cst_120 {dimension_numbers = #tpu.dot_dimension_numbers<[1], [0], [0], [1], [0, 0, 1, 1], [], []>} : vector<8x64xbf16>, vector<64x128xbf16>, vector<8x128xf32> -> vector<8x128xf32>
    %c1_121 = arith.constant 1 : index
    %c0_122 = arith.constant 0 : index
    %c0_123 = arith.constant 0 : index
    %226 = vector.load %arg20[%c1_121, %c0_122, %c0_123] : memref<2x1x128xf32, #tpu.memory_space<vmem>>, vector<1x1x128xf32>
    %227 = vector.shape_cast %226 : vector<1x1x128xf32> to vector<1x128xf32>
    %228 = vector.broadcast %227 : vector<1x128xf32> to vector<8x128xf32>
    %229 = arith.addf %225, %228 : vector<8x128xf32>
    %cst_124 = arith.constant 0.000000e+00 : f32
    %230 = vector.broadcast %cst_124 : f32 to vector<8x128xf32>
    %231 = arith.maximumf %229, %230 : vector<8x128xf32>
    %c1_125 = arith.constant 1 : index
    %c0_126 = arith.constant 0 : index
    %c0_127 = arith.constant 0 : index
    %232 = vector.load %arg21[%c1_125, %c0_126, %c0_127] : memref<2x128x64xbf16, #tpu.memory_space<vmem>>, vector<1x128x64xbf16>
    %233 = vector.shape_cast %232 : vector<1x128x64xbf16> to vector<128x64xbf16>
    %234 = arith.truncf %231 : vector<8x128xf32> to vector<8x128xbf16>
    %cst_128 = arith.constant dense<0.000000e+00> : vector<8x64xf32>
    %235 = tpu.matmul %234, %233, %cst_128 {dimension_numbers = #tpu.dot_dimension_numbers<[1], [0], [0], [1], [0, 0, 1, 1], [], []>} : vector<8x128xbf16>, vector<128x64xbf16>, vector<8x64xf32> -> vector<8x64xf32>
    %c1_129 = arith.constant 1 : index
    %c0_130 = arith.constant 0 : index
    %c0_131 = arith.constant 0 : index
    %236 = vector.load %arg22[%c1_129, %c0_130, %c0_131] : memref<2x1x64xf32, #tpu.memory_space<vmem>>, vector<1x1x64xf32>
    %237 = vector.shape_cast %236 : vector<1x1x64xf32> to vector<1x64xf32>
    %238 = vector.broadcast %237 : vector<1x64xf32> to vector<8x64xf32>
    %239 = arith.addf %235, %238 : vector<8x64xf32>
    %240 = arith.addf %221, %239 : vector<8x64xf32>
    %c1_132 = arith.constant 1 : index
    %c0_133 = arith.constant 0 : index
    %c0_134 = arith.constant 0 : index
    %241 = vector.load %arg23[%c1_132, %c0_133, %c0_134] : memref<2x1x64xf32, #tpu.memory_space<vmem>>, vector<1x1x64xf32>
    %242 = vector.shape_cast %241 : vector<1x1x64xf32> to vector<1x64xf32>
    %c1_135 = arith.constant 1 : index
    %c0_136 = arith.constant 0 : index
    %c0_137 = arith.constant 0 : index
    %243 = vector.load %arg24[%c1_135, %c0_136, %c0_137] : memref<2x1x64xf32, #tpu.memory_space<vmem>>, vector<1x1x64xf32>
    %244 = vector.shape_cast %243 : vector<1x1x64xf32> to vector<1x64xf32>
    %cst_138 = arith.constant dense<0.000000e+00> : vector<8xf32>
    %245 = vector.multi_reduction <add>, %240, %cst_138 [1] : vector<8x64xf32> to vector<8xf32>
    %246 = vector.shape_cast %245 : vector<8xf32> to vector<8x1xf32>
    %cst_139 = arith.constant 6.400000e+01 : f32
    %247 = vector.broadcast %cst_139 : f32 to vector<8x1xf32>
    %248 = arith.divf %246, %247 : vector<8x1xf32>
    %249 = vector.broadcast %248 : vector<8x1xf32> to vector<8x64xf32>
    %250 = arith.subf %240, %249 : vector<8x64xf32>
    %251 = arith.mulf %250, %250 : vector<8x64xf32>
    %cst_140 = arith.constant dense<0.000000e+00> : vector<8xf32>
    %252 = vector.multi_reduction <add>, %251, %cst_140 [1] : vector<8x64xf32> to vector<8xf32>
    %253 = vector.shape_cast %252 : vector<8xf32> to vector<8x1xf32>
    %cst_141 = arith.constant 6.400000e+01 : f32
    %254 = vector.broadcast %cst_141 : f32 to vector<8x1xf32>
    %255 = arith.divf %253, %254 : vector<8x1xf32>
    %cst_142 = arith.constant 9.99999974E-6 : f32
    %256 = vector.broadcast %cst_142 : f32 to vector<8x1xf32>
    %257 = arith.addf %255, %256 : vector<8x1xf32>
    %258 = math.rsqrt %257 : vector<8x1xf32>
    %259 = vector.broadcast %258 : vector<8x1xf32> to vector<8x64xf32>
    %260 = arith.mulf %250, %259 : vector<8x64xf32>
    %261 = vector.broadcast %242 : vector<1x64xf32> to vector<8x64xf32>
    %262 = arith.mulf %260, %261 : vector<8x64xf32>
    %263 = vector.broadcast %244 : vector<1x64xf32> to vector<8x64xf32>
    %264 = arith.addf %262, %263 : vector<8x64xf32>
    %c0_143 = arith.constant 0 : index
    %c0_144 = arith.constant 0 : index
    %265 = vector.load %arg25[%c0_143, %c0_144] : memref<64x1xbf16, #tpu.memory_space<vmem>>, vector<64x1xbf16>
    %266 = arith.truncf %264 : vector<8x64xf32> to vector<8x64xbf16>
    %cst_145 = arith.constant dense<0.000000e+00> : vector<8x1xf32>
    %267 = tpu.matmul %266, %265, %cst_145 {dimension_numbers = #tpu.dot_dimension_numbers<[1], [0], [0], [1], [0, 0, 1, 1], [], []>} : vector<8x64xbf16>, vector<64x1xbf16>, vector<8x1xf32> -> vector<8x1xf32>
    %c0_146 = arith.constant 0 : index
    %c0_147 = arith.constant 0 : index
    %268 = vector.load %arg26[%c0_146, %c0_147] : memref<1x1xf32, #tpu.memory_space<vmem>>, vector<1x1xf32>
    %269 = vector.broadcast %268 : vector<1x1xf32> to vector<8x1xf32>
    %270 = arith.addf %267, %269 : vector<8x1xf32>
    %cst_148 = arith.constant dense<0xFF800000> : vector<1xf32>
    %271 = vector.multi_reduction <maximumf>, %270, %cst_148 [0] : vector<8x1xf32> to vector<1xf32>
    %272 = vector.shape_cast %271 : vector<1xf32> to vector<1x1xf32>
    %273 = vector.broadcast %272 : vector<1x1xf32> to vector<8x1xf32>
    %274 = arith.subf %270, %273 : vector<8x1xf32>
    %275 = math.exp %274 : vector<8x1xf32>
    %cst_149 = arith.constant dense<0.000000e+00> : vector<1xf32>
    %276 = vector.multi_reduction <add>, %275, %cst_149 [0] : vector<8x1xf32> to vector<1xf32>
    %277 = vector.shape_cast %276 : vector<1xf32> to vector<1x1xf32>
    %278 = tpu.reciprocal %277 : vector<1x1xf32> -> vector<1x1xf32>
    %279 = vector.broadcast %278 : vector<1x1xf32> to vector<8x1xf32>
    %280 = arith.mulf %275, %279 : vector<8x1xf32>
    %281 = vector.broadcast %280 : vector<8x1xf32> to vector<8x64xf32>
    %282 = arith.mulf %281, %264 : vector<8x64xf32>
    %cst_150 = arith.constant dense<0.000000e+00> : vector<64xf32>
    %283 = vector.multi_reduction <add>, %282, %cst_150 [0] : vector<8x64xf32> to vector<64xf32>
    %284 = vector.shape_cast %283 : vector<64xf32> to vector<1x64xf32>
    %c0_151 = arith.constant 0 : index
    %c0_152 = arith.constant 0 : index
    %285 = vector.load %arg27[%c0_151, %c0_152] : memref<64x64xbf16, #tpu.memory_space<vmem>>, vector<64x64xbf16>
    %286 = arith.truncf %284 : vector<1x64xf32> to vector<1x64xbf16>
    %cst_153 = arith.constant dense<0.000000e+00> : vector<1x64xf32>
    %287 = tpu.matmul %286, %285, %cst_153 {dimension_numbers = #tpu.dot_dimension_numbers<[1], [0], [0], [1], [0, 0, 1, 1], [], []>} : vector<1x64xbf16>, vector<64x64xbf16>, vector<1x64xf32> -> vector<1x64xf32>
    %c0_154 = arith.constant 0 : index
    %c0_155 = arith.constant 0 : index
    %288 = vector.load %arg28[%c0_154, %c0_155] : memref<1x64xf32, #tpu.memory_space<vmem>>, vector<1x64xf32>
    %289 = arith.addf %287, %288 : vector<1x64xf32>
    %c0_156 = arith.constant 0 : index
    %c0_157 = arith.constant 0 : index
    %290 = vector.load %arg29[%c0_156, %c0_157] : memref<1x64xf32, #tpu.memory_space<vmem>>, vector<1x64xf32>
    %c0_158 = arith.constant 0 : index
    %c0_159 = arith.constant 0 : index
    %291 = vector.load %arg30[%c0_158, %c0_159] : memref<1x64xf32, #tpu.memory_space<vmem>>, vector<1x64xf32>
    %cst_160 = arith.constant dense<0.000000e+00> : vector<1xf32>
    %292 = vector.multi_reduction <add>, %289, %cst_160 [1] : vector<1x64xf32> to vector<1xf32>
    %293 = vector.shape_cast %292 : vector<1xf32> to vector<1x1xf32>
    %cst_161 = arith.constant 6.400000e+01 : f32
    %294 = vector.broadcast %cst_161 : f32 to vector<1x1xf32>
    %295 = arith.divf %293, %294 : vector<1x1xf32>
    %296 = vector.broadcast %295 : vector<1x1xf32> to vector<1x64xf32>
    %297 = arith.subf %289, %296 : vector<1x64xf32>
    %298 = arith.mulf %297, %297 : vector<1x64xf32>
    %cst_162 = arith.constant dense<0.000000e+00> : vector<1xf32>
    %299 = vector.multi_reduction <add>, %298, %cst_162 [1] : vector<1x64xf32> to vector<1xf32>
    %300 = vector.shape_cast %299 : vector<1xf32> to vector<1x1xf32>
    %cst_163 = arith.constant 6.400000e+01 : f32
    %301 = vector.broadcast %cst_163 : f32 to vector<1x1xf32>
    %302 = arith.divf %300, %301 : vector<1x1xf32>
    %cst_164 = arith.constant 9.99999974E-6 : f32
    %303 = vector.broadcast %cst_164 : f32 to vector<1x1xf32>
    %304 = arith.addf %302, %303 : vector<1x1xf32>
    %305 = math.rsqrt %304 : vector<1x1xf32>
    %306 = vector.broadcast %305 : vector<1x1xf32> to vector<1x64xf32>
    %307 = arith.mulf %297, %306 : vector<1x64xf32>
    %308 = arith.mulf %307, %290 : vector<1x64xf32>
    %309 = arith.addf %308, %291 : vector<1x64xf32>
    %cst_165 = arith.constant 0.707106769 : f32
    %310 = vector.broadcast %cst_165 : f32 to vector<1x64xf32>
    %311 = arith.mulf %309, %310 : vector<1x64xf32>
    %312 = math.absf %311 : vector<1x64xf32>
    %cst_166 = arith.constant 0.327591091 : f32
    %313 = vector.broadcast %cst_166 : f32 to vector<1x64xf32>
    %314 = arith.mulf %313, %312 : vector<1x64xf32>
    %cst_167 = arith.constant 1.000000e+00 : f32
    %315 = vector.broadcast %cst_167 : f32 to vector<1x64xf32>
    %316 = arith.addf %315, %314 : vector<1x64xf32>
    %cst_168 = arith.constant 1.000000e+00 : f32
    %317 = vector.broadcast %cst_168 : f32 to vector<1x64xf32>
    %318 = arith.divf %317, %316 : vector<1x64xf32>
    %cst_169 = arith.constant 1.06140542 : f32
    %319 = vector.broadcast %cst_169 : f32 to vector<1x64xf32>
    %320 = arith.mulf %319, %318 : vector<1x64xf32>
    %cst_170 = arith.constant 1.45315206 : f32
    %321 = vector.broadcast %cst_170 : f32 to vector<1x64xf32>
    %322 = arith.subf %320, %321 : vector<1x64xf32>
    %323 = arith.mulf %322, %318 : vector<1x64xf32>
    %cst_171 = arith.constant 1.42141378 : f32
    %324 = vector.broadcast %cst_171 : f32 to vector<1x64xf32>
    %325 = arith.addf %323, %324 : vector<1x64xf32>
    %326 = arith.mulf %325, %318 : vector<1x64xf32>
    %cst_172 = arith.constant 0.284496725 : f32
    %327 = vector.broadcast %cst_172 : f32 to vector<1x64xf32>
    %328 = arith.subf %326, %327 : vector<1x64xf32>
    %329 = arith.mulf %328, %318 : vector<1x64xf32>
    %cst_173 = arith.constant 0.254829586 : f32
    %330 = vector.broadcast %cst_173 : f32 to vector<1x64xf32>
    %331 = arith.addf %329, %330 : vector<1x64xf32>
    %332 = arith.mulf %331, %318 : vector<1x64xf32>
    %cst_174 = arith.constant 0.000000e+00 : f32
    %333 = vector.broadcast %cst_174 : f32 to vector<1x64xf32>
    %334 = arith.subf %333, %312 : vector<1x64xf32>
    %335 = arith.mulf %334, %312 : vector<1x64xf32>
    %336 = math.exp %335 : vector<1x64xf32>
    %337 = arith.mulf %332, %336 : vector<1x64xf32>
    %cst_175 = arith.constant 1.000000e+00 : f32
    %338 = vector.broadcast %cst_175 : f32 to vector<1x64xf32>
    %339 = arith.subf %338, %337 : vector<1x64xf32>
    %cst_176 = arith.constant 0.000000e+00 : f32
    %340 = vector.broadcast %cst_176 : f32 to vector<1x64xf32>
    %341 = arith.cmpf olt, %311, %340 : vector<1x64xf32>
    %cst_177 = arith.constant 0.000000e+00 : f32
    %342 = vector.broadcast %cst_177 : f32 to vector<1x64xf32>
    %343 = arith.subf %342, %339 : vector<1x64xf32>
    %344 = arith.select %341, %343, %339 : vector<1x64xi1>, vector<1x64xf32>
    %cst_178 = arith.constant 5.000000e-01 : f32
    %345 = vector.broadcast %cst_178 : f32 to vector<1x64xf32>
    %346 = arith.mulf %345, %309 : vector<1x64xf32>
    %cst_179 = arith.constant 1.000000e+00 : f32
    %347 = vector.broadcast %cst_179 : f32 to vector<1x64xf32>
    %348 = arith.addf %347, %344 : vector<1x64xf32>
    %349 = arith.mulf %346, %348 : vector<1x64xf32>
    %c0_180 = arith.constant 0 : index
    %c0_181 = arith.constant 0 : index
    %350 = vector.load %arg31[%c0_180, %c0_181] : memref<64x32xbf16, #tpu.memory_space<vmem>>, vector<64x32xbf16>
    %351 = arith.truncf %349 : vector<1x64xf32> to vector<1x64xbf16>
    %cst_182 = arith.constant dense<0.000000e+00> : vector<1x32xf32>
    %352 = tpu.matmul %351, %350, %cst_182 {dimension_numbers = #tpu.dot_dimension_numbers<[1], [0], [0], [1], [0, 0, 1, 1], [], []>} : vector<1x64xbf16>, vector<64x32xbf16>, vector<1x32xf32> -> vector<1x32xf32>
    %c0_183 = arith.constant 0 : index
    %c0_184 = arith.constant 0 : index
    %353 = vector.load %arg32[%c0_183, %c0_184] : memref<1x32xf32, #tpu.memory_space<vmem>>, vector<1x32xf32>
    %354 = arith.addf %352, %353 : vector<1x32xf32>
    %c0_185 = arith.constant 0 : index
    %c0_186 = arith.constant 0 : index
    %355 = vector.load %arg33[%c0_185, %c0_186] : memref<1x32xf32, #tpu.memory_space<vmem>>, vector<1x32xf32>
    %c0_187 = arith.constant 0 : index
    %c0_188 = arith.constant 0 : index
    %356 = vector.load %arg34[%c0_187, %c0_188] : memref<1x32xf32, #tpu.memory_space<vmem>>, vector<1x32xf32>
    %cst_189 = arith.constant dense<0.000000e+00> : vector<1xf32>
    %357 = vector.multi_reduction <add>, %354, %cst_189 [1] : vector<1x32xf32> to vector<1xf32>
    %358 = vector.shape_cast %357 : vector<1xf32> to vector<1x1xf32>
    %cst_190 = arith.constant 3.200000e+01 : f32
    %359 = vector.broadcast %cst_190 : f32 to vector<1x1xf32>
    %360 = arith.divf %358, %359 : vector<1x1xf32>
    %361 = vector.broadcast %360 : vector<1x1xf32> to vector<1x32xf32>
    %362 = arith.subf %354, %361 : vector<1x32xf32>
    %363 = arith.mulf %362, %362 : vector<1x32xf32>
    %cst_191 = arith.constant dense<0.000000e+00> : vector<1xf32>
    %364 = vector.multi_reduction <add>, %363, %cst_191 [1] : vector<1x32xf32> to vector<1xf32>
    %365 = vector.shape_cast %364 : vector<1xf32> to vector<1x1xf32>
    %cst_192 = arith.constant 3.200000e+01 : f32
    %366 = vector.broadcast %cst_192 : f32 to vector<1x1xf32>
    %367 = arith.divf %365, %366 : vector<1x1xf32>
    %cst_193 = arith.constant 9.99999974E-6 : f32
    %368 = vector.broadcast %cst_193 : f32 to vector<1x1xf32>
    %369 = arith.addf %367, %368 : vector<1x1xf32>
    %370 = math.rsqrt %369 : vector<1x1xf32>
    %371 = vector.broadcast %370 : vector<1x1xf32> to vector<1x32xf32>
    %372 = arith.mulf %362, %371 : vector<1x32xf32>
    %373 = arith.mulf %372, %355 : vector<1x32xf32>
    %374 = arith.addf %373, %356 : vector<1x32xf32>
    %cst_194 = arith.constant 0.707106769 : f32
    %375 = vector.broadcast %cst_194 : f32 to vector<1x32xf32>
    %376 = arith.mulf %374, %375 : vector<1x32xf32>
    %377 = math.absf %376 : vector<1x32xf32>
    %cst_195 = arith.constant 0.327591091 : f32
    %378 = vector.broadcast %cst_195 : f32 to vector<1x32xf32>
    %379 = arith.mulf %378, %377 : vector<1x32xf32>
    %cst_196 = arith.constant 1.000000e+00 : f32
    %380 = vector.broadcast %cst_196 : f32 to vector<1x32xf32>
    %381 = arith.addf %380, %379 : vector<1x32xf32>
    %cst_197 = arith.constant 1.000000e+00 : f32
    %382 = vector.broadcast %cst_197 : f32 to vector<1x32xf32>
    %383 = arith.divf %382, %381 : vector<1x32xf32>
    %cst_198 = arith.constant 1.06140542 : f32
    %384 = vector.broadcast %cst_198 : f32 to vector<1x32xf32>
    %385 = arith.mulf %384, %383 : vector<1x32xf32>
    %cst_199 = arith.constant 1.45315206 : f32
    %386 = vector.broadcast %cst_199 : f32 to vector<1x32xf32>
    %387 = arith.subf %385, %386 : vector<1x32xf32>
    %388 = arith.mulf %387, %383 : vector<1x32xf32>
    %cst_200 = arith.constant 1.42141378 : f32
    %389 = vector.broadcast %cst_200 : f32 to vector<1x32xf32>
    %390 = arith.addf %388, %389 : vector<1x32xf32>
    %391 = arith.mulf %390, %383 : vector<1x32xf32>
    %cst_201 = arith.constant 0.284496725 : f32
    %392 = vector.broadcast %cst_201 : f32 to vector<1x32xf32>
    %393 = arith.subf %391, %392 : vector<1x32xf32>
    %394 = arith.mulf %393, %383 : vector<1x32xf32>
    %cst_202 = arith.constant 0.254829586 : f32
    %395 = vector.broadcast %cst_202 : f32 to vector<1x32xf32>
    %396 = arith.addf %394, %395 : vector<1x32xf32>
    %397 = arith.mulf %396, %383 : vector<1x32xf32>
    %cst_203 = arith.constant 0.000000e+00 : f32
    %398 = vector.broadcast %cst_203 : f32 to vector<1x32xf32>
    %399 = arith.subf %398, %377 : vector<1x32xf32>
    %400 = arith.mulf %399, %377 : vector<1x32xf32>
    %401 = math.exp %400 : vector<1x32xf32>
    %402 = arith.mulf %397, %401 : vector<1x32xf32>
    %cst_204 = arith.constant 1.000000e+00 : f32
    %403 = vector.broadcast %cst_204 : f32 to vector<1x32xf32>
    %404 = arith.subf %403, %402 : vector<1x32xf32>
    %cst_205 = arith.constant 0.000000e+00 : f32
    %405 = vector.broadcast %cst_205 : f32 to vector<1x32xf32>
    %406 = arith.cmpf olt, %376, %405 : vector<1x32xf32>
    %cst_206 = arith.constant 0.000000e+00 : f32
    %407 = vector.broadcast %cst_206 : f32 to vector<1x32xf32>
    %408 = arith.subf %407, %404 : vector<1x32xf32>
    %409 = arith.select %406, %408, %404 : vector<1x32xi1>, vector<1x32xf32>
    %cst_207 = arith.constant 5.000000e-01 : f32
    %410 = vector.broadcast %cst_207 : f32 to vector<1x32xf32>
    %411 = arith.mulf %410, %374 : vector<1x32xf32>
    %cst_208 = arith.constant 1.000000e+00 : f32
    %412 = vector.broadcast %cst_208 : f32 to vector<1x32xf32>
    %413 = arith.addf %412, %409 : vector<1x32xf32>
    %414 = arith.mulf %411, %413 : vector<1x32xf32>
    %c0_209 = arith.constant 0 : index
    %c0_210 = arith.constant 0 : index
    %415 = vector.load %arg35[%c0_209, %c0_210] : memref<32x16xbf16, #tpu.memory_space<vmem>>, vector<32x16xbf16>
    %416 = arith.truncf %414 : vector<1x32xf32> to vector<1x32xbf16>
    %cst_211 = arith.constant dense<0.000000e+00> : vector<1x16xf32>
    %417 = tpu.matmul %416, %415, %cst_211 {dimension_numbers = #tpu.dot_dimension_numbers<[1], [0], [0], [1], [0, 0, 1, 1], [], []>} : vector<1x32xbf16>, vector<32x16xbf16>, vector<1x16xf32> -> vector<1x16xf32>
    %c0_212 = arith.constant 0 : index
    %c0_213 = arith.constant 0 : index
    %418 = vector.load %arg36[%c0_212, %c0_213] : memref<1x16xf32, #tpu.memory_space<vmem>>, vector<1x16xf32>
    %419 = arith.addf %417, %418 : vector<1x16xf32>
    %c0_214 = arith.constant 0 : index
    %c0_215 = arith.constant 0 : index
    %420 = vector.load %arg37[%c0_214, %c0_215] : memref<1x16xf32, #tpu.memory_space<vmem>>, vector<1x16xf32>
    %c0_216 = arith.constant 0 : index
    %c0_217 = arith.constant 0 : index
    %421 = vector.load %arg38[%c0_216, %c0_217] : memref<1x16xf32, #tpu.memory_space<vmem>>, vector<1x16xf32>
    %cst_218 = arith.constant dense<0.000000e+00> : vector<1xf32>
    %422 = vector.multi_reduction <add>, %419, %cst_218 [1] : vector<1x16xf32> to vector<1xf32>
    %423 = vector.shape_cast %422 : vector<1xf32> to vector<1x1xf32>
    %cst_219 = arith.constant 1.600000e+01 : f32
    %424 = vector.broadcast %cst_219 : f32 to vector<1x1xf32>
    %425 = arith.divf %423, %424 : vector<1x1xf32>
    %426 = vector.broadcast %425 : vector<1x1xf32> to vector<1x16xf32>
    %427 = arith.subf %419, %426 : vector<1x16xf32>
    %428 = arith.mulf %427, %427 : vector<1x16xf32>
    %cst_220 = arith.constant dense<0.000000e+00> : vector<1xf32>
    %429 = vector.multi_reduction <add>, %428, %cst_220 [1] : vector<1x16xf32> to vector<1xf32>
    %430 = vector.shape_cast %429 : vector<1xf32> to vector<1x1xf32>
    %cst_221 = arith.constant 1.600000e+01 : f32
    %431 = vector.broadcast %cst_221 : f32 to vector<1x1xf32>
    %432 = arith.divf %430, %431 : vector<1x1xf32>
    %cst_222 = arith.constant 9.99999974E-6 : f32
    %433 = vector.broadcast %cst_222 : f32 to vector<1x1xf32>
    %434 = arith.addf %432, %433 : vector<1x1xf32>
    %435 = math.rsqrt %434 : vector<1x1xf32>
    %436 = vector.broadcast %435 : vector<1x1xf32> to vector<1x16xf32>
    %437 = arith.mulf %427, %436 : vector<1x16xf32>
    %438 = arith.mulf %437, %420 : vector<1x16xf32>
    %439 = arith.addf %438, %421 : vector<1x16xf32>
    %cst_223 = arith.constant 0.707106769 : f32
    %440 = vector.broadcast %cst_223 : f32 to vector<1x16xf32>
    %441 = arith.mulf %439, %440 : vector<1x16xf32>
    %442 = math.absf %441 : vector<1x16xf32>
    %cst_224 = arith.constant 0.327591091 : f32
    %443 = vector.broadcast %cst_224 : f32 to vector<1x16xf32>
    %444 = arith.mulf %443, %442 : vector<1x16xf32>
    %cst_225 = arith.constant 1.000000e+00 : f32
    %445 = vector.broadcast %cst_225 : f32 to vector<1x16xf32>
    %446 = arith.addf %445, %444 : vector<1x16xf32>
    %cst_226 = arith.constant 1.000000e+00 : f32
    %447 = vector.broadcast %cst_226 : f32 to vector<1x16xf32>
    %448 = arith.divf %447, %446 : vector<1x16xf32>
    %cst_227 = arith.constant 1.06140542 : f32
    %449 = vector.broadcast %cst_227 : f32 to vector<1x16xf32>
    %450 = arith.mulf %449, %448 : vector<1x16xf32>
    %cst_228 = arith.constant 1.45315206 : f32
    %451 = vector.broadcast %cst_228 : f32 to vector<1x16xf32>
    %452 = arith.subf %450, %451 : vector<1x16xf32>
    %453 = arith.mulf %452, %448 : vector<1x16xf32>
    %cst_229 = arith.constant 1.42141378 : f32
    %454 = vector.broadcast %cst_229 : f32 to vector<1x16xf32>
    %455 = arith.addf %453, %454 : vector<1x16xf32>
    %456 = arith.mulf %455, %448 : vector<1x16xf32>
    %cst_230 = arith.constant 0.284496725 : f32
    %457 = vector.broadcast %cst_230 : f32 to vector<1x16xf32>
    %458 = arith.subf %456, %457 : vector<1x16xf32>
    %459 = arith.mulf %458, %448 : vector<1x16xf32>
    %cst_231 = arith.constant 0.254829586 : f32
    %460 = vector.broadcast %cst_231 : f32 to vector<1x16xf32>
    %461 = arith.addf %459, %460 : vector<1x16xf32>
    %462 = arith.mulf %461, %448 : vector<1x16xf32>
    %cst_232 = arith.constant 0.000000e+00 : f32
    %463 = vector.broadcast %cst_232 : f32 to vector<1x16xf32>
    %464 = arith.subf %463, %442 : vector<1x16xf32>
    %465 = arith.mulf %464, %442 : vector<1x16xf32>
    %466 = math.exp %465 : vector<1x16xf32>
    %467 = arith.mulf %462, %466 : vector<1x16xf32>
    %cst_233 = arith.constant 1.000000e+00 : f32
    %468 = vector.broadcast %cst_233 : f32 to vector<1x16xf32>
    %469 = arith.subf %468, %467 : vector<1x16xf32>
    %cst_234 = arith.constant 0.000000e+00 : f32
    %470 = vector.broadcast %cst_234 : f32 to vector<1x16xf32>
    %471 = arith.cmpf olt, %441, %470 : vector<1x16xf32>
    %cst_235 = arith.constant 0.000000e+00 : f32
    %472 = vector.broadcast %cst_235 : f32 to vector<1x16xf32>
    %473 = arith.subf %472, %469 : vector<1x16xf32>
    %474 = arith.select %471, %473, %469 : vector<1x16xi1>, vector<1x16xf32>
    %cst_236 = arith.constant 5.000000e-01 : f32
    %475 = vector.broadcast %cst_236 : f32 to vector<1x16xf32>
    %476 = arith.mulf %475, %439 : vector<1x16xf32>
    %cst_237 = arith.constant 1.000000e+00 : f32
    %477 = vector.broadcast %cst_237 : f32 to vector<1x16xf32>
    %478 = arith.addf %477, %474 : vector<1x16xf32>
    %479 = arith.mulf %476, %478 : vector<1x16xf32>
    %c0_238 = arith.constant 0 : index
    %c0_239 = arith.constant 0 : index
    %480 = vector.load %arg39[%c0_238, %c0_239] : memref<16x1xbf16, #tpu.memory_space<vmem>>, vector<16x1xbf16>
    %481 = arith.truncf %479 : vector<1x16xf32> to vector<1x16xbf16>
    %cst_240 = arith.constant dense<0.000000e+00> : vector<1x1xf32>
    %482 = tpu.matmul %481, %480, %cst_240 {dimension_numbers = #tpu.dot_dimension_numbers<[1], [0], [0], [1], [0, 0, 1, 1], [], []>} : vector<1x16xbf16>, vector<16x1xbf16>, vector<1x1xf32> -> vector<1x1xf32>
    %c0_241 = arith.constant 0 : index
    %c0_242 = arith.constant 0 : index
    %483 = vector.load %arg40[%c0_241, %c0_242] : memref<1x1xf32, #tpu.memory_space<vmem>>, vector<1x1xf32>
    %484 = arith.addf %482, %483 : vector<1x1xf32>
    %485 = math.tanh %484 : vector<1x1xf32>
    %c0_243 = arith.constant 0 : index
    %c0_244 = arith.constant 0 : index
    %c0_245 = arith.constant 0 : index
    %486 = vector.load %arg41[%c0_243, %c0_244, %c0_245] : memref<1x1x1xf32, #tpu.memory_space<vmem>>, vector<1x1x1xf32>
    %487 = vector.shape_cast %486 : vector<1x1x1xf32> to vector<1x1xf32>
    %488 = vector.shape_cast %485 : vector<1x1xf32> to vector<1x1x1xf32>
    tpu.vector_store %arg41[%c0_243, %c0_244, %c0_245], %488 {strides = array<i32>} : memref<1x1x1xf32, #tpu.memory_space<vmem>>, vector<1x1x1xf32>,
    return
  }
  func.func @transform_0(%arg0: i32) -> (i32, i32, i32) {
    %c0_i32 = arith.constant 0 : i32
    %c0_i32_0 = arith.constant 0 : i32
    %c0_i32_1 = arith.constant 0 : i32
    return %arg0, %c0_i32, %c0_i32_0 : i32, i32, i32
  }
  func.func @transform_1(%arg0: i32) -> (i32, i32) {
    %c0_i32 = arith.constant 0 : i32
    %c0_i32_0 = arith.constant 0 : i32
    %c0_i32_1 = arith.constant 0 : i32
    return %c0_i32, %c0_i32_0 : i32, i32
  }
  func.func @transform_2(%arg0: i32) -> (i32, i32) {
    %c0_i32 = arith.constant 0 : i32
    %c0_i32_0 = arith.constant 0 : i32
    %c0_i32_1 = arith.constant 0 : i32
    return %c0_i32, %c0_i32_0 : i32, i32
  }
  func.func @transform_3(%arg0: i32) -> (i32, i32) {
    %c0_i32 = arith.constant 0 : i32
    %c0_i32_0 = arith.constant 0 : i32
    %c0_i32_1 = arith.constant 0 : i32
    return %c0_i32, %c0_i32_0 : i32, i32
  }
  func.func @transform_4(%arg0: i32) -> (i32, i32) {
    %c0_i32 = arith.constant 0 : i32
    %c0_i32_0 = arith.constant 0 : i32
    %c0_i32_1 = arith.constant 0 : i32
    return %c0_i32, %c0_i32_0 : i32, i32
  }
  func.func @transform_5(%arg0: i32) -> (i32, i32) {
    %c0_i32 = arith.constant 0 : i32
    %c0_i32_0 = arith.constant 0 : i32
    %c0_i32_1 = arith.constant 0 : i32
    return %c0_i32, %c0_i32_0 : i32, i32
  }
  func.func @transform_6(%arg0: i32) -> (i32, i32) {
    %c0_i32 = arith.constant 0 : i32
    %c0_i32_0 = arith.constant 0 : i32
    %c0_i32_1 = arith.constant 0 : i32
    return %c0_i32, %c0_i32_0 : i32, i32
  }
  func.func @transform_7(%arg0: i32) -> (i32, i32) {
    %c0_i32 = arith.constant 0 : i32
    %c0_i32_0 = arith.constant 0 : i32
    %c0_i32_1 = arith.constant 0 : i32
    return %c0_i32, %c0_i32_0 : i32, i32
  }
  func.func @transform_8(%arg0: i32) -> (i32, i32) {
    %c0_i32 = arith.constant 0 : i32
    %c0_i32_0 = arith.constant 0 : i32
    %c0_i32_1 = arith.constant 0 : i32
    return %c0_i32, %c0_i32_0 : i32, i32
  }
  func.func @transform_9(%arg0: i32) -> (i32, i32) {
    %c0_i32 = arith.constant 0 : i32
    %c0_i32_0 = arith.constant 0 : i32
    %c0_i32_1 = arith.constant 0 : i32
    return %c0_i32, %c0_i32_0 : i32, i32
  }
  func.func @transform_10(%arg0: i32) -> (i32, i32) {
    %c0_i32 = arith.constant 0 : i32
    %c0_i32_0 = arith.constant 0 : i32
    %c0_i32_1 = arith.constant 0 : i32
    return %c0_i32, %c0_i32_0 : i32, i32
  }
  func.func @transform_11(%arg0: i32) -> (i32, i32) {
    %c0_i32 = arith.constant 0 : i32
    %c0_i32_0 = arith.constant 0 : i32
    %c0_i32_1 = arith.constant 0 : i32
    return %c0_i32, %c0_i32_0 : i32, i32
  }
  func.func @transform_12(%arg0: i32) -> (i32, i32, i32) {
    %c0_i32 = arith.constant 0 : i32
    %c0_i32_0 = arith.constant 0 : i32
    %c0_i32_1 = arith.constant 0 : i32
    %c0_i32_2 = arith.constant 0 : i32
    return %c0_i32, %c0_i32_0, %c0_i32_1 : i32, i32, i32
  }
  func.func @transform_13(%arg0: i32) -> (i32, i32, i32) {
    %c0_i32 = arith.constant 0 : i32
    %c0_i32_0 = arith.constant 0 : i32
    %c0_i32_1 = arith.constant 0 : i32
    %c0_i32_2 = arith.constant 0 : i32
    return %c0_i32, %c0_i32_0, %c0_i32_1 : i32, i32, i32
  }
  func.func @transform_14(%arg0: i32) -> (i32, i32, i32) {
    %c0_i32 = arith.constant 0 : i32
    %c0_i32_0 = arith.constant 0 : i32
    %c0_i32_1 = arith.constant 0 : i32
    %c0_i32_2 = arith.constant 0 : i32
    return %c0_i32, %c0_i32_0, %c0_i32_1 : i32, i32, i32
  }
  func.func @transform_15(%arg0: i32) -> (i32, i32, i32) {
    %c0_i32 = arith.constant 0 : i32
    %c0_i32_0 = arith.constant 0 : i32
    %c0_i32_1 = arith.constant 0 : i32
    %c0_i32_2 = arith.constant 0 : i32
    return %c0_i32, %c0_i32_0, %c0_i32_1 : i32, i32, i32
  }
  func.func @transform_16(%arg0: i32) -> (i32, i32, i32) {
    %c0_i32 = arith.constant 0 : i32
    %c0_i32_0 = arith.constant 0 : i32
    %c0_i32_1 = arith.constant 0 : i32
    %c0_i32_2 = arith.constant 0 : i32
    return %c0_i32, %c0_i32_0, %c0_i32_1 : i32, i32, i32
  }
  func.func @transform_17(%arg0: i32) -> (i32, i32, i32) {
    %c0_i32 = arith.constant 0 : i32
    %c0_i32_0 = arith.constant 0 : i32
    %c0_i32_1 = arith.constant 0 : i32
    %c0_i32_2 = arith.constant 0 : i32
    return %c0_i32, %c0_i32_0, %c0_i32_1 : i32, i32, i32
  }
  func.func @transform_18(%arg0: i32) -> (i32, i32, i32) {
    %c0_i32 = arith.constant 0 : i32
    %c0_i32_0 = arith.constant 0 : i32
    %c0_i32_1 = arith.constant 0 : i32
    %c0_i32_2 = arith.constant 0 : i32
    return %c0_i32, %c0_i32_0, %c0_i32_1 : i32, i32, i32
  }
  func.func @transform_19(%arg0: i32) -> (i32, i32, i32) {
    %c0_i32 = arith.constant 0 : i32
    %c0_i32_0 = arith.constant 0 : i32
    %c0_i32_1 = arith.constant 0 : i32
    %c0_i32_2 = arith.constant 0 : i32
    return %c0_i32, %c0_i32_0, %c0_i32_1 : i32, i32, i32
  }
  func.func @transform_20(%arg0: i32) -> (i32, i32, i32) {
    %c0_i32 = arith.constant 0 : i32
    %c0_i32_0 = arith.constant 0 : i32
    %c0_i32_1 = arith.constant 0 : i32
    %c0_i32_2 = arith.constant 0 : i32
    return %c0_i32, %c0_i32_0, %c0_i32_1 : i32, i32, i32
  }
  func.func @transform_21(%arg0: i32) -> (i32, i32, i32) {
    %c0_i32 = arith.constant 0 : i32
    %c0_i32_0 = arith.constant 0 : i32
    %c0_i32_1 = arith.constant 0 : i32
    %c0_i32_2 = arith.constant 0 : i32
    return %c0_i32, %c0_i32_0, %c0_i32_1 : i32, i32, i32
  }
  func.func @transform_22(%arg0: i32) -> (i32, i32, i32) {
    %c0_i32 = arith.constant 0 : i32
    %c0_i32_0 = arith.constant 0 : i32
    %c0_i32_1 = arith.constant 0 : i32
    %c0_i32_2 = arith.constant 0 : i32
    return %c0_i32, %c0_i32_0, %c0_i32_1 : i32, i32, i32
  }
  func.func @transform_23(%arg0: i32) -> (i32, i32, i32) {
    %c0_i32 = arith.constant 0 : i32
    %c0_i32_0 = arith.constant 0 : i32
    %c0_i32_1 = arith.constant 0 : i32
    %c0_i32_2 = arith.constant 0 : i32
    return %c0_i32, %c0_i32_0, %c0_i32_1 : i32, i32, i32
  }
  func.func @transform_24(%arg0: i32) -> (i32, i32) {
    %c0_i32 = arith.constant 0 : i32
    %c0_i32_0 = arith.constant 0 : i32
    %c0_i32_1 = arith.constant 0 : i32
    return %c0_i32, %c0_i32_0 : i32, i32
  }
  func.func @transform_25(%arg0: i32) -> (i32, i32) {
    %c0_i32 = arith.constant 0 : i32
    %c0_i32_0 = arith.constant 0 : i32
    %c0_i32_1 = arith.constant 0 : i32
    return %c0_i32, %c0_i32_0 : i32, i32
  }
  func.func @transform_26(%arg0: i32) -> (i32, i32) {
    %c0_i32 = arith.constant 0 : i32
    %c0_i32_0 = arith.constant 0 : i32
    %c0_i32_1 = arith.constant 0 : i32
    return %c0_i32, %c0_i32_0 : i32, i32
  }
  func.func @transform_27(%arg0: i32) -> (i32, i32) {
    %c0_i32 = arith.constant 0 : i32
    %c0_i32_0 = arith.constant 0 : i32
    %c0_i32_1 = arith.constant 0 : i32
    return %c0_i32, %c0_i32_0 : i32, i32
  }
  func.func @transform_28(%arg0: i32) -> (i32, i32) {
    %c0_i32 = arith.constant 0 : i32
    %c0_i32_0 = arith.constant 0 : i32
    %c0_i32_1 = arith.constant 0 : i32
    return %c0_i32, %c0_i32_0 : i32, i32
  }
  func.func @transform_29(%arg0: i32) -> (i32, i32) {
    %c0_i32 = arith.constant 0 : i32
    %c0_i32_0 = arith.constant 0 : i32
    %c0_i32_1 = arith.constant 0 : i32
    return %c0_i32, %c0_i32_0 : i32, i32
  }
  func.func @transform_30(%arg0: i32) -> (i32, i32) {
    %c0_i32 = arith.constant 0 : i32
    %c0_i32_0 = arith.constant 0 : i32
    %c0_i32_1 = arith.constant 0 : i32
    return %c0_i32, %c0_i32_0 : i32, i32
  }
  func.func @transform_31(%arg0: i32) -> (i32, i32) {
    %c0_i32 = arith.constant 0 : i32
    %c0_i32_0 = arith.constant 0 : i32
    %c0_i32_1 = arith.constant 0 : i32
    return %c0_i32, %c0_i32_0 : i32, i32
  }
  func.func @transform_32(%arg0: i32) -> (i32, i32) {
    %c0_i32 = arith.constant 0 : i32
    %c0_i32_0 = arith.constant 0 : i32
    %c0_i32_1 = arith.constant 0 : i32
    return %c0_i32, %c0_i32_0 : i32, i32
  }
  func.func @transform_33(%arg0: i32) -> (i32, i32) {
    %c0_i32 = arith.constant 0 : i32
    %c0_i32_0 = arith.constant 0 : i32
    %c0_i32_1 = arith.constant 0 : i32
    return %c0_i32, %c0_i32_0 : i32, i32
  }
  func.func @transform_34(%arg0: i32) -> (i32, i32) {
    %c0_i32 = arith.constant 0 : i32
    %c0_i32_0 = arith.constant 0 : i32
    %c0_i32_1 = arith.constant 0 : i32
    return %c0_i32, %c0_i32_0 : i32, i32
  }
  func.func @transform_35(%arg0: i32) -> (i32, i32) {
    %c0_i32 = arith.constant 0 : i32
    %c0_i32_0 = arith.constant 0 : i32
    %c0_i32_1 = arith.constant 0 : i32
    return %c0_i32, %c0_i32_0 : i32, i32
  }
  func.func @transform_36(%arg0: i32) -> (i32, i32) {
    %c0_i32 = arith.constant 0 : i32
    %c0_i32_0 = arith.constant 0 : i32
    %c0_i32_1 = arith.constant 0 : i32
    return %c0_i32, %c0_i32_0 : i32, i32
  }
  func.func @transform_37(%arg0: i32) -> (i32, i32) {
    %c0_i32 = arith.constant 0 : i32
    %c0_i32_0 = arith.constant 0 : i32
    %c0_i32_1 = arith.constant 0 : i32
    return %c0_i32, %c0_i32_0 : i32, i32
  }
  func.func @transform_38(%arg0: i32) -> (i32, i32) {
    %c0_i32 = arith.constant 0 : i32
    %c0_i32_0 = arith.constant 0 : i32
    %c0_i32_1 = arith.constant 0 : i32
    return %c0_i32, %c0_i32_0 : i32, i32
  }
  func.func @transform_39(%arg0: i32) -> (i32, i32) {
    %c0_i32 = arith.constant 0 : i32
    %c0_i32_0 = arith.constant 0 : i32
    %c0_i32_1 = arith.constant 0 : i32
    return %c0_i32, %c0_i32_0 : i32, i32
  }
  func.func @transform_40(%arg0: i32) -> (i32, i32, i32) {
    %c0_i32 = arith.constant 0 : i32
    %c0_i32_0 = arith.constant 0 : i32
    %c0_i32_1 = arith.constant 0 : i32
    return %arg0, %c0_i32, %c0_i32_0 : i32, i32, i32
  }
}

</mosaic_0001>

<llo_original>
// kernel: meta_learning_transformer_forward.1
$region0: #{meta_learning_transformer_forward.1}
  #allocation0 [shape = 'u32[]', space=smem, size = 0x4, offset = 0x4, fixed_abs, tag = 'smem constant byte address 0x4 - core index']
  #allocation1 [shape = 'u32[144,128]{1,0:T(1,128)}', space=vmem, size = 0x12000, scoped, tag = 'internal scratch']
  #allocation2 [shape = 'f32[1,1]{1,0:T(1,128)S(1)}', space=vmem, size = 0x200, scoped, tag = 'scoped memory for meta_learning_transformer_forward.1']
  #allocation3 [shape = 'f32[1,1]{1,0:T(1,128)S(1)}', space=vmem, size = 0x200, scoped, tag = 'scoped memory for meta_learning_transformer_forward.1']
  %s0 = inlined_call_operand.smem [shape: u32[41], index: -1, kind: input, shape index: {}]
  %s1 = sld [smem:[%s0]]
  %s2 = scalar_lea.smem %s0, 1
  %s3 = sld [smem:[%s2]]
  %s4 = scalar_lea.smem %s0, 2
  %s5 = sld [smem:[%s4]]
  %s6 = scalar_lea.smem %s0, 3
  %s7 = sld [smem:[%s6]]
  %s8 = scalar_lea.smem %s0, 4
  %s9 = sld [smem:[%s8]]
  %s10 = scalar_lea.smem %s0, 5
  %s11 = sld [smem:[%s10]]
  %s12 = scalar_lea.smem %s0, 6
  %s13 = sld [smem:[%s12]]
  %s14 = scalar_lea.smem %s0, 7
  %s15 = sld [smem:[%s14]]
  %s16 = scalar_lea.smem %s0, 8
  %s17 = sld [smem:[%s16]]
  %s18 = scalar_lea.smem %s0, 9
  %s19 = sld [smem:[%s18]]
  %s20 = scalar_lea.smem %s0, 10
  %s21 = sld [smem:[%s20]]
  %s22 = scalar_lea.smem %s0, 11
  %s23 = sld [smem:[%s22]]
  %s24 = scalar_lea.smem %s0, 12
  %s25 = sld [smem:[%s24]]
  %s26 = scalar_lea.smem %s0, 13
  %s27 = sld [smem:[%s26]]
  %s28 = scalar_lea.smem %s0, 14
  %s29 = sld [smem:[%s28]]
  %s30 = scalar_lea.smem %s0, 15
  %s31 = sld [smem:[%s30]]
  %s32 = scalar_lea.smem %s0, 16
  %s33 = sld [smem:[%s32]]
  %s34 = scalar_lea.smem %s0, 17
  %s35 = sld [smem:[%s34]]
  %s36 = scalar_lea.smem %s0, 18
  %s37 = sld [smem:[%s36]]
  %s38 = scalar_lea.smem %s0, 19
  %s39 = sld [smem:[%s38]]
  %s40 = scalar_lea.smem %s0, 20
  %s41 = sld [smem:[%s40]]
  %s42 = scalar_lea.smem %s0, 21
  %s43 = sld [smem:[%s42]]
  %s44 = scalar_lea.smem %s0, 22
  %s45 = sld [smem:[%s44]]
  %s46 = scalar_lea.smem %s0, 23
  %s47 = sld [smem:[%s46]]
  %s48 = scalar_lea.smem %s0, 24
  %s49 = sld [smem:[%s48]]
  %s50 = scalar_lea.smem %s0, 25
  %s51 = sld [smem:[%s50]]
  %s52 = scalar_lea.smem %s0, 26
  %s53 = sld [smem:[%s52]]
  %s54 = scalar_lea.smem %s0, 27
  %s55 = sld [smem:[%s54]]
  %s56 = scalar_lea.smem %s0, 28
  %s57 = sld [smem:[%s56]]
  %s58 = scalar_lea.smem %s0, 29
  %s59 = sld [smem:[%s58]]
  %s60 = scalar_lea.smem %s0, 30
  %s61 = sld [smem:[%s60]]
  %s62 = scalar_lea.smem %s0, 31
  %s63 = sld [smem:[%s62]]
  %s64 = scalar_lea.smem %s0, 32
  %s65 = sld [smem:[%s64]]
  %s66 = scalar_lea.smem %s0, 33
  %s67 = sld [smem:[%s66]]
  %s68 = scalar_lea.smem %s0, 34
  %s69 = sld [smem:[%s68]]
  %s70 = scalar_lea.smem %s0, 35
  %s71 = sld [smem:[%s70]]
  %s72 = scalar_lea.smem %s0, 36
  %s73 = sld [smem:[%s72]]
  %s74 = scalar_lea.smem %s0, 37
  %s75 = sld [smem:[%s74]]
  %s76 = scalar_lea.smem %s0, 38
  %s77 = sld [smem:[%s76]]
  %s78 = scalar_lea.smem %s0, 39
  %s79 = sld [smem:[%s78]]
  %s80 = scalar_lea.smem %s0, 40
  %s81 = sld [smem:[%s80]]
  %s82 = sld [smem:[#allocation0]]
  $region193: #{meta_learning_transformer_forward.1} parent=0
    _
  %s84 = ssub.s32 1, %s82
  %s85 = scalar_select 0, %s84, %s82
  %v86 = vstv %s51
  %87 = vst [vmem:[#allocation2] sm:$0x1] %v86
  %v88 = vstv %s79
  %89 = vst [vmem:[#allocation3] sm:$0x1] %v88
  loop: start=0, step=1, limit=4
  $region2: #{meta_learning_transformer_forward.1} parent=0 // loop_pre_header
    _
  $region3: #{meta_learning_transformer_forward.1} parent=0 // loop_header
    %s91 = sphi 0, %s95
    %p92 = scmp.ge.s32.totalorder %s91, 4
    %s101 = sphi 0, %s103
    %s104 = sphi 0, %s101
    %s105 = sphi 0, %s104
    %s121 = sphi 0, %s105
    %s125 = sphi 0, %s125
    %s127 = sphi 0, %s125
    %s128 = sphi 0, %s127
    %s142 = sphi 0, %s128
    %s146 = sphi 0, %s146
    %s148 = sphi 0, %s146
    %s149 = sphi 0, %s148
    %s163 = sphi 0, %s149
    %s167 = sphi 0, %s167
    %s169 = sphi 0, %s167
    %s170 = sphi 0, %s169
    %s184 = sphi 0, %s170
    %s188 = sphi 0, %s188
    %s190 = sphi 0, %s188
    %s191 = sphi 0, %s190
    %s205 = sphi 0, %s191
    %s209 = sphi 0, %s209
    %s211 = sphi 0, %s209
    %s212 = sphi 0, %s211
    %s226 = sphi 0, %s212
    %s230 = sphi 0, %s230
    %s232 = sphi 0, %s230
    %s233 = sphi 0, %s232
    %s247 = sphi 0, %s233
    %s251 = sphi 0, %s251
    %s253 = sphi 0, %s251
    %s254 = sphi 0, %s253
    %s268 = sphi 0, %s254
    %s272 = sphi 0, %s272
    %s274 = sphi 0, %s272
    %s275 = sphi 0, %s274
    %s289 = sphi 0, %s275
    %s293 = sphi 0, %s293
    %s295 = sphi 0, %s293
    %s296 = sphi 0, %s295
    %s310 = sphi 0, %s296
    %s314 = sphi 0, %s314
    %s316 = sphi 0, %s314
    %s317 = sphi 0, %s316
    %s331 = sphi 0, %s317
    %s335 = sphi 0, %s335
    %s337 = sphi 0, %s335
    %s338 = sphi 0, %s337
    %s352 = sphi 0, %s338
    %s356 = sphi 0, %s356
    %s358 = sphi 0, %s356
    %s359 = sphi 0, %s358
    %s373 = sphi 0, %s359
    %s377 = sphi 0, %s377
    %s379 = sphi 0, %s377
    %s380 = sphi 0, %s379
    %s394 = sphi 0, %s380
    %s398 = sphi 0, %s398
    %s400 = sphi 0, %s398
    %s401 = sphi 0, %s400
    %s415 = sphi 0, %s401
    %s419 = sphi 0, %s419
    %s421 = sphi 0, %s419
    %s422 = sphi 0, %s421
    %s436 = sphi 0, %s422
    %s440 = sphi 0, %s440
    %s442 = sphi 0, %s440
    %s443 = sphi 0, %s442
    %s457 = sphi 0, %s443
    %s461 = sphi 0, %s461
    %s463 = sphi 0, %s461
    %s464 = sphi 0, %s463
    %s478 = sphi 0, %s464
    %s482 = sphi 0, %s482
    %s484 = sphi 0, %s482
    %s485 = sphi 0, %s484
    %s499 = sphi 0, %s485
    %s503 = sphi 0, %s503
    %s505 = sphi 0, %s503
    %s506 = sphi 0, %s505
    %s520 = sphi 0, %s506
    %s524 = sphi 0, %s524
    %s526 = sphi 0, %s524
    %s527 = sphi 0, %s526
    %s541 = sphi 0, %s527
    %s545 = sphi 0, %s545
    %s547 = sphi 0, %s545
    %s548 = sphi 0, %s547
    %s562 = sphi 0, %s548
    %s566 = sphi 0, %s566
    %s568 = sphi 0, %s566
    %s569 = sphi 0, %s568
    %s583 = sphi 0, %s569
    %s587 = sphi 0, %s587
    %s589 = sphi 0, %s587
    %s590 = sphi 0, %s589
    %s604 = sphi 0, %s590
    %s608 = sphi 0, %s608
    %s610 = sphi 0, %s608
    %s611 = sphi 0, %s610
    %s625 = sphi 0, %s611
    %s629 = sphi 0, %s629
    %s631 = sphi 0, %s629
    %s632 = sphi 0, %s631
    %s646 = sphi 0, %s632
    %s650 = sphi 0, %s650
    %s652 = sphi 0, %s650
    %s653 = sphi 0, %s652
    %s667 = sphi 0, %s653
    %s671 = sphi 0, %s671
    %s673 = sphi 0, %s671
    %s674 = sphi 0, %s673
    %s688 = sphi 0, %s674
    %s692 = sphi 0, %s692
    %s694 = sphi 0, %s692
    %s695 = sphi 0, %s694
    %s709 = sphi 0, %s695
    %s713 = sphi 0, %s713
    %s715 = sphi 0, %s713
    %s716 = sphi 0, %s715
    %s730 = sphi 0, %s716
    %s734 = sphi 0, %s734
    %s736 = sphi 0, %s734
    %s737 = sphi 0, %s736
    %s751 = sphi 0, %s737
    %s755 = sphi 0, %s755
    %s757 = sphi 0, %s755
    %s758 = sphi 0, %s757
    %s772 = sphi 0, %s758
    %s776 = sphi 0, %s776
    %s778 = sphi 0, %s776
    %s779 = sphi 0, %s778
    %s793 = sphi 0, %s779
    %s797 = sphi 0, %s797
    %s799 = sphi 0, %s797
    %s800 = sphi 0, %s799
    %s814 = sphi 0, %s800
    %s818 = sphi 0, %s818
    %s820 = sphi 0, %s818
    %s821 = sphi 0, %s820
    %s835 = sphi 0, %s821
    %s839 = sphi 0, %s839
    %s841 = sphi 0, %s839
    %s842 = sphi 0, %s841
    %s856 = sphi 0, %s842
    %s860 = sphi 0, %s860
    %s862 = sphi 0, %s860
    %s863 = sphi 0, %s862
    %s877 = sphi 0, %s863
    %s881 = sphi 0, %s881
    %s883 = sphi 0, %s881
    %s884 = sphi 0, %s883
    %s898 = sphi 0, %s884
    %s902 = sphi 0, %s902
    %s904 = sphi 0, %s902
    %s905 = sphi 0, %s904
    %s919 = sphi 0, %s905
    %s923 = sphi 0, %s923
    %s925 = sphi 0, %s923
    %s926 = sphi 0, %s925
    %s940 = sphi 0, %s926
    %s946 = sphi 0, %s948
    %s949 = sphi 0, %s946
    %s950 = sphi 0, %s949
    %s966 = sphi 0, %s950
  $region4: #{meta_learning_transformer_forward.1} parent=0 // loop_header_branch
    %94 = sbr.rel (%p92) target = $region8
  $region5: #{meta_learning_transformer_forward.1} parent=0 // loop_body
    %s96 = ssub.s32 %s91, 1
    %s97 = ssub.s32 %s91, 2
    %s98 = sadd.s32 %s91, 1
    %s99 = ssub.s32 %s91, %s98
    %p100 = scmp.eq.s32.totalorder %s99, 0
    %s102 = sadd.s32 %s101, 1
    %s103 = scalar_select %p100, %s101, %s102
    %p106 = pneg %p100
    %p107 = scmp.eq.s32.totalorder %s91, 1
    %p108 = por %p106, %p107
    %p109 = scmp.ne.s32.totalorder %s101, %s104
    %p110 = scmp.eq.s32.totalorder %s91, 0
    %p111 = por %p109, %p110
    %p112 = scmp.ne.s32.totalorder %s101, %s104
    %p113 = scmp.eq.s32.totalorder %s96, 1
    %p114 = por %p112, %p113
    %p115 = scmp.ne.s32.totalorder %s104, %s105
    %p116 = scmp.eq.s32.totalorder %s96, 0
    %p117 = por %p115, %p116
    %p118 = scmp.ne.s32.totalorder %s104, %s105
    %p119 = scmp.eq.s32.totalorder %s97, 1
    %p120 = por %p118, %p119
    %p122 = scmp.ne.s32.totalorder %s105, %s121
    %p123 = scmp.eq.s32.totalorder %s97, 0
    %p124 = por %p122, %p123
    %s126 = sadd.s32 %s125, 1
    %p129 = scmp.eq.s32.totalorder %s91, 1
    %p130 = scmp.ne.s32.totalorder %s125, %s127
    %p131 = scmp.eq.s32.totalorder %s91, 0
    %p132 = por %p130, %p131
    %p133 = scmp.ne.s32.totalorder %s125, %s127
    %p134 = scmp.eq.s32.totalorder %s96, 1
    %p135 = por %p133, %p134
    %p136 = scmp.ne.s32.totalorder %s127, %s128
    %p137 = scmp.eq.s32.totalorder %s96, 0
    %p138 = por %p136, %p137
    %p139 = scmp.ne.s32.totalorder %s127, %s128
    %p140 = scmp.eq.s32.totalorder %s97, 1
    %p141 = por %p139, %p140
    %p143 = scmp.ne.s32.totalorder %s128, %s142
    %p144 = scmp.eq.s32.totalorder %s97, 0
    %p145 = por %p143, %p144
    %s147 = sadd.s32 %s146, 1
    %p150 = scmp.eq.s32.totalorder %s91, 1
    %p151 = scmp.ne.s32.totalorder %s146, %s148
    %p152 = scmp.eq.s32.totalorder %s91, 0
    %p153 = por %p151, %p152
    %p154 = scmp.ne.s32.totalorder %s146, %s148
    %p155 = scmp.eq.s32.totalorder %s96, 1
    %p156 = por %p154, %p155
    %p157 = scmp.ne.s32.totalorder %s148, %s149
    %p158 = scmp.eq.s32.totalorder %s96, 0
    %p159 = por %p157, %p158
    %p160 = scmp.ne.s32.totalorder %s148, %s149
    %p161 = scmp.eq.s32.totalorder %s97, 1
    %p162 = por %p160, %p161
    %p164 = scmp.ne.s32.totalorder %s149, %s163
    %p165 = scmp.eq.s32.totalorder %s97, 0
    %p166 = por %p164, %p165
    %s168 = sadd.s32 %s167, 1
    %p171 = scmp.eq.s32.totalorder %s91, 1
    %p172 = scmp.ne.s32.totalorder %s167, %s169
    %p173 = scmp.eq.s32.totalorder %s91, 0
    %p174 = por %p172, %p173
    %p175 = scmp.ne.s32.totalorder %s167, %s169
    %p176 = scmp.eq.s32.totalorder %s96, 1
    %p177 = por %p175, %p176
    %p178 = scmp.ne.s32.totalorder %s169, %s170
    %p179 = scmp.eq.s32.totalorder %s96, 0
    %p180 = por %p178, %p179
    %p181 = scmp.ne.s32.totalorder %s169, %s170
    %p182 = scmp.eq.s32.totalorder %s97, 1
    %p183 = por %p181, %p182
    %p185 = scmp.ne.s32.totalorder %s170, %s184
    %p186 = scmp.eq.s32.totalorder %s97, 0
    %p187 = por %p185, %p186
    %s189 = sadd.s32 %s188, 1
    %p192 = scmp.eq.s32.totalorder %s91, 1
    %p193 = scmp.ne.s32.totalorder %s188, %s190
    %p194 = scmp.eq.s32.totalorder %s91, 0
    %p195 = por %p193, %p194
    %p196 = scmp.ne.s32.totalorder %s188, %s190
    %p197 = scmp.eq.s32.totalorder %s96, 1
    %p198 = por %p196, %p197
    %p199 = scmp.ne.s32.totalorder %s190, %s191
    %p200 = scmp.eq.s32.totalorder %s96, 0
    %p201 = por %p199, %p200
    %p202 = scmp.ne.s32.totalorder %s190, %s191
    %p203 = scmp.eq.s32.totalorder %s97, 1
    %p204 = por %p202, %p203
    %p206 = scmp.ne.s32.totalorder %s191, %s205
    %p207 = scmp.eq.s32.totalorder %s97, 0
    %p208 = por %p206, %p207
    %s210 = sadd.s32 %s209, 1
    %p213 = scmp.eq.s32.totalorder %s91, 1
    %p214 = scmp.ne.s32.totalorder %s209, %s211
    %p215 = scmp.eq.s32.totalorder %s91, 0
    %p216 = por %p214, %p215
    %p217 = scmp.ne.s32.totalorder %s209, %s211
    %p218 = scmp.eq.s32.totalorder %s96, 1
    %p219 = por %p217, %p218
    %p220 = scmp.ne.s32.totalorder %s211, %s212
    %p221 = scmp.eq.s32.totalorder %s96, 0
    %p222 = por %p220, %p221
    %p223 = scmp.ne.s32.totalorder %s211, %s212
    %p224 = scmp.eq.s32.totalorder %s97, 1
    %p225 = por %p223, %p224
    %p227 = scmp.ne.s32.totalorder %s212, %s226
    %p228 = scmp.eq.s32.totalorder %s97, 0
    %p229 = por %p227, %p228
    %s231 = sadd.s32 %s230, 1
    %p234 = scmp.eq.s32.totalorder %s91, 1
    %p235 = scmp.ne.s32.totalorder %s230, %s232
    %p236 = scmp.eq.s32.totalorder %s91, 0
    %p237 = por %p235, %p236
    %p238 = scmp.ne.s32.totalorder %s230, %s232
    %p239 = scmp.eq.s32.totalorder %s96, 1
    %p240 = por %p238, %p239
    %p241 = scmp.ne.s32.totalorder %s232, %s233
    %p242 = scmp.eq.s32.totalorder %s96, 0
    %p243 = por %p241, %p242
    %p244 = scmp.ne.s32.totalorder %s232, %s233
    %p245 = scmp.eq.s32.totalorder %s97, 1
    %p246 = por %p244, %p245
    %p248 = scmp.ne.s32.totalorder %s233, %s247
    %p249 = scmp.eq.s32.totalorder %s97, 0
    %p250 = por %p248, %p249
    %s252 = sadd.s32 %s251, 1
    %p255 = scmp.eq.s32.totalorder %s91, 1
    %p256 = scmp.ne.s32.totalorder %s251, %s253
    %p257 = scmp.eq.s32.totalorder %s91, 0
    %p258 = por %p256, %p257
    %p259 = scmp.ne.s32.totalorder %s251, %s253
    %p260 = scmp.eq.s32.totalorder %s96, 1
    %p261 = por %p259, %p260
    %p262 = scmp.ne.s32.totalorder %s253, %s254
    %p263 = scmp.eq.s32.totalorder %s96, 0
    %p264 = por %p262, %p263
    %p265 = scmp.ne.s32.totalorder %s253, %s254
    %p266 = scmp.eq.s32.totalorder %s97, 1
    %p267 = por %p265, %p266
    %p269 = scmp.ne.s32.totalorder %s254, %s268
    %p270 = scmp.eq.s32.totalorder %s97, 0
    %p271 = por %p269, %p270
    %s273 = sadd.s32 %s272, 1
    %p276 = scmp.eq.s32.totalorder %s91, 1
    %p277 = scmp.ne.s32.totalorder %s272, %s274
    %p278 = scmp.eq.s32.totalorder %s91, 0
    %p279 = por %p277, %p278
    %p280 = scmp.ne.s32.totalorder %s272, %s274
    %p281 = scmp.eq.s32.totalorder %s96, 1
    %p282 = por %p280, %p281
    %p283 = scmp.ne.s32.totalorder %s274, %s275
    %p284 = scmp.eq.s32.totalorder %s96, 0
    %p285 = por %p283, %p284
    %p286 = scmp.ne.s32.totalorder %s274, %s275
    %p287 = scmp.eq.s32.totalorder %s97, 1
    %p288 = por %p286, %p287
    %p290 = scmp.ne.s32.totalorder %s275, %s289
    %p291 = scmp.eq.s32.totalorder %s97, 0
    %p292 = por %p290, %p291
    %s294 = sadd.s32 %s293, 1
    %p297 = scmp.eq.s32.totalorder %s91, 1
    %p298 = scmp.ne.s32.totalorder %s293, %s295
    %p299 = scmp.eq.s32.totalorder %s91, 0
    %p300 = por %p298, %p299
    %p301 = scmp.ne.s32.totalorder %s293, %s295
    %p302 = scmp.eq.s32.totalorder %s96, 1
    %p303 = por %p301, %p302
    %p304 = scmp.ne.s32.totalorder %s295, %s296
    %p305 = scmp.eq.s32.totalorder %s96, 0
    %p306 = por %p304, %p305
    %p307 = scmp.ne.s32.totalorder %s295, %s296
    %p308 = scmp.eq.s32.totalorder %s97, 1
    %p309 = por %p307, %p308
    %p311 = scmp.ne.s32.totalorder %s296, %s310
    %p312 = scmp.eq.s32.totalorder %s97, 0
    %p313 = por %p311, %p312
    %s315 = sadd.s32 %s314, 1
    %p318 = scmp.eq.s32.totalorder %s91, 1
    %p319 = scmp.ne.s32.totalorder %s314, %s316
    %p320 = scmp.eq.s32.totalorder %s91, 0
    %p321 = por %p319, %p320
    %p322 = scmp.ne.s32.totalorder %s314, %s316
    %p323 = scmp.eq.s32.totalorder %s96, 1
    %p324 = por %p322, %p323
    %p325 = scmp.ne.s32.totalorder %s316, %s317
    %p326 = scmp.eq.s32.totalorder %s96, 0
    %p327 = por %p325, %p326
    %p328 = scmp.ne.s32.totalorder %s316, %s317
    %p329 = scmp.eq.s32.totalorder %s97, 1
    %p330 = por %p328, %p329
    %p332 = scmp.ne.s32.totalorder %s317, %s331
    %p333 = scmp.eq.s32.totalorder %s97, 0
    %p334 = por %p332, %p333
    %s336 = sadd.s32 %s335, 1
    %p339 = scmp.eq.s32.totalorder %s91, 1
    %p340 = scmp.ne.s32.totalorder %s335, %s337
    %p341 = scmp.eq.s32.totalorder %s91, 0
    %p342 = por %p340, %p341
    %p343 = scmp.ne.s32.totalorder %s335, %s337
    %p344 = scmp.eq.s32.totalorder %s96, 1
    %p345 = por %p343, %p344
    %p346 = scmp.ne.s32.totalorder %s337, %s338
    %p347 = scmp.eq.s32.totalorder %s96, 0
    %p348 = por %p346, %p347
    %p349 = scmp.ne.s32.totalorder %s337, %s338
    %p350 = scmp.eq.s32.totalorder %s97, 1
    %p351 = por %p349, %p350
    %p353 = scmp.ne.s32.totalorder %s338, %s352
    %p354 = scmp.eq.s32.totalorder %s97, 0
    %p355 = por %p353, %p354
    %s357 = sadd.s32 %s356, 1
    %p360 = scmp.eq.s32.totalorder %s91, 1
    %p361 = scmp.ne.s32.totalorder %s356, %s358
    %p362 = scmp.eq.s32.totalorder %s91, 0
    %p363 = por %p361, %p362
    %p364 = scmp.ne.s32.totalorder %s356, %s358
    %p365 = scmp.eq.s32.totalorder %s96, 1
    %p366 = por %p364, %p365
    %p367 = scmp.ne.s32.totalorder %s358, %s359
    %p368 = scmp.eq.s32.totalorder %s96, 0
    %p369 = por %p367, %p368
    %p370 = scmp.ne.s32.totalorder %s358, %s359
    %p371 = scmp.eq.s32.totalorder %s97, 1
    %p372 = por %p370, %p371
    %p374 = scmp.ne.s32.totalorder %s359, %s373
    %p375 = scmp.eq.s32.totalorder %s97, 0
    %p376 = por %p374, %p375
    %s378 = sadd.s32 %s377, 1
    %p381 = scmp.eq.s32.totalorder %s91, 1
    %p382 = scmp.ne.s32.totalorder %s377, %s379
    %p383 = scmp.eq.s32.totalorder %s91, 0
    %p384 = por %p382, %p383
    %p385 = scmp.ne.s32.totalorder %s377, %s379
    %p386 = scmp.eq.s32.totalorder %s96, 1
    %p387 = por %p385, %p386
    %p388 = scmp.ne.s32.totalorder %s379, %s380
    %p389 = scmp.eq.s32.totalorder %s96, 0
    %p390 = por %p388, %p389
    %p391 = scmp.ne.s32.totalorder %s379, %s380
    %p392 = scmp.eq.s32.totalorder %s97, 1
    %p393 = por %p391, %p392
    %p395 = scmp.ne.s32.totalorder %s380, %s394
    %p396 = scmp.eq.s32.totalorder %s97, 0
    %p397 = por %p395, %p396
    %s399 = sadd.s32 %s398, 1
    %p402 = scmp.eq.s32.totalorder %s91, 1
    %p403 = scmp.ne.s32.totalorder %s398, %s400
    %p404 = scmp.eq.s32.totalorder %s91, 0
    %p405 = por %p403, %p404
    %p406 = scmp.ne.s32.totalorder %s398, %s400
    %p407 = scmp.eq.s32.totalorder %s96, 1
    %p408 = por %p406, %p407
    %p409 = scmp.ne.s32.totalorder %s400, %s401
    %p410 = scmp.eq.s32.totalorder %s96, 0
    %p411 = por %p409, %p410
    %p412 = scmp.ne.s32.totalorder %s400, %s401
    %p413 = scmp.eq.s32.totalorder %s97, 1
    %p414 = por %p412, %p413
    %p416 = scmp.ne.s32.totalorder %s401, %s415
    %p417 = scmp.eq.s32.totalorder %s97, 0
    %p418 = por %p416, %p417
    %s420 = sadd.s32 %s419, 1
    %p423 = scmp.eq.s32.totalorder %s91, 1
    %p424 = scmp.ne.s32.totalorder %s419, %s421
    %p425 = scmp.eq.s32.totalorder %s91, 0
    %p426 = por %p424, %p425
    %p427 = scmp.ne.s32.totalorder %s419, %s421
    %p428 = scmp.eq.s32.totalorder %s96, 1
    %p429 = por %p427, %p428
    %p430 = scmp.ne.s32.totalorder %s421, %s422
    %p431 = scmp.eq.s32.totalorder %s96, 0
    %p432 = por %p430, %p431
    %p433 = scmp.ne.s32.totalorder %s421, %s422
    %p434 = scmp.eq.s32.totalorder %s97, 1
    %p435 = por %p433, %p434
    %p437 = scmp.ne.s32.totalorder %s422, %s436
    %p438 = scmp.eq.s32.totalorder %s97, 0
    %p439 = por %p437, %p438
    %s441 = sadd.s32 %s440, 1
    %p444 = scmp.eq.s32.totalorder %s91, 1
    %p445 = scmp.ne.s32.totalorder %s440, %s442
    %p446 = scmp.eq.s32.totalorder %s91, 0
    %p447 = por %p445, %p446
    %p448 = scmp.ne.s32.totalorder %s440, %s442
    %p449 = scmp.eq.s32.totalorder %s96, 1
    %p450 = por %p448, %p449
    %p451 = scmp.ne.s32.totalorder %s442, %s443
    %p452 = scmp.eq.s32.totalorder %s96, 0
    %p453 = por %p451, %p452
    %p454 = scmp.ne.s32.totalorder %s442, %s443
    %p455 = scmp.eq.s32.totalorder %s97, 1
    %p456 = por %p454, %p455
    %p458 = scmp.ne.s32.totalorder %s443, %s457
    %p459 = scmp.eq.s32.totalorder %s97, 0
    %p460 = por %p458, %p459
    %s462 = sadd.s32 %s461, 1
    %p465 = scmp.eq.s32.totalorder %s91, 1
    %p466 = scmp.ne.s32.totalorder %s461, %s463
    %p467 = scmp.eq.s32.totalorder %s91, 0
    %p468 = por %p466, %p467
    %p469 = scmp.ne.s32.totalorder %s461, %s463
    %p470 = scmp.eq.s32.totalorder %s96, 1
    %p471 = por %p469, %p470
    %p472 = scmp.ne.s32.totalorder %s463, %s464
    %p473 = scmp.eq.s32.totalorder %s96, 0
    %p474 = por %p472, %p473
    %p475 = scmp.ne.s32.totalorder %s463, %s464
    %p476 = scmp.eq.s32.totalorder %s97, 1
    %p477 = por %p475, %p476
    %p479 = scmp.ne.s32.totalorder %s464, %s478
    %p480 = scmp.eq.s32.totalorder %s97, 0
    %p481 = por %p479, %p480
    %s483 = sadd.s32 %s482, 1
    %p486 = scmp.eq.s32.totalorder %s91, 1
    %p487 = scmp.ne.s32.totalorder %s482, %s484
    %p488 = scmp.eq.s32.totalorder %s91, 0
    %p489 = por %p487, %p488
    %p490 = scmp.ne.s32.totalorder %s482, %s484
    %p491 = scmp.eq.s32.totalorder %s96, 1
    %p492 = por %p490, %p491
    %p493 = scmp.ne.s32.totalorder %s484, %s485
    %p494 = scmp.eq.s32.totalorder %s96, 0
    %p495 = por %p493, %p494
    %p496 = scmp.ne.s32.totalorder %s484, %s485
    %p497 = scmp.eq.s32.totalorder %s97, 1
    %p498 = por %p496, %p497
    %p500 = scmp.ne.s32.totalorder %s485, %s499
    %p501 = scmp.eq.s32.totalorder %s97, 0
    %p502 = por %p500, %p501
    %s504 = sadd.s32 %s503, 1
    %p507 = scmp.eq.s32.totalorder %s91, 1
    %p508 = scmp.ne.s32.totalorder %s503, %s505
    %p509 = scmp.eq.s32.totalorder %s91, 0
    %p510 = por %p508, %p509
    %p511 = scmp.ne.s32.totalorder %s503, %s505
    %p512 = scmp.eq.s32.totalorder %s96, 1
    %p513 = por %p511, %p512
    %p514 = scmp.ne.s32.totalorder %s505, %s506
    %p515 = scmp.eq.s32.totalorder %s96, 0
    %p516 = por %p514, %p515
    %p517 = scmp.ne.s32.totalorder %s505, %s506
    %p518 = scmp.eq.s32.totalorder %s97, 1
    %p519 = por %p517, %p518
    %p521 = scmp.ne.s32.totalorder %s506, %s520
    %p522 = scmp.eq.s32.totalorder %s97, 0
    %p523 = por %p521, %p522
    %s525 = sadd.s32 %s524, 1
    %p528 = scmp.eq.s32.totalorder %s91, 1
    %p529 = scmp.ne.s32.totalorder %s524, %s526
    %p530 = scmp.eq.s32.totalorder %s91, 0
    %p531 = por %p529, %p530
    %p532 = scmp.ne.s32.totalorder %s524, %s526
    %p533 = scmp.eq.s32.totalorder %s96, 1
    %p534 = por %p532, %p533
    %p535 = scmp.ne.s32.totalorder %s526, %s527
    %p536 = scmp.eq.s32.totalorder %s96, 0
    %p537 = por %p535, %p536
    %p538 = scmp.ne.s32.totalorder %s526, %s527
    %p539 = scmp.eq.s32.totalorder %s97, 1
    %p540 = por %p538, %p539
    %p542 = scmp.ne.s32.totalorder %s527, %s541
    %p543 = scmp.eq.s32.totalorder %s97, 0
    %p544 = por %p542, %p543
    %s546 = sadd.s32 %s545, 1
    %p549 = scmp.eq.s32.totalorder %s91, 1
    %p550 = scmp.ne.s32.totalorder %s545, %s547
    %p551 = scmp.eq.s32.totalorder %s91, 0
    %p552 = por %p550, %p551
    %p553 = scmp.ne.s32.totalorder %s545, %s547
    %p554 = scmp.eq.s32.totalorder %s96, 1
    %p555 = por %p553, %p554
    %p556 = scmp.ne.s32.totalorder %s547, %s548
    %p557 = scmp.eq.s32.totalorder %s96, 0
    %p558 = por %p556, %p557
    %p559 = scmp.ne.s32.totalorder %s547, %s548
    %p560 = scmp.eq.s32.totalorder %s97, 1
    %p561 = por %p559, %p560
    %p563 = scmp.ne.s32.totalorder %s548, %s562
    %p564 = scmp.eq.s32.totalorder %s97, 0
    %p565 = por %p563, %p564
    %s567 = sadd.s32 %s566, 1
    %p570 = scmp.eq.s32.totalorder %s91, 1
    %p571 = scmp.ne.s32.totalorder %s566, %s568
    %p572 = scmp.eq.s32.totalorder %s91, 0
    %p573 = por %p571, %p572
    %p574 = scmp.ne.s32.totalorder %s566, %s568
    %p575 = scmp.eq.s32.totalorder %s96, 1
    %p576 = por %p574, %p575
    %p577 = scmp.ne.s32.totalorder %s568, %s569
    %p578 = scmp.eq.s32.totalorder %s96, 0
    %p579 = por %p577, %p578
    %p580 = scmp.ne.s32.totalorder %s568, %s569
    %p581 = scmp.eq.s32.totalorder %s97, 1
    %p582 = por %p580, %p581
    %p584 = scmp.ne.s32.totalorder %s569, %s583
    %p585 = scmp.eq.s32.totalorder %s97, 0
    %p586 = por %p584, %p585
    %s588 = sadd.s32 %s587, 1
    %p591 = scmp.eq.s32.totalorder %s91, 1
    %p592 = scmp.ne.s32.totalorder %s587, %s589
    %p593 = scmp.eq.s32.totalorder %s91, 0
    %p594 = por %p592, %p593
    %p595 = scmp.ne.s32.totalorder %s587, %s589
    %p596 = scmp.eq.s32.totalorder %s96, 1
    %p597 = por %p595, %p596
    %p598 = scmp.ne.s32.totalorder %s589, %s590
    %p599 = scmp.eq.s32.totalorder %s96, 0
    %p600 = por %p598, %p599
    %p601 = scmp.ne.s32.totalorder %s589, %s590
    %p602 = scmp.eq.s32.totalorder %s97, 1
    %p603 = por %p601, %p602
    %p605 = scmp.ne.s32.totalorder %s590, %s604
    %p606 = scmp.eq.s32.totalorder %s97, 0
    %p607 = por %p605, %p606
    %s609 = sadd.s32 %s608, 1
    %p612 = scmp.eq.s32.totalorder %s91, 1
    %p613 = scmp.ne.s32.totalorder %s608, %s610
    %p614 = scmp.eq.s32.totalorder %s91, 0
    %p615 = por %p613, %p614
    %p616 = scmp.ne.s32.totalorder %s608, %s610
    %p617 = scmp.eq.s32.totalorder %s96, 1
    %p618 = por %p616, %p617
    %p619 = scmp.ne.s32.totalorder %s610, %s611
    %p620 = scmp.eq.s32.totalorder %s96, 0
    %p621 = por %p619, %p620
    %p622 = scmp.ne.s32.totalorder %s610, %s611
    %p623 = scmp.eq.s32.totalorder %s97, 1
    %p624 = por %p622, %p623
    %p626 = scmp.ne.s32.totalorder %s611, %s625
    %p627 = scmp.eq.s32.totalorder %s97, 0
    %p628 = por %p626, %p627
    %s630 = sadd.s32 %s629, 1
    %p633 = scmp.eq.s32.totalorder %s91, 1
    %p634 = scmp.ne.s32.totalorder %s629, %s631
    %p635 = scmp.eq.s32.totalorder %s91, 0
    %p636 = por %p634, %p635
    %p637 = scmp.ne.s32.totalorder %s629, %s631
    %p638 = scmp.eq.s32.totalorder %s96, 1
    %p639 = por %p637, %p638
    %p640 = scmp.ne.s32.totalorder %s631, %s632
    %p641 = scmp.eq.s32.totalorder %s96, 0
    %p642 = por %p640, %p641
    %p643 = scmp.ne.s32.totalorder %s631, %s632
    %p644 = scmp.eq.s32.totalorder %s97, 1
    %p645 = por %p643, %p644
    %p647 = scmp.ne.s32.totalorder %s632, %s646
    %p648 = scmp.eq.s32.totalorder %s97, 0
    %p649 = por %p647, %p648
    %s651 = sadd.s32 %s650, 1
    %p654 = scmp.eq.s32.totalorder %s91, 1
    %p655 = scmp.ne.s32.totalorder %s650, %s652
    %p656 = scmp.eq.s32.totalorder %s91, 0
    %p657 = por %p655, %p656
    %p658 = scmp.ne.s32.totalorder %s650, %s652
    %p659 = scmp.eq.s32.totalorder %s96, 1
    %p660 = por %p658, %p659
    %p661 = scmp.ne.s32.totalorder %s652, %s653
    %p662 = scmp.eq.s32.totalorder %s96, 0
    %p663 = por %p661, %p662
    %p664 = scmp.ne.s32.totalorder %s652, %s653
    %p665 = scmp.eq.s32.totalorder %s97, 1
    %p666 = por %p664, %p665
    %p668 = scmp.ne.s32.totalorder %s653, %s667
    %p669 = scmp.eq.s32.totalorder %s97, 0
    %p670 = por %p668, %p669
    %s672 = sadd.s32 %s671, 1
    %p675 = scmp.eq.s32.totalorder %s91, 1
    %p676 = scmp.ne.s32.totalorder %s671, %s673
    %p677 = scmp.eq.s32.totalorder %s91, 0
    %p678 = por %p676, %p677
    %p679 = scmp.ne.s32.totalorder %s671, %s673
    %p680 = scmp.eq.s32.totalorder %s96, 1
    %p681 = por %p679, %p680
    %p682 = scmp.ne.s32.totalorder %s673, %s674
    %p683 = scmp.eq.s32.totalorder %s96, 0
    %p684 = por %p682, %p683
    %p685 = scmp.ne.s32.totalorder %s673, %s674
    %p686 = scmp.eq.s32.totalorder %s97, 1
    %p687 = por %p685, %p686
    %p689 = scmp.ne.s32.totalorder %s674, %s688
    %p690 = scmp.eq.s32.totalorder %s97, 0
    %p691 = por %p689, %p690
    %s693 = sadd.s32 %s692, 1
    %p696 = scmp.eq.s32.totalorder %s91, 1
    %p697 = scmp.ne.s32.totalorder %s692, %s694
    %p698 = scmp.eq.s32.totalorder %s91, 0
    %p699 = por %p697, %p698
    %p700 = scmp.ne.s32.totalorder %s692, %s694
    %p701 = scmp.eq.s32.totalorder %s96, 1
    %p702 = por %p700, %p701
    %p703 = scmp.ne.s32.totalorder %s694, %s695
    %p704 = scmp.eq.s32.totalorder %s96, 0
    %p705 = por %p703, %p704
    %p706 = scmp.ne.s32.totalorder %s694, %s695
    %p707 = scmp.eq.s32.totalorder %s97, 1
    %p708 = por %p706, %p707
    %p710 = scmp.ne.s32.totalorder %s695, %s709
    %p711 = scmp.eq.s32.totalorder %s97, 0
    %p712 = por %p710, %p711
    %s714 = sadd.s32 %s713, 1
    %p717 = scmp.eq.s32.totalorder %s91, 1
    %p718 = scmp.ne.s32.totalorder %s713, %s715
    %p719 = scmp.eq.s32.totalorder %s91, 0
    %p720 = por %p718, %p719
    %p721 = scmp.ne.s32.totalorder %s713, %s715
    %p722 = scmp.eq.s32.totalorder %s96, 1
    %p723 = por %p721, %p722
    %p724 = scmp.ne.s32.totalorder %s715, %s716
    %p725 = scmp.eq.s32.totalorder %s96, 0
    %p726 = por %p724, %p725
    %p727 = scmp.ne.s32.totalorder %s715, %s716
    %p728 = scmp.eq.s32.totalorder %s97, 1
    %p729 = por %p727, %p728
    %p731 = scmp.ne.s32.totalorder %s716, %s730
    %p732 = scmp.eq.s32.totalorder %s97, 0
    %p733 = por %p731, %p732
    %s735 = sadd.s32 %s734, 1
    %p738 = scmp.eq.s32.totalorder %s91, 1
    %p739 = scmp.ne.s32.totalorder %s734, %s736
    %p740 = scmp.eq.s32.totalorder %s91, 0
    %p741 = por %p739, %p740
    %p742 = scmp.ne.s32.totalorder %s734, %s736
    %p743 = scmp.eq.s32.totalorder %s96, 1
    %p744 = por %p742, %p743
    %p745 = scmp.ne.s32.totalorder %s736, %s737
    %p746 = scmp.eq.s32.totalorder %s96, 0
    %p747 = por %p745, %p746
    %p748 = scmp.ne.s32.totalorder %s736, %s737
    %p749 = scmp.eq.s32.totalorder %s97, 1
    %p750 = por %p748, %p749
    %p752 = scmp.ne.s32.totalorder %s737, %s751
    %p753 = scmp.eq.s32.totalorder %s97, 0
    %p754 = por %p752, %p753
    %s756 = sadd.s32 %s755, 1
    %p759 = scmp.eq.s32.totalorder %s91, 1
    %p760 = scmp.ne.s32.totalorder %s755, %s757
    %p761 = scmp.eq.s32.totalorder %s91, 0
    %p762 = por %p760, %p761
    %p763 = scmp.ne.s32.totalorder %s755, %s757
    %p764 = scmp.eq.s32.totalorder %s96, 1
    %p765 = por %p763, %p764
    %p766 = scmp.ne.s32.totalorder %s757, %s758
    %p767 = scmp.eq.s32.totalorder %s96, 0
    %p768 = por %p766, %p767
    %p769 = scmp.ne.s32.totalorder %s757, %s758
    %p770 = scmp.eq.s32.totalorder %s97, 1
    %p771 = por %p769, %p770
    %p773 = scmp.ne.s32.totalorder %s758, %s772
    %p774 = scmp.eq.s32.totalorder %s97, 0
    %p775 = por %p773, %p774
    %s777 = sadd.s32 %s776, 1
    %p780 = scmp.eq.s32.totalorder %s91, 1
    %p781 = scmp.ne.s32.totalorder %s776, %s778
    %p782 = scmp.eq.s32.totalorder %s91, 0
    %p783 = por %p781, %p782
    %p784 = scmp.ne.s32.totalorder %s776, %s778
    %p785 = scmp.eq.s32.totalorder %s96, 1
    %p786 = por %p784, %p785
    %p787 = scmp.ne.s32.totalorder %s778, %s779
    %p788 = scmp.eq.s32.totalorder %s96, 0
    %p789 = por %p787, %p788
    %p790 = scmp.ne.s32.totalorder %s778, %s779
    %p791 = scmp.eq.s32.totalorder %s97, 1
    %p792 = por %p790, %p791
    %p794 = scmp.ne.s32.totalorder %s779, %s793
    %p795 = scmp.eq.s32.totalorder %s97, 0
    %p796 = por %p794, %p795
    %s798 = sadd.s32 %s797, 1
    %p801 = scmp.eq.s32.totalorder %s91, 1
    %p802 = scmp.ne.s32.totalorder %s797, %s799
    %p803 = scmp.eq.s32.totalorder %s91, 0
    %p804 = por %p802, %p803
    %p805 = scmp.ne.s32.totalorder %s797, %s799
    %p806 = scmp.eq.s32.totalorder %s96, 1
    %p807 = por %p805, %p806
    %p808 = scmp.ne.s32.totalorder %s799, %s800
    %p809 = scmp.eq.s32.totalorder %s96, 0
    %p810 = por %p808, %p809
    %p811 = scmp.ne.s32.totalorder %s799, %s800
    %p812 = scmp.eq.s32.totalorder %s97, 1
    %p813 = por %p811, %p812
    %p815 = scmp.ne.s32.totalorder %s800, %s814
    %p816 = scmp.eq.s32.totalorder %s97, 0
    %p817 = por %p815, %p816
    %s819 = sadd.s32 %s818, 1
    %p822 = scmp.eq.s32.totalorder %s91, 1
    %p823 = scmp.ne.s32.totalorder %s818, %s820
    %p824 = scmp.eq.s32.totalorder %s91, 0
    %p825 = por %p823, %p824
    %p826 = scmp.ne.s32.totalorder %s818, %s820
    %p827 = scmp.eq.s32.totalorder %s96, 1
    %p828 = por %p826, %p827
    %p829 = scmp.ne.s32.totalorder %s820, %s821
    %p830 = scmp.eq.s32.totalorder %s96, 0
    %p831 = por %p829, %p830
    %p832 = scmp.ne.s32.totalorder %s820, %s821
    %p833 = scmp.eq.s32.totalorder %s97, 1
    %p834 = por %p832, %p833
    %p836 = scmp.ne.s32.totalorder %s821, %s835
    %p837 = scmp.eq.s32.totalorder %s97, 0
    %p838 = por %p836, %p837
    %s840 = sadd.s32 %s839, 1
    %p843 = scmp.eq.s32.totalorder %s91, 1
    %p844 = scmp.ne.s32.totalorder %s839, %s841
    %p845 = scmp.eq.s32.totalorder %s91, 0
    %p846 = por %p844, %p845
    %p847 = scmp.ne.s32.totalorder %s839, %s841
    %p848 = scmp.eq.s32.totalorder %s96, 1
    %p849 = por %p847, %p848
    %p850 = scmp.ne.s32.totalorder %s841, %s842
    %p851 = scmp.eq.s32.totalorder %s96, 0
    %p852 = por %p850, %p851
    %p853 = scmp.ne.s32.totalorder %s841, %s842
    %p854 = scmp.eq.s32.totalorder %s97, 1
    %p855 = por %p853, %p854
    %p857 = scmp.ne.s32.totalorder %s842, %s856
    %p858 = scmp.eq.s32.totalorder %s97, 0
    %p859 = por %p857, %p858
    %s861 = sadd.s32 %s860, 1
    %p864 = scmp.eq.s32.totalorder %s91, 1
    %p865 = scmp.ne.s32.totalorder %s860, %s862
    %p866 = scmp.eq.s32.totalorder %s91, 0
    %p867 = por %p865, %p866
    %p868 = scmp.ne.s32.totalorder %s860, %s862
    %p869 = scmp.eq.s32.totalorder %s96, 1
    %p870 = por %p868, %p869
    %p871 = scmp.ne.s32.totalorder %s862, %s863
    %p872 = scmp.eq.s32.totalorder %s96, 0
    %p873 = por %p871, %p872
    %p874 = scmp.ne.s32.totalorder %s862, %s863
    %p875 = scmp.eq.s32.totalorder %s97, 1
    %p876 = por %p874, %p875
    %p878 = scmp.ne.s32.totalorder %s863, %s877
    %p879 = scmp.eq.s32.totalorder %s97, 0
    %p880 = por %p878, %p879
    %s882 = sadd.s32 %s881, 1
    %p885 = scmp.eq.s32.totalorder %s91, 1
    %p886 = scmp.ne.s32.totalorder %s881, %s883
    %p887 = scmp.eq.s32.totalorder %s91, 0
    %p888 = por %p886, %p887
    %p889 = scmp.ne.s32.totalorder %s881, %s883
    %p890 = scmp.eq.s32.totalorder %s96, 1
    %p891 = por %p889, %p890
    %p892 = scmp.ne.s32.totalorder %s883, %s884
    %p893 = scmp.eq.s32.totalorder %s96, 0
    %p894 = por %p892, %p893
    %p895 = scmp.ne.s32.totalorder %s883, %s884
    %p896 = scmp.eq.s32.totalorder %s97, 1
    %p897 = por %p895, %p896
    %p899 = scmp.ne.s32.totalorder %s884, %s898
    %p900 = scmp.eq.s32.totalorder %s97, 0
    %p901 = por %p899, %p900
    %s903 = sadd.s32 %s902, 1
    %p906 = scmp.eq.s32.totalorder %s91, 1
    %p907 = scmp.ne.s32.totalorder %s902, %s904
    %p908 = scmp.eq.s32.totalorder %s91, 0
    %p909 = por %p907, %p908
    %p910 = scmp.ne.s32.totalorder %s902, %s904
    %p911 = scmp.eq.s32.totalorder %s96, 1
    %p912 = por %p910, %p911
    %p913 = scmp.ne.s32.totalorder %s904, %s905
    %p914 = scmp.eq.s32.totalorder %s96, 0
    %p915 = por %p913, %p914
    %p916 = scmp.ne.s32.totalorder %s904, %s905
    %p917 = scmp.eq.s32.totalorder %s97, 1
    %p918 = por %p916, %p917
    %p920 = scmp.ne.s32.totalorder %s905, %s919
    %p921 = scmp.eq.s32.totalorder %s97, 0
    %p922 = por %p920, %p921
    %s924 = sadd.s32 %s923, 1
    %p927 = scmp.eq.s32.totalorder %s91, 1
    %p928 = scmp.ne.s32.totalorder %s923, %s925
    %p929 = scmp.eq.s32.totalorder %s91, 0
    %p930 = por %p928, %p929
    %p931 = scmp.ne.s32.totalorder %s923, %s925
    %p932 = scmp.eq.s32.totalorder %s96, 1
    %p933 = por %p931, %p932
    %p934 = scmp.ne.s32.totalorder %s925, %s926
    %p935 = scmp.eq.s32.totalorder %s96, 0
    %p936 = por %p934, %p935
    %p937 = scmp.ne.s32.totalorder %s925, %s926
    %p938 = scmp.eq.s32.totalorder %s97, 1
    %p939 = por %p937, %p938
    %p941 = scmp.ne.s32.totalorder %s926, %s940
    %p942 = scmp.eq.s32.totalorder %s97, 0
    %p943 = por %p941, %p942
    %s944 = ssub.s32 %s91, %s98
    %p945 = scmp.eq.s32.totalorder %s944, 0
    %s947 = sadd.s32 %s946, 1
    %s948 = scalar_select %p945, %s946, %s947
    %p951 = pneg %p945
    %p952 = scmp.eq.s32.totalorder %s91, 1
    %p953 = por %p951, %p952
    %p954 = scmp.ne.s32.totalorder %s946, %s949
    %p955 = scmp.eq.s32.totalorder %s91, 0
    %p956 = por %p954, %p955
    %p957 = scmp.ne.s32.totalorder %s946, %s949
    %p958 = scmp.eq.s32.totalorder %s96, 1
    %p959 = por %p957, %p958
    %p960 = scmp.ne.s32.totalorder %s949, %s950
    %p961 = scmp.eq.s32.totalorder %s96, 0
    %p962 = por %p960, %p961
    %p963 = scmp.ne.s32.totalorder %s949, %s950
    %p964 = scmp.eq.s32.totalorder %s97, 1
    %p965 = por %p963, %p964
    %p967 = scmp.ne.s32.totalorder %s950, %s966
    %p968 = scmp.eq.s32.totalorder %s97, 0
    %p969 = por %p967, %p968
    %p970 = scmp.le.s32.totalorder 1, %s91
    %p971 = scmp.lt.s32.totalorder %s91, 3
    %p972 = pnand %p970, %p971
    %p973 = pneg %p972
    // Predicated region
    $region9: #{meta_learning_transformer_forward.1} parent=5 // pred_check
      _
    $region10: #{meta_learning_transformer_forward.1} parent=5 // pred_check_branch
      %975 = sbr.rel (%p972) target = $region12
    $region11: #{meta_learning_transformer_forward.1} parent=5 // pred_region
      %s976 = ssub.s32 %s91, 1
      // Predicated region
      $region13: #{meta_learning_transformer_forward.1} parent=11 // pred_check
        %p977 = pneg %p138
      $region14: #{meta_learning_transformer_forward.1} parent=11 // pred_check_branch
        %979 = sbr.rel (%p977) target = $region16
      $region15: #{meta_learning_transformer_forward.1} parent=11 // pred_region
        _
      $region16: #{meta_learning_transformer_forward.1} parent=11 // pred_fallthru
        _
      // Predicated region
      $region17: #{meta_learning_transformer_forward.1} parent=11 // pred_check
        %p980 = pneg %p159
      $region18: #{meta_learning_transformer_forward.1} parent=11 // pred_check_branch
        %982 = sbr.rel (%p980) target = $region20
      $region19: #{meta_learning_transformer_forward.1} parent=11 // pred_region
        _
      $region20: #{meta_learning_transformer_forward.1} parent=11 // pred_fallthru
        _
      // Predicated region
      $region21: #{meta_learning_transformer_forward.1} parent=11 // pred_check
        %p983 = pneg %p180
      $region22: #{meta_learning_transformer_forward.1} parent=11 // pred_check_branch
        %985 = sbr.rel (%p983) target = $region24
      $region23: #{meta_learning_transformer_forward.1} parent=11 // pred_region
        _
      $region24: #{meta_learning_transformer_forward.1} parent=11 // pred_fallthru
        _
      // Predicated region
      $region25: #{meta_learning_transformer_forward.1} parent=11 // pred_check
        %p986 = pneg %p201
      $region26: #{meta_learning_transformer_forward.1} parent=11 // pred_check_branch
        %988 = sbr.rel (%p986) target = $region28
      $region27: #{meta_learning_transformer_forward.1} parent=11 // pred_region
        _
      $region28: #{meta_learning_transformer_forward.1} parent=11 // pred_fallthru
        _
      // Predicated region
      $region29: #{meta_learning_transformer_forward.1} parent=11 // pred_check
        %p989 = pneg %p222
      $region30: #{meta_learning_transformer_forward.1} parent=11 // pred_check_branch
        %991 = sbr.rel (%p989) target = $region32
      $region31: #{meta_learning_transformer_forward.1} parent=11 // pred_region
        _
      $region32: #{meta_learning_transformer_forward.1} parent=11 // pred_fallthru
        _
      // Predicated region
      $region33: #{meta_learning_transformer_forward.1} parent=11 // pred_check
        %p992 = pneg %p243
      $region34: #{meta_learning_transformer_forward.1} parent=11 // pred_check_branch
        %994 = sbr.rel (%p992) target = $region36
      $region35: #{meta_learning_transformer_forward.1} parent=11 // pred_region
        _
      $region36: #{meta_learning_transformer_forward.1} parent=11 // pred_fallthru
        _
      // Predicated region
      $region37: #{meta_learning_transformer_forward.1} parent=11 // pred_check
        %p995 = pneg %p264
      $region38: #{meta_learning_transformer_forward.1} parent=11 // pred_check_branch
        %997 = sbr.rel (%p995) target = $region40
      $region39: #{meta_learning_transformer_forward.1} parent=11 // pred_region
        _
      $region40: #{meta_learning_transformer_forward.1} parent=11 // pred_fallthru
        _
      // Predicated region
      $region41: #{meta_learning_transformer_forward.1} parent=11 // pred_check
        %p998 = pneg %p285
      $region42: #{meta_learning_transformer_forward.1} parent=11 // pred_check_branch
        %1000 = sbr.rel (%p998) target = $region44
      $region43: #{meta_learning_transformer_forward.1} parent=11 // pred_region
        _
      $region44: #{meta_learning_transformer_forward.1} parent=11 // pred_fallthru
        _
      // Predicated region
      $region45: #{meta_learning_transformer_forward.1} parent=11 // pred_check
        %p1001 = pneg %p306
      $region46: #{meta_learning_transformer_forward.1} parent=11 // pred_check_branch
        %1003 = sbr.rel (%p1001) target = $region48
      $region47: #{meta_learning_transformer_forward.1} parent=11 // pred_region
        _
      $region48: #{meta_learning_transformer_forward.1} parent=11 // pred_fallthru
        _
      // Predicated region
      $region49: #{meta_learning_transformer_forward.1} parent=11 // pred_check
        %p1004 = pneg %p327
      $region50: #{meta_learning_transformer_forward.1} parent=11 // pred_check_branch
        %1006 = sbr.rel (%p1004) target = $region52
      $region51: #{meta_learning_transformer_forward.1} parent=11 // pred_region
        _
      $region52: #{meta_learning_transformer_forward.1} parent=11 // pred_fallthru
        _
      // Predicated region
      $region53: #{meta_learning_transformer_forward.1} parent=11 // pred_check
        %p1007 = pneg %p348
      $region54: #{meta_learning_transformer_forward.1} parent=11 // pred_check_branch
        %1009 = sbr.rel (%p1007) target = $region56
      $region55: #{meta_learning_transformer_forward.1} parent=11 // pred_region
        _
      $region56: #{meta_learning_transformer_forward.1} parent=11 // pred_fallthru
        _
      // Predicated region
      $region57: #{meta_learning_transformer_forward.1} parent=11 // pred_check
        %p1010 = pneg %p369
      $region58: #{meta_learning_transformer_forward.1} parent=11 // pred_check_branch
        %1012 = sbr.rel (%p1010) target = $region60
      $region59: #{meta_learning_transformer_forward.1} parent=11 // pred_region
        _
      $region60: #{meta_learning_transformer_forward.1} parent=11 // pred_fallthru
        _
      // Predicated region
      $region61: #{meta_learning_transformer_forward.1} parent=11 // pred_check
        %p1013 = pneg %p390
      $region62: #{meta_learning_transformer_forward.1} parent=11 // pred_check_branch
        %1015 = sbr.rel (%p1013) target = $region64
      $region63: #{meta_learning_transformer_forward.1} parent=11 // pred_region
        _
      $region64: #{meta_learning_transformer_forward.1} parent=11 // pred_fallthru
        _
      // Predicated region
      $region65: #{meta_learning_transformer_forward.1} parent=11 // pred_check
        %p1016 = pneg %p411
      $region66: #{meta_learning_transformer_forward.1} parent=11 // pred_check_branch
        %1018 = sbr.rel (%p1016) target = $region68
      $region67: #{meta_learning_transformer_forward.1} parent=11 // pred_region
        _
      $region68: #{meta_learning_transformer_forward.1} parent=11 // pred_fallthru
        _
      // Predicated region
      $region69: #{meta_learning_transformer_forward.1} parent=11 // pred_check
        %p1019 = pneg %p432
      $region70: #{meta_learning_transformer_forward.1} parent=11 // pred_check_branch
        %1021 = sbr.rel (%p1019) target = $region72
      $region71: #{meta_learning_transformer_forward.1} parent=11 // pred_region
        _
      $region72: #{meta_learning_transformer_forward.1} parent=11 // pred_fallthru
        _
      // Predicated region
      $region73: #{meta_learning_transformer_forward.1} parent=11 // pred_check
        %p1022 = pneg %p453
      $region74: #{meta_learning_transformer_forward.1} parent=11 // pred_check_branch
        %1024 = sbr.rel (%p1022) target = $region76
      $region75: #{meta_learning_transformer_forward.1} parent=11 // pred_region
        _
      $region76: #{meta_learning_transformer_forward.1} parent=11 // pred_fallthru
        _
      // Predicated region
      $region77: #{meta_learning_transformer_forward.1} parent=11 // pred_check
        %p1025 = pneg %p474
      $region78: #{meta_learning_transformer_forward.1} parent=11 // pred_check_branch
        %1027 = sbr.rel (%p1025) target = $region80
      $region79: #{meta_learning_transformer_forward.1} parent=11 // pred_region
        _
      $region80: #{meta_learning_transformer_forward.1} parent=11 // pred_fallthru
        _
      // Predicated region
      $region81: #{meta_learning_transformer_forward.1} parent=11 // pred_check
        %p1028 = pneg %p495
      $region82: #{meta_learning_transformer_forward.1} parent=11 // pred_check_branch
        %1030 = sbr.rel (%p1028) target = $region84
      $region83: #{meta_learning_transformer_forward.1} parent=11 // pred_region
        _
      $region84: #{meta_learning_transformer_forward.1} parent=11 // pred_fallthru
        _
      // Predicated region
      $region85: #{meta_learning_transformer_forward.1} parent=11 // pred_check
        %p1031 = pneg %p516
      $region86: #{meta_learning_transformer_forward.1} parent=11 // pred_check_branch
        %1033 = sbr.rel (%p1031) target = $region88
      $region87: #{meta_learning_transformer_forward.1} parent=11 // pred_region
        _
      $region88: #{meta_learning_transformer_forward.1} parent=11 // pred_fallthru
        _
      // Predicated region
      $region89: #{meta_learning_transformer_forward.1} parent=11 // pred_check
        %p1034 = pneg %p537
      $region90: #{meta_learning_transformer_forward.1} parent=11 // pred_check_branch
        %1036 = sbr.rel (%p1034) target = $region92
      $region91: #{meta_learning_transformer_forward.1} parent=11 // pred_region
        _
      $region92: #{meta_learning_transformer_forward.1} parent=11 // pred_fallthru
        _
      // Predicated region
      $region93: #{meta_learning_transformer_forward.1} parent=11 // pred_check
        %p1037 = pneg %p558
      $region94: #{meta_learning_transformer_forward.1} parent=11 // pred_check_branch
        %1039 = sbr.rel (%p1037) target = $region96
      $region95: #{meta_learning_transformer_forward.1} parent=11 // pred_region
        _
      $region96: #{meta_learning_transformer_forward.1} parent=11 // pred_fallthru
        _
      // Predicated region
      $region97: #{meta_learning_transformer_forward.1} parent=11 // pred_check
        %p1040 = pneg %p579
      $region98: #{meta_learning_transformer_forward.1} parent=11 // pred_check_branch
        %1042 = sbr.rel (%p1040) target = $region100
      $region99: #{meta_learning_transformer_forward.1} parent=11 // pred_region
        _
      $region100: #{meta_learning_transformer_forward.1} parent=11 // pred_fallthru
        _
      // Predicated region
      $region101: #{meta_learning_transformer_forward.1} parent=11 // pred_check
        %p1043 = pneg %p600
      $region102: #{meta_learning_transformer_forward.1} parent=11 // pred_check_branch
        %1045 = sbr.rel (%p1043) target = $region104
      $region103: #{meta_learning_transformer_forward.1} parent=11 // pred_region
        _
      $region104: #{meta_learning_transformer_forward.1} parent=11 // pred_fallthru
        _
      // Predicated region
      $region105: #{meta_learning_transformer_forward.1} parent=11 // pred_check
        %p1046 = pneg %p621
      $region106: #{meta_learning_transformer_forward.1} parent=11 // pred_check_branch
        %1048 = sbr.rel (%p1046) target = $region108
      $region107: #{meta_learning_transformer_forward.1} parent=11 // pred_region
        _
      $region108: #{meta_learning_transformer_forward.1} parent=11 // pred_fallthru
        _
      // Predicated region
      $region109: #{meta_learning_transformer_forward.1} parent=11 // pred_check
        %p1049 = pneg %p642
      $region110: #{meta_learning_transformer_forward.1} parent=11 // pred_check_branch
        %1051 = sbr.rel (%p1049) target = $region112
      $region111: #{meta_learning_transformer_forward.1} parent=11 // pred_region
        _
      $region112: #{meta_learning_transformer_forward.1} parent=11 // pred_fallthru
        _
      // Predicated region
      $region113: #{meta_learning_transformer_forward.1} parent=11 // pred_check
        %p1052 = pneg %p663
      $region114: #{meta_learning_transformer_forward.1} parent=11 // pred_check_branch
        %1054 = sbr.rel (%p1052) target = $region116
      $region115: #{meta_learning_transformer_forward.1} parent=11 // pred_region
        _
      $region116: #{meta_learning_transformer_forward.1} parent=11 // pred_fallthru
        _
      // Predicated region
      $region117: #{meta_learning_transformer_forward.1} parent=11 // pred_check
        %p1055 = pneg %p684
      $region118: #{meta_learning_transformer_forward.1} parent=11 // pred_check_branch
        %1057 = sbr.rel (%p1055) target = $region120
      $region119: #{meta_learning_transformer_forward.1} parent=11 // pred_region
        _
      $region120: #{meta_learning_transformer_forward.1} parent=11 // pred_fallthru
        _
      // Predicated region
      $region121: #{meta_learning_transformer_forward.1} parent=11 // pred_check
        %p1058 = pneg %p705
      $region122: #{meta_learning_transformer_forward.1} parent=11 // pred_check_branch
        %1060 = sbr.rel (%p1058) target = $region124
      $region123: #{meta_learning_transformer_forward.1} parent=11 // pred_region
        _
      $region124: #{meta_learning_transformer_forward.1} parent=11 // pred_fallthru
        _
      // Predicated region
      $region125: #{meta_learning_transformer_forward.1} parent=11 // pred_check
        %p1061 = pneg %p726
      $region126: #{meta_learning_transformer_forward.1} parent=11 // pred_check_branch
        %1063 = sbr.rel (%p1061) target = $region128
      $region127: #{meta_learning_transformer_forward.1} parent=11 // pred_region
        _
      $region128: #{meta_learning_transformer_forward.1} parent=11 // pred_fallthru
        _
      // Predicated region
      $region129: #{meta_learning_transformer_forward.1} parent=11 // pred_check
        %p1064 = pneg %p747
      $region130: #{meta_learning_transformer_forward.1} parent=11 // pred_check_branch
        %1066 = sbr.rel (%p1064) target = $region132
      $region131: #{meta_learning_transformer_forward.1} parent=11 // pred_region
        _
      $region132: #{meta_learning_transformer_forward.1} parent=11 // pred_fallthru
        _
      // Predicated region
      $region133: #{meta_learning_transformer_forward.1} parent=11 // pred_check
        %p1067 = pneg %p768
      $region134: #{meta_learning_transformer_forward.1} parent=11 // pred_check_branch
        %1069 = sbr.rel (%p1067) target = $region136
      $region135: #{meta_learning_transformer_forward.1} parent=11 // pred_region
        _
      $region136: #{meta_learning_transformer_forward.1} parent=11 // pred_fallthru
        _
      // Predicated region
      $region137: #{meta_learning_transformer_forward.1} parent=11 // pred_check
        %p1070 = pneg %p789
      $region138: #{meta_learning_transformer_forward.1} parent=11 // pred_check_branch
        %1072 = sbr.rel (%p1070) target = $region140
      $region139: #{meta_learning_transformer_forward.1} parent=11 // pred_region
        _
      $region140: #{meta_learning_transformer_forward.1} parent=11 // pred_fallthru
        _
      // Predicated region
      $region141: #{meta_learning_transformer_forward.1} parent=11 // pred_check
        %p1073 = pneg %p810
      $region142: #{meta_learning_transformer_forward.1} parent=11 // pred_check_branch
        %1075 = sbr.rel (%p1073) target = $region144
      $region143: #{meta_learning_transformer_forward.1} parent=11 // pred_region
        _
      $region144: #{meta_learning_transformer_forward.1} parent=11 // pred_fallthru
        _
      // Predicated region
      $region145: #{meta_learning_transformer_forward.1} parent=11 // pred_check
        %p1076 = pneg %p831
      $region146: #{meta_learning_transformer_forward.1} parent=11 // pred_check_branch
        %1078 = sbr.rel (%p1076) target = $region148
      $region147: #{meta_learning_transformer_forward.1} parent=11 // pred_region
        _
      $region148: #{meta_learning_transformer_forward.1} parent=11 // pred_fallthru
        _
      // Predicated region
      $region149: #{meta_learning_transformer_forward.1} parent=11 // pred_check
        %p1079 = pneg %p852
      $region150: #{meta_learning_transformer_forward.1} parent=11 // pred_check_branch
        %1081 = sbr.rel (%p1079) target = $region152
      $region151: #{meta_learning_transformer_forward.1} parent=11 // pred_region
        _
      $region152: #{meta_learning_transformer_forward.1} parent=11 // pred_fallthru
        _
      // Predicated region
      $region153: #{meta_learning_transformer_forward.1} parent=11 // pred_check
        %p1082 = pneg %p873
      $region154: #{meta_learning_transformer_forward.1} parent=11 // pred_check_branch
        %1084 = sbr.rel (%p1082) target = $region156
      $region155: #{meta_learning_transformer_forward.1} parent=11 // pred_region
        _
      $region156: #{meta_learning_transformer_forward.1} parent=11 // pred_fallthru
        _
      // Predicated region
      $region157: #{meta_learning_transformer_forward.1} parent=11 // pred_check
        %p1085 = pneg %p894
      $region158: #{meta_learning_transformer_forward.1} parent=11 // pred_check_branch
        %1087 = sbr.rel (%p1085) target = $region160
      $region159: #{meta_learning_transformer_forward.1} parent=11 // pred_region
        _
      $region160: #{meta_learning_transformer_forward.1} parent=11 // pred_fallthru
        _
      // Predicated region
      $region161: #{meta_learning_transformer_forward.1} parent=11 // pred_check
        %p1088 = pneg %p915
      $region162: #{meta_learning_transformer_forward.1} parent=11 // pred_check_branch
        %1090 = sbr.rel (%p1088) target = $region164
      $region163: #{meta_learning_transformer_forward.1} parent=11 // pred_region
        _
      $region164: #{meta_learning_transformer_forward.1} parent=11 // pred_fallthru
        _
      // Predicated region
      $region165: #{meta_learning_transformer_forward.1} parent=11 // pred_check
        %p1091 = pneg %p936
      $region166: #{meta_learning_transformer_forward.1} parent=11 // pred_check_branch
        %1093 = sbr.rel (%p1091) target = $region168
      $region167: #{meta_learning_transformer_forward.1} parent=11 // pred_region
        _
      $region168: #{meta_learning_transformer_forward.1} parent=11 // pred_fallthru
        _
    $region12: #{meta_learning_transformer_forward.1} parent=5 // pred_fallthru
      _
    %p1094 = scmp.lt.s32.totalorder %s91, 2
    // Predicated region
    $region169: #{meta_learning_transformer_forward.1} parent=5 // pred_check
      %p1095 = pneg %p1094
    $region170: #{meta_learning_transformer_forward.1} parent=5 // pred_check_branch
      %1097 = sbr.rel (%p1095) target = $region172
    $region171: #{meta_learning_transformer_forward.1} parent=5 // pred_region
      // Predicated region
      $region173: #{meta_learning_transformer_forward.1} parent=171 // pred_check
        %p1098 = pneg %p111
      $region174: #{meta_learning_transformer_forward.1} parent=171 // pred_check_branch
        %1100 = sbr.rel (%p1098) target = $region176
      $region175: #{meta_learning_transformer_forward.1} parent=171 // pred_region
        %p1101 = scmp.lt.s32.totalorder %s91, 1
        %s1102 = scalar_select %p1101, %s91, 1
        %s1103 = smul.addr %s1102, 8
        %s1104 = scalar_lea.vmem %s1, %s1103
      $region176: #{meta_learning_transformer_forward.1} parent=171 // pred_fallthru
        _
    $region172: #{meta_learning_transformer_forward.1} parent=5 // pred_fallthru
      _
    %p1105 = scmp.le.s32.totalorder 1, %s91
    %p1106 = scmp.lt.s32.totalorder %s91, 3
    %p1107 = pnand %p1105, %p1106
    %p1108 = pneg %p1107
    // Predicated region
    $region177: #{meta_learning_transformer_forward.1} parent=5 // pred_check
      _
    $region178: #{meta_learning_transformer_forward.1} parent=5 // pred_check_branch
      %1110 = sbr.rel (%p1107) target = $region180
    $region179: #{meta_learning_transformer_forward.1} parent=5 // pred_region
      %s1111 = ssub.s32 %s91, 1
      %p1112 = scmp.lt.s32.totalorder %s96, 1
      %s1113 = scalar_select %p1112, %s96, 1
      %s1114 = smul.addr %s1113, 8
      %s1115 = scalar_lea.vmem %s1, %s1114
      %p1116 = pneg %p117
      %p1117 = pneg %p114
      %p1118 = pneg %p138
      %p1119 = pneg %p135
      %p1120 = pneg %p159
      %p1121 = pneg %p156
      %p1122 = pneg %p180
      %p1123 = pneg %p177
      %p1124 = pneg %p201
      %p1125 = pneg %p198
      %p1126 = pneg %p222
      %p1127 = pneg %p219
      %p1128 = pneg %p243
      %p1129 = pneg %p240
      %p1130 = pneg %p264
      %p1131 = pneg %p261
      %p1132 = pneg %p285
      %p1133 = pneg %p282
      %p1134 = pneg %p306
      %p1135 = pneg %p303
      %p1136 = pneg %p327
      %p1137 = pneg %p324
      %p1138 = pneg %p348
      %p1139 = pneg %p345
      %p1140 = pneg %p369
      %p1141 = pneg %p366
      %p1142 = pneg %p390
      %p1143 = pneg %p387
      %p1144 = pneg %p411
      %p1145 = pneg %p408
      %p1146 = pneg %p432
      %p1147 = pneg %p429
      %p1148 = pneg %p453
      %p1149 = pneg %p450
      %p1150 = pneg %p474
      %p1151 = pneg %p471
      %p1152 = pneg %p495
      %p1153 = pneg %p492
      %p1154 = pneg %p516
      %p1155 = pneg %p513
      %p1156 = pneg %p537
      %p1157 = pneg %p534
      %p1158 = pneg %p558
      %p1159 = pneg %p555
      %p1160 = pneg %p579
      %p1161 = pneg %p576
      %p1162 = pneg %p600
      %p1163 = pneg %p597
      %p1164 = pneg %p621
      %p1165 = pneg %p618
      %p1166 = pneg %p642
      %p1167 = pneg %p639
      %p1168 = pneg %p663
      %p1169 = pneg %p660
      %p1170 = pneg %p684
      %p1171 = pneg %p681
      %p1172 = pneg %p705
      %p1173 = pneg %p702
      %p1174 = pneg %p726
      %p1175 = pneg %p723
      %p1176 = pneg %p747
      %p1177 = pneg %p744
      %p1178 = pneg %p768
      %p1179 = pneg %p765
      %p1180 = pneg %p789
      %p1181 = pneg %p786
      %p1182 = pneg %p810
      %p1183 = pneg %p807
      %p1184 = pneg %p831
      %p1185 = pneg %p828
      %p1186 = pneg %p852
      %p1187 = pneg %p849
      %p1188 = pneg %p873
      %p1189 = pneg %p870
      %p1190 = pneg %p894
      %p1191 = pneg %p891
      %p1192 = pneg %p915
      %p1193 = pneg %p912
      %p1194 = pneg %p936
      %p1195 = pneg %p933
      %p1196 = pneg %p962
      %p1197 = pneg %p959
      %p1198 = scmp.lt.s32.totalorder %s96, 1
      %s1199 = scalar_select %p1198, %s96, 1
      %s1200 = scalar_lea.vmem %s81, %s1199
      %p1201 = scmp.lt.s32.totalorder %s96, 1
      %s1202 = scalar_select %p1201, %s96, 1
      %s1203 = smul.addr %s1202, 8
      %s1204 = scalar_lea.vmem %s1, %s1203
      %p1205 = scmp.lt.s32.totalorder %s96, 1
      %s1206 = scalar_select %p1205, %s96, 1
      %s1207 = scalar_lea.vmem %s81, %s1206
      %v1209 = vld [vmem:[%s1204] sm:$0xff]
      %v1210 = vld [vmem:[%s9] sm:$0xff]
      %v1211 = vld [vmem:[%s9 + $0x8] sm:$0xf]
      %v1212 = vld [vmem:[%s9 + $0xc] sm:$0xff]
      %v1213 = vld [vmem:[%s9 + $0x14] sm:$0xf]
      %v1214 = vld [vmem:[%s9 + $0x18] sm:$0xff]
      %v1215 = vld [vmem:[%s9 + $0x20] sm:$0xf]
      %v1216 = vld [vmem:[%s9 + $0x24] sm:$0xff]
      %v1217 = vld [vmem:[%s9 + $0x2c] sm:$0xf]
      %v1218 = vld [vmem:[%s9 + $0x30] sm:$0x33]
      %v1219 = vld [vmem:[%s9 + $0x38] sm:$0x3]
      %v1220 = vpack.c.bf16 %v1209, %v1209
      %v1221 = vld [vmem:[%s11] sm:$0x7]
      %v1223 = vlaneseq
      %v1224 = vshrl.u32 %v1223, 7
      %v1225 = vsub.s32 0, %v1224
      %v1226 = vrot.slane %v1221, %v1225
      %v1227 = vlaneseq
      %v1228 = vshrl.u32 %v1227, 7
      %v1229 = vsub.s32 1, %v1228
      %v1230 = vrot.slane %v1221, %v1229
      %v1231 = vlaneseq
      %v1232 = vshrl.u32 %v1231, 7
      %v1233 = vsub.s32 2, %v1232
      %v1234 = vrot.slane %v1221, %v1233
      %v1248 = vunpack.c.l.b16 %v1210
      %v1249 = vunpack.c.h.b16 %v1210
      %v1250 = vunpack.c.l.b16 %v1211
      %v1251 = vunpack.c.l.b16 %v1212
      %v1252 = vunpack.c.h.b16 %v1212
      %v1253 = vunpack.c.l.b16 %v1213
      %v1254 = vunpack.c.l.b16 %v1214
      %v1255 = vunpack.c.h.b16 %v1214
      %v1256 = vunpack.c.l.b16 %v1215
      %v1257 = vunpack.c.l.b16 %v1216
      %v1258 = vunpack.c.h.b16 %v1216
      %v1259 = vunpack.c.l.b16 %v1217
      %v1260 = vunpack.c.l.b16 %v1218
      %v1261 = vunpack.c.h.b16 %v1218
      %v1262 = vunpack.c.l.b16 %v1219
      %v1263 = vpack.c.b16 %v1251, %v1248
      %v1264 = vpack.c.b16 %v1252, %v1249
      %v1265 = vpack.c.b16 %v1253, %v1250
      %v1266 = vpack.c.b16 %v1257, %v1254
      %v1267 = vpack.c.b16 %v1258, %v1255
      %v1268 = vpack.c.b16 %v1259, %v1256
      %v1269 = vpack.c.b16 %v1260, %v1260
      %v1270 = vpack.c.b16 %v1261, %v1261
      %v1271 = vpack.c.b16 %v1262, %v1262
      %vm1278 = vcmask 285696
      %v1280 = vsel %vm1278, %v1220, 0
      %vm1282 = vcmask 1040384
      %vm1283 = vcmask 1041408
      %v1284 = vsel %vm1282, 4294967295, 65535
      %v1285 = vsel %vm1283, %v1284, 0
      %v1287 = vand.u32 %v1269, %v1285
      %v1290 = vand.u32 %v1270, %v1285
      %v1293 = vand.u32 %v1271, %v1285
      %1295 = vmatprep.subr.bf16.mxu0 0
      %1296 = vmatpush1.bf16.msra.mxu0 0
      %1297 = vmatprep.subr.bf16.mxu0 0
      %1298 = vmatpush1.bf16.msra.mxu0 0
      %1299 = vmatprep.subr.bf16.mxu0 0
      %1300 = vmatpush1.bf16.msra.mxu0 0
      %1301 = vmatprep.subr.bf16.mxu0 0
      %1302 = vmatpush1.bf16.msra.mxu0 0
      %1303 = vmatprep.subr.bf16.mxu0 0
      %1304 = vmatpush1.bf16.msra.mxu0 0
      %1305 = vmatprep.subr.bf16.mxu0 %v1290
      %1306 = vmatpush1.bf16.msra.mxu0 %v1287
      %1307 = vmatprep.subr.bf16.mxu0 %v1267
      %1308 = vmatpush1.bf16.msra.mxu0 %v1266
      %1309 = vmatprep.subr.bf16.mxu0 %v1264
      %1310 = vmatpush1.bf16.msra.mxu0 %v1263
      %1311 = vmatprep.subr.bf16.mxu0 0
      %1312 = vmatpush2.bf16.msra.mxu0 0
      %1313 = vmatprep.subr.bf16.mxu0 0
      %1314 = vmatpush2.bf16.msra.mxu0 0
      %1315 = vmatprep.subr.bf16.mxu0 0
      %1316 = vmatpush2.bf16.msra.mxu0 0
      %1317 = vmatprep.subr.bf16.mxu0 0
      %1318 = vmatpush2.bf16.msra.mxu0 0
      %1319 = vmatprep.subr.bf16.mxu0 0
      %1320 = vmatpush2.bf16.msra.mxu0 0
      %1321 = vmatprep.subr.bf16.mxu0 0
      %1322 = vmatpush2.bf16.msra.mxu0 0
      %1323 = vmatprep.subr.bf16.mxu0 0
      %1324 = vmatpush2.bf16.msra.mxu0 0
      %1325 = vmatprep.subr.bf16.mxu0 0
      %1326 = vmatpush2.bf16.msra.mxu0 0
      %1327 = vmatprep.mubr.bf16.mxu0 0
      %1328 = vmatmul.mubr.bf16.gmra.mxu0 %v1280
      %v1329 = vpop.f32.mrf.mxu0
      %v1330 = vadd.f32 %v1226, %v1329
      %v1331 = vpop.f32.mrf.mxu0
      %v1332 = vadd.f32 %v1230, %v1331
      %v1333 = vpop.f32.mrf.mxu0
      %v1334 = vpop.f32.mrf.mxu0
      %1335 = vdwg.mxu0
      %1336 = vmatprep.subr.bf16.mxu0 0
      %1337 = vmatpush1.bf16.msra.mxu0 0
      %1338 = vmatprep.subr.bf16.mxu0 0
      %1339 = vmatpush1.bf16.msra.mxu0 0
      %1340 = vmatprep.subr.bf16.mxu0 0
      %1341 = vmatpush1.bf16.msra.mxu0 0
      %1342 = vmatprep.subr.bf16.mxu0 0
      %1343 = vmatpush1.bf16.msra.mxu0 0
      %1344 = vmatprep.subr.bf16.mxu0 0
      %1345 = vmatpush1.bf16.msra.mxu0 0
      %1346 = vmatprep.subr.bf16.mxu0 0
      %1347 = vmatpush1.bf16.msra.mxu0 %v1293
      %1348 = vmatprep.subr.bf16.mxu0 0
      %1349 = vmatpush1.bf16.msra.mxu0 %v1268
      %1350 = vmatprep.subr.bf16.mxu0 0
      %1351 = vmatpush1.bf16.msra.mxu0 %v1265
      %1352 = vmatprep.subr.bf16.mxu0 0
      %1353 = vmatpush2.bf16.msra.mxu0 0
      %1354 = vmatprep.subr.bf16.mxu0 0
      %1355 = vmatpush2.bf16.msra.mxu0 0
      %1356 = vmatprep.subr.bf16.mxu0 0
      %1357 = vmatpush2.bf16.msra.mxu0 0
      %1358 = vmatprep.subr.bf16.mxu0 0
      %1359 = vmatpush2.bf16.msra.mxu0 0
      %1360 = vmatprep.subr.bf16.mxu0 0
      %1361 = vmatpush2.bf16.msra.mxu0 0
      %1362 = vmatprep.subr.bf16.mxu0 0
      %1363 = vmatpush2.bf16.msra.mxu0 0
      %1364 = vmatprep.subr.bf16.mxu0 0
      %1365 = vmatpush2.bf16.msra.mxu0 0
      %1366 = vmatprep.subr.bf16.mxu0 0
      %1367 = vmatpush2.bf16.msra.mxu0 0
      %1368 = vmatprep.mubr.bf16.mxu0 0
      %1369 = vmatmul.mubr.bf16.gmra.mxu0 %v1280
      %v1370 = vpop.f32.mrf.mxu0
      %v1371 = vadd.f32 %v1234, %v1370
      %v1372 = vpop.f32.mrf.mxu0
      %v1373 = vpop.f32.mrf.mxu0
      %v1374 = vpop.f32.mrf.mxu0
      %1375 = vdwg.mxu0
      %v1376 = vld [vmem:[%s13] sm:$0xf]
      %v1377 = vld [vmem:[%s13 + $0x4] sm:$0xf]
      %v1378 = vld [vmem:[%s13 + $0x8] sm:$0xf]
      %v1379 = vld [vmem:[%s13 + $0xc] sm:$0xf]
      %v1380 = vld [vmem:[%s13 + $0x10] sm:$0xf]
      %v1381 = vld [vmem:[%s13 + $0x14] sm:$0xf]
      %v1382 = vld [vmem:[%s13 + $0x18] sm:$0xf]
      %v1383 = vld [vmem:[%s13 + $0x1c] sm:$0xf]
      %v1384 = vld [vmem:[%s13 + $0x20] sm:$0xf]
      %v1385 = vld [vmem:[%s13 + $0x24] sm:$0xf]
      %v1386 = vld [vmem:[%s13 + $0x28] sm:$0xf]
      %v1387 = vld [vmem:[%s13 + $0x2c] sm:$0xf]
      %v1388 = vld [vmem:[%s13 + $0x30] sm:$0xf]
      %v1389 = vld [vmem:[%s13 + $0x34] sm:$0xf]
      %v1390 = vld [vmem:[%s13 + $0x38] sm:$0xf]
      %v1391 = vld [vmem:[%s13 + $0x3c] sm:$0xf]
      %v1392 = vld [vmem:[%s13 + $0x40] sm:$0xf]
      %v1393 = vld [vmem:[%s13 + $0x44] sm:$0xf]
      %v1394 = vld [vmem:[%s13 + $0x48] sm:$0xf]
      %v1395 = vld [vmem:[%s13 + $0x4c] sm:$0xf]
      %v1396 = vld [vmem:[%s13 + $0x50] sm:$0xf]
      %v1397 = vld [vmem:[%s13 + $0x54] sm:$0xf]
      %v1398 = vld [vmem:[%s13 + $0x58] sm:$0xf]
      %v1399 = vld [vmem:[%s13 + $0x5c] sm:$0xf]
      %v1400 = vld [vmem:[%s13 + $0x60] sm:$0xf]
      %v1401 = vld [vmem:[%s13 + $0x64] sm:$0xf]
      %v1402 = vld [vmem:[%s13 + $0x68] sm:$0xf]
      %v1403 = vld [vmem:[%s13 + $0x6c] sm:$0xf]
      %v1404 = vld [vmem:[%s13 + $0x70] sm:$0xf]
      %v1405 = vld [vmem:[%s13 + $0x74] sm:$0xf]
      %v1406 = vld [vmem:[%s13 + $0x78] sm:$0xf]
      %v1407 = vld [vmem:[%s13 + $0x7c] sm:$0xf]
      %v1408 = vld [vmem:[%s13 + $0x80] sm:$0xf]
      %v1409 = vld [vmem:[%s13 + $0x84] sm:$0xf]
      %v1410 = vld [vmem:[%s13 + $0x88] sm:$0xf]
      %v1411 = vld [vmem:[%s13 + $0x8c] sm:$0xf]
      %v1412 = vld [vmem:[%s13 + $0x90] sm:$0xf]
      %v1413 = vld [vmem:[%s13 + $0x94] sm:$0xf]
      %v1414 = vld [vmem:[%s13 + $0x98] sm:$0xf]
      %v1415 = vld [vmem:[%s13 + $0x9c] sm:$0xf]
      %v1416 = vld [vmem:[%s13 + $0xa0] sm:$0xf]
      %v1417 = vld [vmem:[%s13 + $0xa4] sm:$0xf]
      %v1418 = vld [vmem:[%s13 + $0xa8] sm:$0xf]
      %v1419 = vld [vmem:[%s13 + $0xac] sm:$0xf]
      %v1420 = vld [vmem:[%s13 + $0xb0] sm:$0xf]
      %v1421 = vld [vmem:[%s13 + $0xb4] sm:$0xf]
      %v1422 = vld [vmem:[%s13 + $0xb8] sm:$0xf]
      %v1423 = vld [vmem:[%s13 + $0xbc] sm:$0xf]
      %v1424 = vpack.c.bf16 %v1330, %v1330
      %v1425 = vpack.c.bf16 %v1332, %v1332
      %v1426 = vpack.c.bf16 %v1371, %v1371
      %v1427 = vld [vmem:[%s15] sm:$0x1]
      %v1429 = vlaneseq
      %v1430 = vshrl.u32 %v1429, 7
      %v1431 = vsub.s32 0, %v1430
      %v1432 = vrot.slane %v1427, %v1431
      %v1482 = vunpack.c.l.b16 %v1376
      %v1483 = vunpack.c.l.b16 %v1377
      %v1484 = vunpack.c.l.b16 %v1378
      %v1485 = vunpack.c.l.b16 %v1379
      %v1486 = vunpack.c.l.b16 %v1380
      %v1487 = vunpack.c.l.b16 %v1381
      %v1488 = vunpack.c.l.b16 %v1382
      %v1489 = vunpack.c.l.b16 %v1383
      %v1490 = vunpack.c.l.b16 %v1384
      %v1491 = vunpack.c.l.b16 %v1385
      %v1492 = vunpack.c.l.b16 %v1386
      %v1493 = vunpack.c.l.b16 %v1387
      %v1494 = vunpack.c.l.b16 %v1388
      %v1495 = vunpack.c.l.b16 %v1389
      %v1496 = vunpack.c.l.b16 %v1390
      %v1497 = vunpack.c.l.b16 %v1391
      %v1498 = vunpack.c.l.b16 %v1392
      %v1499 = vunpack.c.l.b16 %v1393
      %v1500 = vunpack.c.l.b16 %v1394
      %v1501 = vunpack.c.l.b16 %v1395
      %v1502 = vunpack.c.l.b16 %v1396
      %v1503 = vunpack.c.l.b16 %v1397
      %v1504 = vunpack.c.l.b16 %v1398
      %v1505 = vunpack.c.l.b16 %v1399
      %v1506 = vunpack.c.l.b16 %v1400
      %v1507 = vunpack.c.l.b16 %v1401
      %v1508 = vunpack.c.l.b16 %v1402
      %v1509 = vunpack.c.l.b16 %v1403
      %v1510 = vunpack.c.l.b16 %v1404
      %v1511 = vunpack.c.l.b16 %v1405
      %v1512 = vunpack.c.l.b16 %v1406
      %v1513 = vunpack.c.l.b16 %v1407
      %v1514 = vunpack.c.l.b16 %v1408
      %v1515 = vunpack.c.l.b16 %v1409
      %v1516 = vunpack.c.l.b16 %v1410
      %v1517 = vunpack.c.l.b16 %v1411
      %v1518 = vunpack.c.l.b16 %v1412
      %v1519 = vunpack.c.l.b16 %v1413
      %v1520 = vunpack.c.l.b16 %v1414
      %v1521 = vunpack.c.l.b16 %v1415
      %v1522 = vunpack.c.l.b16 %v1416
      %v1523 = vunpack.c.l.b16 %v1417
      %v1524 = vunpack.c.l.b16 %v1418
      %v1525 = vunpack.c.l.b16 %v1419
      %v1526 = vunpack.c.l.b16 %v1420
      %v1527 = vunpack.c.l.b16 %v1421
      %v1528 = vunpack.c.l.b16 %v1422
      %v1529 = vunpack.c.l.b16 %v1423
      %v1530 = vpack.c.b16 %v1483, %v1482
      %v1531 = vpack.c.b16 %v1485, %v1484
      %v1532 = vpack.c.b16 %v1487, %v1486
      %v1533 = vpack.c.b16 %v1489, %v1488
      %v1534 = vpack.c.b16 %v1491, %v1490
      %v1535 = vpack.c.b16 %v1493, %v1492
      %v1536 = vpack.c.b16 %v1495, %v1494
      %v1537 = vpack.c.b16 %v1497, %v1496
      %v1538 = vpack.c.b16 %v1499, %v1498
      %v1539 = vpack.c.b16 %v1501, %v1500
      %v1540 = vpack.c.b16 %v1503, %v1502
      %v1541 = vpack.c.b16 %v1505, %v1504
      %v1542 = vpack.c.b16 %v1507, %v1506
      %v1543 = vpack.c.b16 %v1509, %v1508
      %v1544 = vpack.c.b16 %v1511, %v1510
      %v1545 = vpack.c.b16 %v1513, %v1512
      %v1546 = vpack.c.b16 %v1515, %v1514
      %v1547 = vpack.c.b16 %v1517, %v1516
      %v1548 = vpack.c.b16 %v1519, %v1518
      %v1549 = vpack.c.b16 %v1521, %v1520
      %v1550 = vpack.c.b16 %v1523, %v1522
      %v1551 = vpack.c.b16 %v1525, %v1524
      %v1552 = vpack.c.b16 %v1527, %v1526
      %v1553 = vpack.c.b16 %v1529, %v1528
      %1578 = vmatprep.subr.bf16.mxu0 0
      %1579 = vmatpush1.bf16.msra.mxu0 %v1537
      %1580 = vmatprep.subr.bf16.mxu0 0
      %1581 = vmatpush1.bf16.msra.mxu0 %v1536
      %1582 = vmatprep.subr.bf16.mxu0 0
      %1583 = vmatpush1.bf16.msra.mxu0 %v1535
      %1584 = vmatprep.subr.bf16.mxu0 0
      %1585 = vmatpush1.bf16.msra.mxu0 %v1534
      %1586 = vmatprep.subr.bf16.mxu0 0
      %1587 = vmatpush1.bf16.msra.mxu0 %v1533
      %1588 = vmatprep.subr.bf16.mxu0 0
      %1589 = vmatpush1.bf16.msra.mxu0 %v1532
      %1590 = vmatprep.subr.bf16.mxu0 0
      %1591 = vmatpush1.bf16.msra.mxu0 %v1531
      %1592 = vmatprep.subr.bf16.mxu0 0
      %1593 = vmatpush1.bf16.msra.mxu0 %v1530
      %1594 = vmatprep.subr.bf16.mxu0 0
      %1595 = vmatpush2.bf16.msra.mxu0 %v1545
      %1596 = vmatprep.subr.bf16.mxu0 0
      %1597 = vmatpush2.bf16.msra.mxu0 %v1544
      %1598 = vmatprep.subr.bf16.mxu0 0
      %1599 = vmatpush2.bf16.msra.mxu0 %v1543
      %1600 = vmatprep.subr.bf16.mxu0 0
      %1601 = vmatpush2.bf16.msra.mxu0 %v1542
      %1602 = vmatprep.subr.bf16.mxu0 0
      %1603 = vmatpush2.bf16.msra.mxu0 %v1541
      %1604 = vmatprep.subr.bf16.mxu0 0
      %1605 = vmatpush2.bf16.msra.mxu0 %v1540
      %1606 = vmatprep.subr.bf16.mxu0 0
      %1607 = vmatpush2.bf16.msra.mxu0 %v1539
      %1608 = vmatprep.subr.bf16.mxu0 0
      %1609 = vmatpush2.bf16.msra.mxu0 %v1538
      %1610 = vmatprep.mubr.bf16.mxu0 %v1425
      %1611 = vmatmul.mubr.bf16.gmra.mxu0 %v1424
      %v1612 = vpop.f32.mrf.mxu0
      %v1613 = vadd.f32 %v1432, %v1612
      %v1614 = vpop.f32.mrf.mxu0
      %v1615 = vpop.f32.mrf.mxu0
      %v1616 = vpop.f32.mrf.mxu0
      %1617 = vdwg.mxu0
      %1618 = vmatprep.subr.bf16.mxu0 0
      %1619 = vmatpush1.bf16.msra.mxu0 %v1553
      %1620 = vmatprep.subr.bf16.mxu0 0
      %1621 = vmatpush1.bf16.msra.mxu0 %v1552
      %1622 = vmatprep.subr.bf16.mxu0 0
      %1623 = vmatpush1.bf16.msra.mxu0 %v1551
      %1624 = vmatprep.subr.bf16.mxu0 0
      %1625 = vmatpush1.bf16.msra.mxu0 %v1550
      %1626 = vmatprep.subr.bf16.mxu0 0
      %1627 = vmatpush1.bf16.msra.mxu0 %v1549
      %1628 = vmatprep.subr.bf16.mxu0 0
      %1629 = vmatpush1.bf16.msra.mxu0 %v1548
      %1630 = vmatprep.subr.bf16.mxu0 0
      %1631 = vmatpush1.bf16.msra.mxu0 %v1547
      %1632 = vmatprep.subr.bf16.mxu0 0
      %1633 = vmatpush1.bf16.msra.mxu0 %v1546
      %1634 = vmatprep.subr.bf16.mxu0 0
      %1635 = vmatpush2.bf16.msra.mxu0 0
      %1636 = vmatprep.subr.bf16.mxu0 0
      %1637 = vmatpush2.bf16.msra.mxu0 0
      %1638 = vmatprep.subr.bf16.mxu0 0
      %1639 = vmatpush2.bf16.msra.mxu0 0
      %1640 = vmatprep.subr.bf16.mxu0 0
      %1641 = vmatpush2.bf16.msra.mxu0 0
      %1642 = vmatprep.subr.bf16.mxu0 0
      %1643 = vmatpush2.bf16.msra.mxu0 0
      %1644 = vmatprep.subr.bf16.mxu0 0
      %1645 = vmatpush2.bf16.msra.mxu0 0
      %1646 = vmatprep.subr.bf16.mxu0 0
      %1647 = vmatpush2.bf16.msra.mxu0 0
      %1648 = vmatprep.subr.bf16.mxu0 0
      %1649 = vmatpush2.bf16.msra.mxu0 0
      %1650 = vmatprep.mubr.bf16.mxu0 0
      %1651 = vmatmul.mubr.bf16.gmra.mxu0 %v1426
      %v1652 = vpop.f32.mrf.mxu0
      %v1653 = vadd.f32 %v1613, %v1652
      %v1654 = vpop.f32.mrf.mxu0
      %v1655 = vpop.f32.mrf.mxu0
      %v1656 = vpop.f32.mrf.mxu0
      %1657 = vdwg.mxu0
      %v1658 = vld [vmem:[%s17] sm:$0xff]
      %v1659 = vld [vmem:[%s17 + $0x8] sm:$0xff]
      %v1660 = vld [vmem:[%s17 + $0x10] sm:$0xff]
      %v1661 = vld [vmem:[%s17 + $0x18] sm:$0xff]
      %v1662 = vld [vmem:[%s17 + $0x20] sm:$0xff]
      %v1663 = vld [vmem:[%s17 + $0x28] sm:$0xff]
      %v1664 = vld [vmem:[%s17 + $0x30] sm:$0xff]
      %v1665 = vld [vmem:[%s17 + $0x38] sm:$0xff]
      %v1666 = vpack.c.bf16 %v1653, %v1653
      %v1667 = vld [vmem:[%s19] sm:$0x3]
      %v1669 = vlaneseq
      %v1670 = vshrl.u32 %v1669, 7
      %v1671 = vsub.s32 0, %v1670
      %v1672 = vrot.slane %v1667, %v1671
      %v1673 = vlaneseq
      %v1674 = vshrl.u32 %v1673, 7
      %v1675 = vsub.s32 1, %v1674
      %v1676 = vrot.slane %v1667, %v1675
      %v1687 = vunpack.c.l.b16 %v1658
      %v1688 = vunpack.c.h.b16 %v1658
      %v1689 = vunpack.c.l.b16 %v1659
      %v1690 = vunpack.c.h.b16 %v1659
      %v1691 = vunpack.c.l.b16 %v1660
      %v1692 = vunpack.c.h.b16 %v1660
      %v1693 = vunpack.c.l.b16 %v1661
      %v1694 = vunpack.c.h.b16 %v1661
      %v1695 = vunpack.c.l.b16 %v1662
      %v1696 = vunpack.c.h.b16 %v1662
      %v1697 = vunpack.c.l.b16 %v1663
      %v1698 = vunpack.c.h.b16 %v1663
      %v1699 = vunpack.c.l.b16 %v1664
      %v1700 = vunpack.c.h.b16 %v1664
      %v1701 = vunpack.c.l.b16 %v1665
      %v1702 = vunpack.c.h.b16 %v1665
      %v1703 = vpack.c.b16 %v1689, %v1687
      %v1704 = vpack.c.b16 %v1690, %v1688
      %v1705 = vpack.c.b16 %v1693, %v1691
      %v1706 = vpack.c.b16 %v1694, %v1692
      %v1707 = vpack.c.b16 %v1697, %v1695
      %v1708 = vpack.c.b16 %v1698, %v1696
      %v1709 = vpack.c.b16 %v1701, %v1699
      %v1710 = vpack.c.b16 %v1702, %v1700
      %vm1719 = vcmask 523264
      %v1721 = vsel %vm1719, %v1666, 0
      %1723 = vmatprep.subr.bf16.mxu0 0
      %1724 = vmatpush1.bf16.msra.mxu0 0
      %1725 = vmatprep.subr.bf16.mxu0 0
      %1726 = vmatpush1.bf16.msra.mxu0 0
      %1727 = vmatprep.subr.bf16.mxu0 0
      %1728 = vmatpush1.bf16.msra.mxu0 0
      %1729 = vmatprep.subr.bf16.mxu0 0
      %1730 = vmatpush1.bf16.msra.mxu0 0
      %1731 = vmatprep.subr.bf16.mxu0 %v1710
      %1732 = vmatpush1.bf16.msra.mxu0 %v1709
      %1733 = vmatprep.subr.bf16.mxu0 %v1708
      %1734 = vmatpush1.bf16.msra.mxu0 %v1707
      %1735 = vmatprep.subr.bf16.mxu0 %v1706
      %1736 = vmatpush1.bf16.msra.mxu0 %v1705
      %1737 = vmatprep.subr.bf16.mxu0 %v1704
      %1738 = vmatpush1.bf16.msra.mxu0 %v1703
      %1739 = vmatprep.subr.bf16.mxu0 0
      %1740 = vmatpush2.bf16.msra.mxu0 0
      %1741 = vmatprep.subr.bf16.mxu0 0
      %1742 = vmatpush2.bf16.msra.mxu0 0
      %1743 = vmatprep.subr.bf16.mxu0 0
      %1744 = vmatpush2.bf16.msra.mxu0 0
      %1745 = vmatprep.subr.bf16.mxu0 0
      %1746 = vmatpush2.bf16.msra.mxu0 0
      %1747 = vmatprep.subr.bf16.mxu0 0
      %1748 = vmatpush2.bf16.msra.mxu0 0
      %1749 = vmatprep.subr.bf16.mxu0 0
      %1750 = vmatpush2.bf16.msra.mxu0 0
      %1751 = vmatprep.subr.bf16.mxu0 0
      %1752 = vmatpush2.bf16.msra.mxu0 0
      %1753 = vmatprep.subr.bf16.mxu0 0
      %1754 = vmatpush2.bf16.msra.mxu0 0
      %1755 = vmatprep.mubr.bf16.mxu0 0
      %1756 = vmatmul.mubr.bf16.gmra.mxu0 %v1721
      %v1757 = vpop.f32.mrf.mxu0
      %v1758 = vadd.f32 %v1672, %v1757
      %v1759 = vpop.f32.mrf.mxu0
      %v1760 = vadd.f32 %v1676, %v1759
      %v1761 = vpop.f32.mrf.mxu0
      %v1762 = vpop.f32.mrf.mxu0
      %1763 = vdwg.mxu0
      %v1764 = vpack.c.bf16 %v1758, %v1758
      %1766 = vrot.lane.b32.xlu0 %v1764, 64
      %v1767 = vpop.permute.xlu0 %1766
      %v1769 = vsel %vm1719, %v1764, 0
      %v1772 = vsel %vm1719, %v1767, 0
      %1774 = vmatprep.subr.bf16.mxu0 0
      %1775 = vmatpush1.bf16.xpose.msra.mxu0 0
      %1776 = vmatprep.subr.bf16.mxu0 0
      %1777 = vmatpush1.bf16.xpose.msra.mxu0 0
      %1778 = vmatprep.subr.bf16.mxu0 0
      %1779 = vmatpush1.bf16.xpose.msra.mxu0 0
      %1780 = vmatprep.subr.bf16.mxu0 0
      %1781 = vmatpush1.bf16.xpose.msra.mxu0 0
      %1782 = vmatprep.subr.bf16.mxu0 0
      %1783 = vmatpush1.bf16.xpose.msra.mxu0 0
      %1784 = vmatprep.subr.bf16.mxu0 0
      %1785 = vmatpush1.bf16.xpose.msra.mxu0 0
      %1786 = vmatprep.subr.bf16.mxu0 0
      %1787 = vmatpush1.bf16.xpose.msra.mxu0 0
      %1788 = vmatprep.subr.bf16.mxu0 0
      %1789 = vmatpush1.bf16.xpose.msra.mxu0 %v1772
      %1790 = vmatprep.subr.bf16.mxu0 0
      %1791 = vmatpush2.bf16.xpose.msra.mxu0 0
      %1792 = vmatprep.subr.bf16.mxu0 0
      %1793 = vmatpush2.bf16.xpose.msra.mxu0 0
      %1794 = vmatprep.subr.bf16.mxu0 0
      %1795 = vmatpush2.bf16.xpose.msra.mxu0 0
      %1796 = vmatprep.subr.bf16.mxu0 0
      %1797 = vmatpush2.bf16.xpose.msra.mxu0 0
      %1798 = vmatprep.subr.bf16.mxu0 0
      %1799 = vmatpush2.bf16.xpose.msra.mxu0 0
      %1800 = vmatprep.subr.bf16.mxu0 0
      %1801 = vmatpush2.bf16.xpose.msra.mxu0 0
      %1802 = vmatprep.subr.bf16.mxu0 0
      %1803 = vmatpush2.bf16.xpose.msra.mxu0 0
      %1804 = vmatprep.subr.bf16.mxu0 0
      %1805 = vmatpush2.bf16.xpose.msra.mxu0 0
      %1806 = vmatprep.mubr.bf16.mxu0 0
      %1807 = vmatmul.mubr.bf16.gmra.mxu0 %v1769
      %v1808 = vpop.f32.mrf.mxu0
      %v1809 = vadd.f32 0.0, %v1808
      %v1810 = vpop.f32.mrf.mxu0
      %v1811 = vpop.f32.mrf.mxu0
      %v1812 = vpop.f32.mrf.mxu0
      %1813 = vdwg.mxu0
      %v1814 = vmul.f32 %v1809, 0.125
      %vm1815 = vcmask 64512
      %v1816 = vsel %vm1815, %v1814, -inf
      %1817 = vmax.xlane.f32.xlu0 %v1816
      %v1818 = vpop.xlane.xlu0 %1817
      %v1819 = vsub.f32 %v1814, %v1818
      %v1820 = vmul.f32 %v1819, 1.442695
      %v1821 = vpow.pop %v1820
      %v1822 = vsel %vm1815, %v1821, 0.0
      %1823 = vadd.xlane.f32.xlu0 %v1822
      %v1824 = vpop.xlane.xlu0 %1823
      %v1825 = vrcp.pop %v1824
      %v1826 = vmul.f32 %v1821, %v1825
      %v1827 = vpack.c.bf16 %v1826, %v1826
      %v1828 = vpack.c.bf16 %v1760, %v1760
      %v1830 = vsel %vm1815, %v1827, 0
      %vm1832 = vcmask 1043456
      %v1834 = vsel %vm1832, %v1828, 0
      %1836 = vmatprep.subr.bf16.mxu0 0
      %1837 = vmatpush1.bf16.msra.mxu0 0
      %1838 = vmatprep.subr.bf16.mxu0 0
      %1839 = vmatpush1.bf16.msra.mxu0 0
      %1840 = vmatprep.subr.bf16.mxu0 0
      %1841 = vmatpush1.bf16.msra.mxu0 0
      %1842 = vmatprep.subr.bf16.mxu0 0
      %1843 = vmatpush1.bf16.msra.mxu0 0
      %1844 = vmatprep.subr.bf16.mxu0 0
      %1845 = vmatpush1.bf16.msra.mxu0 0
      %1846 = vmatprep.subr.bf16.mxu0 0
      %1847 = vmatpush1.bf16.msra.mxu0 0
      %1848 = vmatprep.subr.bf16.mxu0 0
      %1849 = vmatpush1.bf16.msra.mxu0 0
      %1850 = vmatprep.subr.bf16.mxu0 0
      %1851 = vmatpush1.bf16.msra.mxu0 %v1834
      %1852 = vmatprep.subr.bf16.mxu0 0
      %1853 = vmatpush2.bf16.msra.mxu0 0
      %1854 = vmatprep.subr.bf16.mxu0 0
      %1855 = vmatpush2.bf16.msra.mxu0 0
      %1856 = vmatprep.subr.bf16.mxu0 0
      %1857 = vmatpush2.bf16.msra.mxu0 0
      %1858 = vmatprep.subr.bf16.mxu0 0
      %1859 = vmatpush2.bf16.msra.mxu0 0
      %1860 = vmatprep.subr.bf16.mxu0 0
      %1861 = vmatpush2.bf16.msra.mxu0 0
      %1862 = vmatprep.subr.bf16.mxu0 0
      %1863 = vmatpush2.bf16.msra.mxu0 0
      %1864 = vmatprep.subr.bf16.mxu0 0
      %1865 = vmatpush2.bf16.msra.mxu0 0
      %1866 = vmatprep.subr.bf16.mxu0 0
      %1867 = vmatpush2.bf16.msra.mxu0 0
      %1868 = vmatprep.mubr.bf16.mxu0 0
      %1869 = vmatmul.mubr.bf16.gmra.mxu0 %v1830
      %v1870 = vpop.f32.mrf.mxu0
      %v1871 = vadd.f32 0.0, %v1870
      %v1872 = vpop.f32.mrf.mxu0
      %v1873 = vpop.f32.mrf.mxu0
      %v1874 = vpop.f32.mrf.mxu0
      %1875 = vdwg.mxu0
      %v1876 = vld [vmem:[%s21] sm:$0xf]
      %v1877 = vld [vmem:[%s21 + $0x4] sm:$0xf]
      %v1878 = vld [vmem:[%s21 + $0x8] sm:$0xf]
      %v1879 = vld [vmem:[%s21 + $0xc] sm:$0xf]
      %v1880 = vld [vmem:[%s21 + $0x10] sm:$0xf]
      %v1881 = vld [vmem:[%s21 + $0x14] sm:$0xf]
      %v1882 = vld [vmem:[%s21 + $0x18] sm:$0xf]
      %v1883 = vld [vmem:[%s21 + $0x1c] sm:$0xf]
      %v1884 = vpack.c.bf16 %v1871, %v1871
      %v1885 = vld [vmem:[%s23] sm:$0x1]
      %v1887 = vlaneseq
      %v1888 = vshrl.u32 %v1887, 7
      %v1889 = vsub.s32 0, %v1888
      %v1890 = vrot.slane %v1885, %v1889
      %v1900 = vunpack.c.l.b16 %v1876
      %v1901 = vunpack.c.l.b16 %v1877
      %v1902 = vunpack.c.l.b16 %v1878
      %v1903 = vunpack.c.l.b16 %v1879
      %v1904 = vunpack.c.l.b16 %v1880
      %v1905 = vunpack.c.l.b16 %v1881
      %v1906 = vunpack.c.l.b16 %v1882
      %v1907 = vunpack.c.l.b16 %v1883
      %v1908 = vpack.c.b16 %v1901, %v1900
      %v1909 = vpack.c.b16 %v1903, %v1902
      %v1910 = vpack.c.b16 %v1905, %v1904
      %v1911 = vpack.c.b16 %v1907, %v1906
      %v1917 = vsel %vm1719, %v1884, 0
      %1919 = vmatprep.subr.bf16.mxu0 0
      %1920 = vmatpush1.bf16.msra.mxu0 0
      %1921 = vmatprep.subr.bf16.mxu0 0
      %1922 = vmatpush1.bf16.msra.mxu0 0
      %1923 = vmatprep.subr.bf16.mxu0 0
      %1924 = vmatpush1.bf16.msra.mxu0 0
      %1925 = vmatprep.subr.bf16.mxu0 0
      %1926 = vmatpush1.bf16.msra.mxu0 0
      %1927 = vmatprep.subr.bf16.mxu0 0
      %1928 = vmatpush1.bf16.msra.mxu0 %v1911
      %1929 = vmatprep.subr.bf16.mxu0 0
      %1930 = vmatpush1.bf16.msra.mxu0 %v1910
      %1931 = vmatprep.subr.bf16.mxu0 0
      %1932 = vmatpush1.bf16.msra.mxu0 %v1909
      %1933 = vmatprep.subr.bf16.mxu0 0
      %1934 = vmatpush1.bf16.msra.mxu0 %v1908
      %1935 = vmatprep.subr.bf16.mxu0 0
      %1936 = vmatpush2.bf16.msra.mxu0 0
      %1937 = vmatprep.subr.bf16.mxu0 0
      %1938 = vmatpush2.bf16.msra.mxu0 0
      %1939 = vmatprep.subr.bf16.mxu0 0
      %1940 = vmatpush2.bf16.msra.mxu0 0
      %1941 = vmatprep.subr.bf16.mxu0 0
      %1942 = vmatpush2.bf16.msra.mxu0 0
      %1943 = vmatprep.subr.bf16.mxu0 0
      %1944 = vmatpush2.bf16.msra.mxu0 0
      %1945 = vmatprep.subr.bf16.mxu0 0
      %1946 = vmatpush2.bf16.msra.mxu0 0
      %1947 = vmatprep.subr.bf16.mxu0 0
      %1948 = vmatpush2.bf16.msra.mxu0 0
      %1949 = vmatprep.subr.bf16.mxu0 0
      %1950 = vmatpush2.bf16.msra.mxu0 0
      %1951 = vmatprep.mubr.bf16.mxu0 0
      %1952 = vmatmul.mubr.bf16.gmra.mxu0 %v1917
      %v1953 = vpop.f32.mrf.mxu0
      %v1954 = vadd.f32 %v1890, %v1953
      %v1955 = vpop.f32.mrf.mxu0
      %v1956 = vpop.f32.mrf.mxu0
      %v1957 = vpop.f32.mrf.mxu0
      %1958 = vdwg.mxu0
      %v1959 = vld [vmem:[%s3] sm:$0xff]
      %v1960 = vadd.f32 %v1954, %v1959
      %v1961 = vld [vmem:[%s5] sm:$0xff]
      %v1962 = vld [vmem:[%s5 + $0x8] sm:$0xff]
      %v1963 = vld [vmem:[%s5 + $0x10] sm:$0xff]
      %v1964 = vld [vmem:[%s5 + $0x18] sm:$0xff]
      %v1965 = vld [vmem:[%s5 + $0x20] sm:$0xff]
      %v1966 = vld [vmem:[%s5 + $0x28] sm:$0xff]
      %v1967 = vld [vmem:[%s5 + $0x30] sm:$0xff]
      %v1968 = vld [vmem:[%s5 + $0x38] sm:$0xff]
      %v1969 = vld [vmem:[%s7] sm:$0xff]
      %v1970 = vld [vmem:[%s7 + $0x8] sm:$0xff]
      %v1971 = vld [vmem:[%s7 + $0x10] sm:$0xff]
      %v1972 = vld [vmem:[%s7 + $0x18] sm:$0xff]
      %v1973 = vld [vmem:[%s7 + $0x20] sm:$0xff]
      %v1974 = vld [vmem:[%s7 + $0x28] sm:$0xff]
      %v1975 = vld [vmem:[%s7 + $0x30] sm:$0xff]
      %v1976 = vld [vmem:[%s7 + $0x38] sm:$0xff]
      %v1977 = vld [vmem:[%s25] sm:$0xff]
      %v1978 = vld [vmem:[%s25 + $0x8] sm:$0xff]
      %v1979 = vld [vmem:[%s25 + $0x10] sm:$0xff]
      %v1980 = vld [vmem:[%s25 + $0x18] sm:$0xff]
      %v1981 = vld [vmem:[%s25 + $0x20] sm:$0xff]
      %v1982 = vld [vmem:[%s25 + $0x28] sm:$0xff]
      %v1983 = vld [vmem:[%s25 + $0x30] sm:$0xff]
      %v1984 = vld [vmem:[%s25 + $0x38] sm:$0xff]
      %v1985 = vpack.c.bf16 %v1960, %v1960
      %v1986 = vld [vmem:[%s27] sm:$0x3]
      %v1988 = vlaneseq
      %v1989 = vshrl.u32 %v1988, 7
      %v1990 = vsub.s32 0, %v1989
      %v1991 = vrot.slane %v1986, %v1990
      %v1992 = vlaneseq
      %v1993 = vshrl.u32 %v1992, 7
      %v1994 = vsub.s32 1, %v1993
      %v1995 = vrot.slane %v1986, %v1994
      %v2006 = vunpack.c.l.b16 %v1977
      %v2007 = vunpack.c.h.b16 %v1977
      %v2008 = vunpack.c.l.b16 %v1978
      %v2009 = vunpack.c.h.b16 %v1978
      %v2010 = vunpack.c.l.b16 %v1979
      %v2011 = vunpack.c.h.b16 %v1979
      %v2012 = vunpack.c.l.b16 %v1980
      %v2013 = vunpack.c.h.b16 %v1980
      %v2014 = vunpack.c.l.b16 %v1981
      %v2015 = vunpack.c.h.b16 %v1981
      %v2016 = vunpack.c.l.b16 %v1982
      %v2017 = vunpack.c.h.b16 %v1982
      %v2018 = vunpack.c.l.b16 %v1983
      %v2019 = vunpack.c.h.b16 %v1983
      %v2020 = vunpack.c.l.b16 %v1984
      %v2021 = vunpack.c.h.b16 %v1984
      %v2022 = vpack.c.b16 %v2008, %v2006
      %v2023 = vpack.c.b16 %v2009, %v2007
      %v2024 = vpack.c.b16 %v2012, %v2010
      %v2025 = vpack.c.b16 %v2013, %v2011
      %v2026 = vpack.c.b16 %v2016, %v2014
      %v2027 = vpack.c.b16 %v2017, %v2015
      %v2028 = vpack.c.b16 %v2020, %v2018
      %v2029 = vpack.c.b16 %v2021, %v2019
      %v2039 = vsel %vm1719, %v1985, 0
      %2041 = vmatprep.subr.bf16.mxu0 0
      %2042 = vmatpush1.bf16.msra.mxu0 0
      %2043 = vmatprep.subr.bf16.mxu0 0
      %2044 = vmatpush1.bf16.msra.mxu0 0
      %2045 = vmatprep.subr.bf16.mxu0 0
      %2046 = vmatpush1.bf16.msra.mxu0 0
      %2047 = vmatprep.subr.bf16.mxu0 0
      %2048 = vmatpush1.bf16.msra.mxu0 0
      %2049 = vmatprep.subr.bf16.mxu0 %v2029
      %2050 = vmatpush1.bf16.msra.mxu0 %v2028
      %2051 = vmatprep.subr.bf16.mxu0 %v2027
      %2052 = vmatpush1.bf16.msra.mxu0 %v2026
      %2053 = vmatprep.subr.bf16.mxu0 %v2025
      %2054 = vmatpush1.bf16.msra.mxu0 %v2024
      %2055 = vmatprep.subr.bf16.mxu0 %v2023
      %2056 = vmatpush1.bf16.msra.mxu0 %v2022
      %2057 = vmatprep.subr.bf16.mxu0 0
      %2058 = vmatpush2.bf16.msra.mxu0 0
      %2059 = vmatprep.subr.bf16.mxu0 0
      %2060 = vmatpush2.bf16.msra.mxu0 0
      %2061 = vmatprep.subr.bf16.mxu0 0
      %2062 = vmatpush2.bf16.msra.mxu0 0
      %2063 = vmatprep.subr.bf16.mxu0 0
      %2064 = vmatpush2.bf16.msra.mxu0 0
      %2065 = vmatprep.subr.bf16.mxu0 0
      %2066 = vmatpush2.bf16.msra.mxu0 0
      %2067 = vmatprep.subr.bf16.mxu0 0
      %2068 = vmatpush2.bf16.msra.mxu0 0
      %2069 = vmatprep.subr.bf16.mxu0 0
      %2070 = vmatpush2.bf16.msra.mxu0 0
      %2071 = vmatprep.subr.bf16.mxu0 0
      %2072 = vmatpush2.bf16.msra.mxu0 0
      %2073 = vmatprep.mubr.bf16.mxu0 0
      %2074 = vmatmul.mubr.bf16.gmra.mxu0 %v2039
      %v2075 = vpop.f32.mrf.mxu0
      %v2076 = vadd.f32 %v1991, %v2075
      %v2077 = vpop.f32.mrf.mxu0
      %v2078 = vadd.f32 %v1995, %v2077
      %v2079 = vpop.f32.mrf.mxu0
      %v2080 = vpop.f32.mrf.mxu0
      %2081 = vdwg.mxu0
      %2090 = vrot.lane.b32.xlu0 %v1961, 64
      %v2091 = vpop.permute.xlu0 %2090
      %2092 = vrot.lane.b32.xlu0 %v1962, 64
      %v2093 = vpop.permute.xlu0 %2092
      %2094 = vrot.lane.b32.xlu0 %v1963, 64
      %v2095 = vpop.permute.xlu0 %2094
      %2096 = vrot.lane.b32.xlu0 %v1964, 64
      %v2097 = vpop.permute.xlu0 %2096
      %2098 = vrot.lane.b32.xlu0 %v1965, 64
      %v2099 = vpop.permute.xlu0 %2098
      %2100 = vrot.lane.b32.xlu0 %v1966, 64
      %v2101 = vpop.permute.xlu0 %2100
      %2102 = vrot.lane.b32.xlu0 %v1967, 64
      %v2103 = vpop.permute.xlu0 %2102
      %2104 = vrot.lane.b32.xlu0 %v1968, 64
      %v2105 = vpop.permute.xlu0 %2104
      %v2114 = vmul.f32 %v2076, %v2091
      %v2115 = vmul.f32 %v2076, %v2093
      %v2116 = vmul.f32 %v2076, %v2095
      %v2117 = vmul.f32 %v2076, %v2097
      %v2118 = vmul.f32 %v2076, %v2099
      %v2119 = vmul.f32 %v2076, %v2101
      %v2120 = vmul.f32 %v2076, %v2103
      %v2121 = vmul.f32 %v2076, %v2105
      %v2122 = vmul.f32 %v2078, %v1961
      %v2123 = vmul.f32 %v2078, %v1962
      %v2124 = vmul.f32 %v2078, %v1963
      %v2125 = vmul.f32 %v2078, %v1964
      %v2126 = vmul.f32 %v2078, %v1965
      %v2127 = vmul.f32 %v2078, %v1966
      %v2128 = vmul.f32 %v2078, %v1967
      %v2129 = vmul.f32 %v2078, %v1968
      %v2130 = vpack.c.bf16 %v2076, %v2076
      %v2131 = vpack.c.bf16 %v2115, %v2114
      %v2132 = vpack.c.bf16 %v2117, %v2116
      %v2133 = vpack.c.bf16 %v2119, %v2118
      %v2134 = vpack.c.bf16 %v2121, %v2120
      %2139 = vrot.lane.b32.xlu0 %v2131, 64
      %v2140 = vpop.permute.xlu0 %2139
      %2141 = vrot.lane.b32.xlu0 %v2132, 64
      %v2142 = vpop.permute.xlu0 %2141
      %2143 = vrot.lane.b32.xlu0 %v2133, 64
      %v2144 = vpop.permute.xlu0 %2143
      %2145 = vrot.lane.b32.xlu0 %v2134, 64
      %v2146 = vpop.permute.xlu0 %2145
      %v2148 = vsel %vm1719, %v2130, 0
      %v2151 = vsel %vm1719, %v2140, 0
      %v2154 = vsel %vm1719, %v2142, 0
      %v2157 = vsel %vm1719, %v2144, 0
      %v2160 = vsel %vm1719, %v2146, 0
      %2162 = vmatprep.subr.bf16.mxu0 0
      %2163 = vmatpush1.bf16.xpose.msra.mxu0 0
      %2164 = vmatprep.subr.bf16.mxu0 0
      %2165 = vmatpush1.bf16.xpose.msra.mxu0 0
      %2166 = vmatprep.subr.bf16.mxu0 0
      %2167 = vmatpush1.bf16.xpose.msra.mxu0 0
      %2168 = vmatprep.subr.bf16.mxu0 0
      %2169 = vmatpush1.bf16.xpose.msra.mxu0 0
      %2170 = vmatprep.subr.bf16.mxu0 0
      %2171 = vmatpush1.bf16.xpose.msra.mxu0 %v2160
      %2172 = vmatprep.subr.bf16.mxu0 0
      %2173 = vmatpush1.bf16.xpose.msra.mxu0 %v2157
      %2174 = vmatprep.subr.bf16.mxu0 0
      %2175 = vmatpush1.bf16.xpose.msra.mxu0 %v2154
      %2176 = vmatprep.subr.bf16.mxu0 0
      %2177 = vmatpush1.bf16.xpose.msra.mxu0 %v2151
      %2178 = vmatprep.subr.bf16.mxu0 0
      %2179 = vmatpush2.bf16.xpose.msra.mxu0 0
      %2180 = vmatprep.subr.bf16.mxu0 0
      %2181 = vmatpush2.bf16.xpose.msra.mxu0 0
      %2182 = vmatprep.subr.bf16.mxu0 0
      %2183 = vmatpush2.bf16.xpose.msra.mxu0 0
      %2184 = vmatprep.subr.bf16.mxu0 0
      %2185 = vmatpush2.bf16.xpose.msra.mxu0 0
      %2186 = vmatprep.subr.bf16.mxu0 0
      %2187 = vmatpush2.bf16.xpose.msra.mxu0 0
      %2188 = vmatprep.subr.bf16.mxu0 0
      %2189 = vmatpush2.bf16.xpose.msra.mxu0 0
      %2190 = vmatprep.subr.bf16.mxu0 0
      %2191 = vmatpush2.bf16.xpose.msra.mxu0 0
      %2192 = vmatprep.subr.bf16.mxu0 0
      %2193 = vmatpush2.bf16.xpose.msra.mxu0 0
      %2194 = vmatprep.mubr.bf16.mxu0 0
      %2195 = vmatmul.mubr.bf16.gmra.mxu0 %v2148
      %v2196 = vpop.f32.mrf.mxu0
      %v2197 = vadd.f32 0.0, %v2196
      %v2198 = vpop.f32.mrf.mxu0
      %v2199 = vpop.f32.mrf.mxu0
      %v2200 = vpop.f32.mrf.mxu0
      %2201 = vdwg.mxu0
      %v2202 = vmul.f32 %v2197, 0.35355338
      %v2203 = vsel %vm1719, %v2202, -inf
      %2204 = vmax.xlane.f32.xlu0 %v2203
      %v2205 = vpop.xlane.xlu0 %2204
      %v2206 = vsub.f32 %v2202, %v2205
      %v2207 = vmul.f32 %v2206, 1.442695
      %v2208 = vpow.pop %v2207
      %v2210 = vsel %vm1719, %v2208, 0
      %2212 = vmatprep.subr.mxu0 0.0
      %2213 = vmatpush1.msra.mxu0 0.0
      %2214 = vmatprep.subr.mxu0 0.0
      %2215 = vmatpush1.msra.mxu0 0.0
      %2216 = vmatprep.subr.mxu0 0.0
      %2217 = vmatpush1.msra.mxu0 0.0
      %2218 = vmatprep.subr.mxu0 0.0
      %2219 = vmatpush1.msra.mxu0 0.0
      %2220 = vmatprep.subr.mxu0 0.0
      %2221 = vmatpush1.msra.mxu0 0.0
      %2222 = vmatprep.subr.mxu0 0.0
      %2223 = vmatpush1.msra.mxu0 0.0
      %2224 = vmatprep.subr.mxu0 0.0
      %2225 = vmatpush1.msra.mxu0 0.0
      %2226 = vmatprep.subr.mxu0 0.0
      %2227 = vmatpush1.msra.mxu0 0.0
      %2228 = vmatprep.subr.mxu0 0.0
      %2229 = vmatpush1.msra.mxu0 %v1976
      %2230 = vmatprep.subr.mxu0 0.0
      %2231 = vmatpush1.msra.mxu0 %v1975
      %2232 = vmatprep.subr.mxu0 0.0
      %2233 = vmatpush1.msra.mxu0 %v1974
      %2234 = vmatprep.subr.mxu0 0.0
      %2235 = vmatpush1.msra.mxu0 %v1973
      %2236 = vmatprep.subr.mxu0 0.0
      %2237 = vmatpush1.msra.mxu0 %v1972
      %2238 = vmatprep.subr.mxu0 0.0
      %2239 = vmatpush1.msra.mxu0 %v1971
      %2240 = vmatprep.subr.mxu0 0.0
      %2241 = vmatpush1.msra.mxu0 %v1970
      %2242 = vmatprep.subr.mxu0 0.0
      %2243 = vmatpush1.msra.mxu0 %v1969
      %2244 = vmatprep.subr.mxu0 0.0
      %2245 = vmatpush2.msra.mxu0 0.0
      %2246 = vmatprep.subr.mxu0 0.0
      %2247 = vmatpush2.msra.mxu0 0.0
      %2248 = vmatprep.subr.mxu0 0.0
      %2249 = vmatpush2.msra.mxu0 0.0
      %2250 = vmatprep.subr.mxu0 0.0
      %2251 = vmatpush2.msra.mxu0 0.0
      %2252 = vmatprep.subr.mxu0 0.0
      %2253 = vmatpush2.msra.mxu0 0.0
      %2254 = vmatprep.subr.mxu0 0.0
      %2255 = vmatpush2.msra.mxu0 0.0
      %2256 = vmatprep.subr.mxu0 0.0
      %2257 = vmatpush2.msra.mxu0 0.0
      %2258 = vmatprep.subr.mxu0 0.0
      %2259 = vmatpush2.msra.mxu0 0.0
      %2260 = vmatprep.subr.mxu0 0.0
      %2261 = vmatpush2.msra.mxu0 0.0
      %2262 = vmatprep.subr.mxu0 0.0
      %2263 = vmatpush2.msra.mxu0 0.0
      %2264 = vmatprep.subr.mxu0 0.0
      %2265 = vmatpush2.msra.mxu0 0.0
      %2266 = vmatprep.subr.mxu0 0.0
      %2267 = vmatpush2.msra.mxu0 0.0
      %2268 = vmatprep.subr.mxu0 0.0
      %2269 = vmatpush2.msra.mxu0 0.0
      %2270 = vmatprep.subr.mxu0 0.0
      %2271 = vmatpush2.msra.mxu0 0.0
      %2272 = vmatprep.subr.mxu0 0.0
      %2273 = vmatpush2.msra.mxu0 0.0
      %2274 = vmatprep.subr.mxu0 0.0
      %2275 = vmatpush2.msra.mxu0 0.0
      %2276 = vmatprep.mubr.f32.mxu0 0.0
      %2277 = vmatmul.mubr.f32.gmra.mxu0 %v2210
      %v2278 = vpop.f32.mrf.mxu0
      %v2279 = vadd.f32 0.0, %v2278
      %v2280 = vpop.f32.mrf.mxu0
      %2281 = vdwg.mxu0
      %v2282 = vrcp.pop %v2279
      %v2283 = vmul.f32 %v2208, %v2282
      %v2284 = vpack.c.bf16 %v2283, %v2283
      %v2285 = vpack.c.bf16 %v2123, %v2122
      %v2286 = vpack.c.bf16 %v2125, %v2124
      %v2287 = vpack.c.bf16 %v2127, %v2126
      %v2288 = vpack.c.bf16 %v2129, %v2128
      %v2290 = vsel %vm1719, %v2284, 0
      %2292 = vmatprep.subr.bf16.mxu0 0
      %2293 = vmatpush1.bf16.msra.mxu0 0
      %2294 = vmatprep.subr.bf16.mxu0 0
      %2295 = vmatpush1.bf16.msra.mxu0 0
      %2296 = vmatprep.subr.bf16.mxu0 0
      %2297 = vmatpush1.bf16.msra.mxu0 0
      %2298 = vmatprep.subr.bf16.mxu0 0
      %2299 = vmatpush1.bf16.msra.mxu0 0
      %2300 = vmatprep.subr.bf16.mxu0 0
      %2301 = vmatpush1.bf16.msra.mxu0 %v2288
      %2302 = vmatprep.subr.bf16.mxu0 0
      %2303 = vmatpush1.bf16.msra.mxu0 %v2287
      %2304 = vmatprep.subr.bf16.mxu0 0
      %2305 = vmatpush1.bf16.msra.mxu0 %v2286
      %2306 = vmatprep.subr.bf16.mxu0 0
      %2307 = vmatpush1.bf16.msra.mxu0 %v2285
      %2308 = vmatprep.subr.bf16.mxu0 0
      %2309 = vmatpush2.bf16.msra.mxu0 0
      %2310 = vmatprep.subr.bf16.mxu0 0
      %2311 = vmatpush2.bf16.msra.mxu0 0
      %2312 = vmatprep.subr.bf16.mxu0 0
      %2313 = vmatpush2.bf16.msra.mxu0 0
      %2314 = vmatprep.subr.bf16.mxu0 0
      %2315 = vmatpush2.bf16.msra.mxu0 0
      %2316 = vmatprep.subr.bf16.mxu0 0
      %2317 = vmatpush2.bf16.msra.mxu0 0
      %2318 = vmatprep.subr.bf16.mxu0 0
      %2319 = vmatpush2.bf16.msra.mxu0 0
      %2320 = vmatprep.subr.bf16.mxu0 0
      %2321 = vmatpush2.bf16.msra.mxu0 0
      %2322 = vmatprep.subr.bf16.mxu0 0
      %2323 = vmatpush2.bf16.msra.mxu0 0
      %2324 = vmatprep.mubr.bf16.mxu0 0
      %2325 = vmatmul.mubr.bf16.gmra.mxu0 %v2290
      %v2326 = vpop.f32.mrf.mxu0
      %v2327 = vadd.f32 0.0, %v2326
      %v2328 = vpop.f32.mrf.mxu0
      %v2329 = vpop.f32.mrf.mxu0
      %v2330 = vpop.f32.mrf.mxu0
      %2331 = vdwg.mxu0
      %v2332 = vld [vmem:[%s29] sm:$0xf]
      %v2333 = vld [vmem:[%s29 + $0x4] sm:$0xf]
      %v2334 = vld [vmem:[%s29 + $0x8] sm:$0xf]
      %v2335 = vld [vmem:[%s29 + $0xc] sm:$0xf]
      %v2336 = vld [vmem:[%s29 + $0x10] sm:$0xf]
      %v2337 = vld [vmem:[%s29 + $0x14] sm:$0xf]
      %v2338 = vld [vmem:[%s29 + $0x18] sm:$0xf]
      %v2339 = vld [vmem:[%s29 + $0x1c] sm:$0xf]
      %v2340 = vpack.c.bf16 %v2327, %v2327
      %v2341 = vld [vmem:[%s31] sm:$0x1]
      %v2343 = vlaneseq
      %v2344 = vshrl.u32 %v2343, 7
      %v2345 = vsub.s32 0, %v2344
      %v2346 = vrot.slane %v2341, %v2345
      %v2356 = vunpack.c.l.b16 %v2332
      %v2357 = vunpack.c.l.b16 %v2333
      %v2358 = vunpack.c.l.b16 %v2334
      %v2359 = vunpack.c.l.b16 %v2335
      %v2360 = vunpack.c.l.b16 %v2336
      %v2361 = vunpack.c.l.b16 %v2337
      %v2362 = vunpack.c.l.b16 %v2338
      %v2363 = vunpack.c.l.b16 %v2339
      %v2364 = vpack.c.b16 %v2357, %v2356
      %v2365 = vpack.c.b16 %v2359, %v2358
      %v2366 = vpack.c.b16 %v2361, %v2360
      %v2367 = vpack.c.b16 %v2363, %v2362
      %v2373 = vsel %vm1719, %v2340, 0
      %2375 = vmatprep.subr.bf16.mxu0 0
      %2376 = vmatpush1.bf16.msra.mxu0 0
      %2377 = vmatprep.subr.bf16.mxu0 0
      %2378 = vmatpush1.bf16.msra.mxu0 0
      %2379 = vmatprep.subr.bf16.mxu0 0
      %2380 = vmatpush1.bf16.msra.mxu0 0
      %2381 = vmatprep.subr.bf16.mxu0 0
      %2382 = vmatpush1.bf16.msra.mxu0 0
      %2383 = vmatprep.subr.bf16.mxu0 0
      %2384 = vmatpush1.bf16.msra.mxu0 %v2367
      %2385 = vmatprep.subr.bf16.mxu0 0
      %2386 = vmatpush1.bf16.msra.mxu0 %v2366
      %2387 = vmatprep.subr.bf16.mxu0 0
      %2388 = vmatpush1.bf16.msra.mxu0 %v2365
      %2389 = vmatprep.subr.bf16.mxu0 0
      %2390 = vmatpush1.bf16.msra.mxu0 %v2364
      %2391 = vmatprep.subr.bf16.mxu0 0
      %2392 = vmatpush2.bf16.msra.mxu0 0
      %2393 = vmatprep.subr.bf16.mxu0 0
      %2394 = vmatpush2.bf16.msra.mxu0 0
      %2395 = vmatprep.subr.bf16.mxu0 0
      %2396 = vmatpush2.bf16.msra.mxu0 0
      %2397 = vmatprep.subr.bf16.mxu0 0
      %2398 = vmatpush2.bf16.msra.mxu0 0
      %2399 = vmatprep.subr.bf16.mxu0 0
      %2400 = vmatpush2.bf16.msra.mxu0 0
      %2401 = vmatprep.subr.bf16.mxu0 0
      %2402 = vmatpush2.bf16.msra.mxu0 0
      %2403 = vmatprep.subr.bf16.mxu0 0
      %2404 = vmatpush2.bf16.msra.mxu0 0
      %2405 = vmatprep.subr.bf16.mxu0 0
      %2406 = vmatpush2.bf16.msra.mxu0 0
      %2407 = vmatprep.mubr.bf16.mxu0 0
      %2408 = vmatmul.mubr.bf16.gmra.mxu0 %v2373
      %v2409 = vpop.f32.mrf.mxu0
      %v2410 = vadd.f32 %v2346, %v2409
      %v2411 = vpop.f32.mrf.mxu0
      %v2412 = vpop.f32.mrf.mxu0
      %v2413 = vpop.f32.mrf.mxu0
      %2414 = vdwg.mxu0
      %v2415 = vadd.f32 %v1960, %v2410
      %v2416 = vld [vmem:[%s33] sm:$0x1]
      %v2417 = vld [vmem:[%s35] sm:$0x1]
      %v2418 = vsel %vm1719, %v2415, 0.0
      %2419 = vadd.xlane.f32.xlu0 %v2418
      %v2420 = vpop.xlane.xlu0 %2419
      %v2421 = vrcp.pop 64.0
      %v2422 = vmul.f32 %v2420, %v2421
      %v2423 = vsub.f32 %v2415, %v2422
      %v2424 = vmul.f32 %v2423, %v2423
      %v2425 = vsel %vm1719, %v2424, 0.0
      %2426 = vadd.xlane.f32.xlu0 %v2425
      %v2427 = vpop.xlane.xlu0 %2426
      %v2428 = vmul.f32 %v2427, %v2421
      %v2429 = vadd.f32 %v2428, 1e-05
      %v2430 = vrsqrt.pop %v2429
      %v2431 = vmul.f32 %v2423, %v2430
      %v2433 = vlaneseq
      %v2434 = vshrl.u32 %v2433, 7
      %v2435 = vsub.s32 0, %v2434
      %v2436 = vrot.slane %v2416, %v2435
      %v2438 = vmul.f32 %v2431, %v2436
      %v2440 = vlaneseq
      %v2441 = vshrl.u32 %v2440, 7
      %v2442 = vsub.s32 0, %v2441
      %v2443 = vrot.slane %v2417, %v2442
      %v2445 = vadd.f32 %v2438, %v2443
      %v2446 = vld [vmem:[%s37] sm:$0xf]
      %v2447 = vld [vmem:[%s37 + $0x4] sm:$0xf]
      %v2448 = vld [vmem:[%s37 + $0x8] sm:$0xf]
      %v2449 = vld [vmem:[%s37 + $0xc] sm:$0xf]
      %v2450 = vld [vmem:[%s37 + $0x10] sm:$0xf]
      %v2451 = vld [vmem:[%s37 + $0x14] sm:$0xf]
      %v2452 = vld [vmem:[%s37 + $0x18] sm:$0xf]
      %v2453 = vld [vmem:[%s37 + $0x1c] sm:$0xf]
      %v2454 = vpack.c.bf16 %v2445, %v2445
      %v2455 = vld [vmem:[%s39] sm:$0x1]
      %v2457 = vlaneseq
      %v2458 = vshrl.u32 %v2457, 7
      %v2459 = vsub.s32 0, %v2458
      %v2460 = vrot.slane %v2455, %v2459
      %v2470 = vunpack.c.l.b16 %v2446
      %v2471 = vunpack.c.l.b16 %v2447
      %v2472 = vunpack.c.l.b16 %v2448
      %v2473 = vunpack.c.l.b16 %v2449
      %v2474 = vunpack.c.l.b16 %v2450
      %v2475 = vunpack.c.l.b16 %v2451
      %v2476 = vunpack.c.l.b16 %v2452
      %v2477 = vunpack.c.l.b16 %v2453
      %v2478 = vpack.c.b16 %v2471, %v2470
      %v2479 = vpack.c.b16 %v2473, %v2472
      %v2480 = vpack.c.b16 %v2475, %v2474
      %v2481 = vpack.c.b16 %v2477, %v2476
      %v2487 = vsel %vm1719, %v2454, 0
      %2489 = vmatprep.subr.bf16.mxu0 0
      %2490 = vmatpush1.bf16.msra.mxu0 0
      %2491 = vmatprep.subr.bf16.mxu0 0
      %2492 = vmatpush1.bf16.msra.mxu0 0
      %2493 = vmatprep.subr.bf16.mxu0 0
      %2494 = vmatpush1.bf16.msra.mxu0 0
      %2495 = vmatprep.subr.bf16.mxu0 0
      %2496 = vmatpush1.bf16.msra.mxu0 0
      %2497 = vmatprep.subr.bf16.mxu0 0
      %2498 = vmatpush1.bf16.msra.mxu0 %v2481
      %2499 = vmatprep.subr.bf16.mxu0 0
      %2500 = vmatpush1.bf16.msra.mxu0 %v2480
      %2501 = vmatprep.subr.bf16.mxu0 0
      %2502 = vmatpush1.bf16.msra.mxu0 %v2479
      %2503 = vmatprep.subr.bf16.mxu0 0
      %2504 = vmatpush1.bf16.msra.mxu0 %v2478
      %2505 = vmatprep.subr.bf16.mxu0 0
      %2506 = vmatpush2.bf16.msra.mxu0 0
      %2507 = vmatprep.subr.bf16.mxu0 0
      %2508 = vmatpush2.bf16.msra.mxu0 0
      %2509 = vmatprep.subr.bf16.mxu0 0
      %2510 = vmatpush2.bf16.msra.mxu0 0
      %2511 = vmatprep.subr.bf16.mxu0 0
      %2512 = vmatpush2.bf16.msra.mxu0 0
      %2513 = vmatprep.subr.bf16.mxu0 0
      %2514 = vmatpush2.bf16.msra.mxu0 0
      %2515 = vmatprep.subr.bf16.mxu0 0
      %2516 = vmatpush2.bf16.msra.mxu0 0
      %2517 = vmatprep.subr.bf16.mxu0 0
      %2518 = vmatpush2.bf16.msra.mxu0 0
      %2519 = vmatprep.subr.bf16.mxu0 0
      %2520 = vmatpush2.bf16.msra.mxu0 0
      %2521 = vmatprep.mubr.bf16.mxu0 0
      %2522 = vmatmul.mubr.bf16.gmra.mxu0 %v2487
      %v2523 = vpop.f32.mrf.mxu0
      %v2524 = vadd.f32 %v2460, %v2523
      %v2525 = vpop.f32.mrf.mxu0
      %v2526 = vpop.f32.mrf.mxu0
      %v2527 = vpop.f32.mrf.mxu0
      %2528 = vdwg.mxu0
      %v2529 = vmax.f32 %v2524, 0.0
      %v2530 = vld [vmem:[%s41] sm:$0xf]
      %v2531 = vld [vmem:[%s41 + $0x4] sm:$0xf]
      %v2532 = vld [vmem:[%s41 + $0x8] sm:$0xf]
      %v2533 = vld [vmem:[%s41 + $0xc] sm:$0xf]
      %v2534 = vld [vmem:[%s41 + $0x10] sm:$0xf]
      %v2535 = vld [vmem:[%s41 + $0x14] sm:$0xf]
      %v2536 = vld [vmem:[%s41 + $0x18] sm:$0xf]
      %v2537 = vld [vmem:[%s41 + $0x1c] sm:$0xf]
      %v2538 = vld [vmem:[%s41 + $0x20] sm:$0xf]
      %v2539 = vld [vmem:[%s41 + $0x24] sm:$0xf]
      %v2540 = vld [vmem:[%s41 + $0x28] sm:$0xf]
      %v2541 = vld [vmem:[%s41 + $0x2c] sm:$0xf]
      %v2542 = vld [vmem:[%s41 + $0x30] sm:$0xf]
      %v2543 = vld [vmem:[%s41 + $0x34] sm:$0xf]
      %v2544 = vld [vmem:[%s41 + $0x38] sm:$0xf]
      %v2545 = vld [vmem:[%s41 + $0x3c] sm:$0xf]
      %v2546 = vpack.c.bf16 %v2529, %v2529
      %v2547 = vld [vmem:[%s43] sm:$0x1]
      %v2549 = vlaneseq
      %v2550 = vshrl.u32 %v2549, 7
      %v2551 = vsub.s32 0, %v2550
      %v2552 = vrot.slane %v2547, %v2551
      %v2570 = vunpack.c.l.b16 %v2530
      %v2571 = vunpack.c.l.b16 %v2531
      %v2572 = vunpack.c.l.b16 %v2532
      %v2573 = vunpack.c.l.b16 %v2533
      %v2574 = vunpack.c.l.b16 %v2534
      %v2575 = vunpack.c.l.b16 %v2535
      %v2576 = vunpack.c.l.b16 %v2536
      %v2577 = vunpack.c.l.b16 %v2537
      %v2578 = vunpack.c.l.b16 %v2538
      %v2579 = vunpack.c.l.b16 %v2539
      %v2580 = vunpack.c.l.b16 %v2540
      %v2581 = vunpack.c.l.b16 %v2541
      %v2582 = vunpack.c.l.b16 %v2542
      %v2583 = vunpack.c.l.b16 %v2543
      %v2584 = vunpack.c.l.b16 %v2544
      %v2585 = vunpack.c.l.b16 %v2545
      %v2586 = vpack.c.b16 %v2571, %v2570
      %v2587 = vpack.c.b16 %v2573, %v2572
      %v2588 = vpack.c.b16 %v2575, %v2574
      %v2589 = vpack.c.b16 %v2577, %v2576
      %v2590 = vpack.c.b16 %v2579, %v2578
      %v2591 = vpack.c.b16 %v2581, %v2580
      %v2592 = vpack.c.b16 %v2583, %v2582
      %v2593 = vpack.c.b16 %v2585, %v2584
      %2602 = vmatprep.subr.bf16.mxu0 0
      %2603 = vmatpush1.bf16.msra.mxu0 %v2593
      %2604 = vmatprep.subr.bf16.mxu0 0
      %2605 = vmatpush1.bf16.msra.mxu0 %v2592
      %2606 = vmatprep.subr.bf16.mxu0 0
      %2607 = vmatpush1.bf16.msra.mxu0 %v2591
      %2608 = vmatprep.subr.bf16.mxu0 0
      %2609 = vmatpush1.bf16.msra.mxu0 %v2590
      %2610 = vmatprep.subr.bf16.mxu0 0
      %2611 = vmatpush1.bf16.msra.mxu0 %v2589
      %2612 = vmatprep.subr.bf16.mxu0 0
      %2613 = vmatpush1.bf16.msra.mxu0 %v2588
      %2614 = vmatprep.subr.bf16.mxu0 0
      %2615 = vmatpush1.bf16.msra.mxu0 %v2587
      %2616 = vmatprep.subr.bf16.mxu0 0
      %2617 = vmatpush1.bf16.msra.mxu0 %v2586
      %2618 = vmatprep.subr.bf16.mxu0 0
      %2619 = vmatpush2.bf16.msra.mxu0 0
      %2620 = vmatprep.subr.bf16.mxu0 0
      %2621 = vmatpush2.bf16.msra.mxu0 0
      %2622 = vmatprep.subr.bf16.mxu0 0
      %2623 = vmatpush2.bf16.msra.mxu0 0
      %2624 = vmatprep.subr.bf16.mxu0 0
      %2625 = vmatpush2.bf16.msra.mxu0 0
      %2626 = vmatprep.subr.bf16.mxu0 0
      %2627 = vmatpush2.bf16.msra.mxu0 0
      %2628 = vmatprep.subr.bf16.mxu0 0
      %2629 = vmatpush2.bf16.msra.mxu0 0
      %2630 = vmatprep.subr.bf16.mxu0 0
      %2631 = vmatpush2.bf16.msra.mxu0 0
      %2632 = vmatprep.subr.bf16.mxu0 0
      %2633 = vmatpush2.bf16.msra.mxu0 0
      %2634 = vmatprep.mubr.bf16.mxu0 0
      %2635 = vmatmul.mubr.bf16.gmra.mxu0 %v2546
      %v2636 = vpop.f32.mrf.mxu0
      %v2637 = vadd.f32 %v2552, %v2636
      %v2638 = vpop.f32.mrf.mxu0
      %v2639 = vpop.f32.mrf.mxu0
      %v2640 = vpop.f32.mrf.mxu0
      %2641 = vdwg.mxu0
      %v2642 = vadd.f32 %v2445, %v2637
      %v2643 = vld [vmem:[%s45] sm:$0x1]
      %v2644 = vld [vmem:[%s47] sm:$0x1]
      %v2645 = vsel %vm1719, %v2642, 0.0
      %2646 = vadd.xlane.f32.xlu0 %v2645
      %v2647 = vpop.xlane.xlu0 %2646
      %v2648 = vmul.f32 %v2647, %v2421
      %v2649 = vsub.f32 %v2642, %v2648
      %v2650 = vmul.f32 %v2649, %v2649
      %v2651 = vsel %vm1719, %v2650, 0.0
      %2652 = vadd.xlane.f32.xlu0 %v2651
      %v2653 = vpop.xlane.xlu0 %2652
      %v2654 = vmul.f32 %v2653, %v2421
      %v2655 = vadd.f32 %v2654, 1e-05
      %v2656 = vrsqrt.pop %v2655
      %v2657 = vmul.f32 %v2649, %v2656
      %v2659 = vlaneseq
      %v2660 = vshrl.u32 %v2659, 7
      %v2661 = vsub.s32 0, %v2660
      %v2662 = vrot.slane %v2643, %v2661
      %v2664 = vmul.f32 %v2657, %v2662
      %v2666 = vlaneseq
      %v2667 = vshrl.u32 %v2666, 7
      %v2668 = vsub.s32 0, %v2667
      %v2669 = vrot.slane %v2644, %v2668
      %v2671 = vadd.f32 %v2664, %v2669
      %s2672 = scalar_lea.vmem %s25, 64
      %v2673 = vld [vmem:[%s2672] sm:$0xff]
      %v2674 = vld [vmem:[%s2672 + $0x8] sm:$0xff]
      %v2675 = vld [vmem:[%s2672 + $0x10] sm:$0xff]
      %v2676 = vld [vmem:[%s2672 + $0x18] sm:$0xff]
      %v2677 = vld [vmem:[%s2672 + $0x20] sm:$0xff]
      %v2678 = vld [vmem:[%s2672 + $0x28] sm:$0xff]
      %v2679 = vld [vmem:[%s2672 + $0x30] sm:$0xff]
      %v2680 = vld [vmem:[%s2672 + $0x38] sm:$0xff]
      %v2681 = vpack.c.bf16 %v2671, %v2671
      %s2682 = scalar_lea.vmem %s27, 2
      %v2683 = vld [vmem:[%s2682] sm:$0x3]
      %v2685 = vlaneseq
      %v2686 = vshrl.u32 %v2685, 7
      %v2687 = vsub.s32 0, %v2686
      %v2688 = vrot.slane %v2683, %v2687
      %v2689 = vlaneseq
      %v2690 = vshrl.u32 %v2689, 7
      %v2691 = vsub.s32 1, %v2690
      %v2692 = vrot.slane %v2683, %v2691
      %v2703 = vunpack.c.l.b16 %v2673
      %v2704 = vunpack.c.h.b16 %v2673
      %v2705 = vunpack.c.l.b16 %v2674
      %v2706 = vunpack.c.h.b16 %v2674
      %v2707 = vunpack.c.l.b16 %v2675
      %v2708 = vunpack.c.h.b16 %v2675
      %v2709 = vunpack.c.l.b16 %v2676
      %v2710 = vunpack.c.h.b16 %v2676
      %v2711 = vunpack.c.l.b16 %v2677
      %v2712 = vunpack.c.h.b16 %v2677
      %v2713 = vunpack.c.l.b16 %v2678
      %v2714 = vunpack.c.h.b16 %v2678
      %v2715 = vunpack.c.l.b16 %v2679
      %v2716 = vunpack.c.h.b16 %v2679
      %v2717 = vunpack.c.l.b16 %v2680
      %v2718 = vunpack.c.h.b16 %v2680
      %v2719 = vpack.c.b16 %v2705, %v2703
      %v2720 = vpack.c.b16 %v2706, %v2704
      %v2721 = vpack.c.b16 %v2709, %v2707
      %v2722 = vpack.c.b16 %v2710, %v2708
      %v2723 = vpack.c.b16 %v2713, %v2711
      %v2724 = vpack.c.b16 %v2714, %v2712
      %v2725 = vpack.c.b16 %v2717, %v2715
      %v2726 = vpack.c.b16 %v2718, %v2716
      %v2736 = vsel %vm1719, %v2681, 0
      %2738 = vmatprep.subr.bf16.mxu0 0
      %2739 = vmatpush1.bf16.msra.mxu0 0
      %2740 = vmatprep.subr.bf16.mxu0 0
      %2741 = vmatpush1.bf16.msra.mxu0 0
      %2742 = vmatprep.subr.bf16.mxu0 0
      %2743 = vmatpush1.bf16.msra.mxu0 0
      %2744 = vmatprep.subr.bf16.mxu0 0
      %2745 = vmatpush1.bf16.msra.mxu0 0
      %2746 = vmatprep.subr.bf16.mxu0 %v2726
      %2747 = vmatpush1.bf16.msra.mxu0 %v2725
      %2748 = vmatprep.subr.bf16.mxu0 %v2724
      %2749 = vmatpush1.bf16.msra.mxu0 %v2723
      %2750 = vmatprep.subr.bf16.mxu0 %v2722
      %2751 = vmatpush1.bf16.msra.mxu0 %v2721
      %2752 = vmatprep.subr.bf16.mxu0 %v2720
      %2753 = vmatpush1.bf16.msra.mxu0 %v2719
      %2754 = vmatprep.subr.bf16.mxu0 0
      %2755 = vmatpush2.bf16.msra.mxu0 0
      %2756 = vmatprep.subr.bf16.mxu0 0
      %2757 = vmatpush2.bf16.msra.mxu0 0
      %2758 = vmatprep.subr.bf16.mxu0 0
      %2759 = vmatpush2.bf16.msra.mxu0 0
      %2760 = vmatprep.subr.bf16.mxu0 0
      %2761 = vmatpush2.bf16.msra.mxu0 0
      %2762 = vmatprep.subr.bf16.mxu0 0
      %2763 = vmatpush2.bf16.msra.mxu0 0
      %2764 = vmatprep.subr.bf16.mxu0 0
      %2765 = vmatpush2.bf16.msra.mxu0 0
      %2766 = vmatprep.subr.bf16.mxu0 0
      %2767 = vmatpush2.bf16.msra.mxu0 0
      %2768 = vmatprep.subr.bf16.mxu0 0
      %2769 = vmatpush2.bf16.msra.mxu0 0
      %2770 = vmatprep.mubr.bf16.mxu0 0
      %2771 = vmatmul.mubr.bf16.gmra.mxu0 %v2736
      %v2772 = vpop.f32.mrf.mxu0
      %v2773 = vadd.f32 %v2688, %v2772
      %v2774 = vpop.f32.mrf.mxu0
      %v2775 = vadd.f32 %v2692, %v2774
      %v2776 = vpop.f32.mrf.mxu0
      %v2777 = vpop.f32.mrf.mxu0
      %2778 = vdwg.mxu0
      %v2779 = vmul.f32 %v2773, %v2091
      %v2780 = vmul.f32 %v2773, %v2093
      %v2781 = vmul.f32 %v2773, %v2095
      %v2782 = vmul.f32 %v2773, %v2097
      %v2783 = vmul.f32 %v2773, %v2099
      %v2784 = vmul.f32 %v2773, %v2101
      %v2785 = vmul.f32 %v2773, %v2103
      %v2786 = vmul.f32 %v2773, %v2105
      %v2787 = vmul.f32 %v2775, %v1961
      %v2788 = vmul.f32 %v2775, %v1962
      %v2789 = vmul.f32 %v2775, %v1963
      %v2790 = vmul.f32 %v2775, %v1964
      %v2791 = vmul.f32 %v2775, %v1965
      %v2792 = vmul.f32 %v2775, %v1966
      %v2793 = vmul.f32 %v2775, %v1967
      %v2794 = vmul.f32 %v2775, %v1968
      %v2795 = vpack.c.bf16 %v2773, %v2773
      %v2796 = vpack.c.bf16 %v2780, %v2779
      %v2797 = vpack.c.bf16 %v2782, %v2781
      %v2798 = vpack.c.bf16 %v2784, %v2783
      %v2799 = vpack.c.bf16 %v2786, %v2785
      %2804 = vrot.lane.b32.xlu0 %v2796, 64
      %v2805 = vpop.permute.xlu0 %2804
      %2806 = vrot.lane.b32.xlu0 %v2797, 64
      %v2807 = vpop.permute.xlu0 %2806
      %2808 = vrot.lane.b32.xlu0 %v2798, 64
      %v2809 = vpop.permute.xlu0 %2808
      %2810 = vrot.lane.b32.xlu0 %v2799, 64
      %v2811 = vpop.permute.xlu0 %2810
      %v2813 = vsel %vm1719, %v2795, 0
      %v2816 = vsel %vm1719, %v2805, 0
      %v2819 = vsel %vm1719, %v2807, 0
      %v2822 = vsel %vm1719, %v2809, 0
      %v2825 = vsel %vm1719, %v2811, 0
      %2827 = vmatprep.subr.bf16.mxu0 0
      %2828 = vmatpush1.bf16.xpose.msra.mxu0 0
      %2829 = vmatprep.subr.bf16.mxu0 0
      %2830 = vmatpush1.bf16.xpose.msra.mxu0 0
      %2831 = vmatprep.subr.bf16.mxu0 0
      %2832 = vmatpush1.bf16.xpose.msra.mxu0 0
      %2833 = vmatprep.subr.bf16.mxu0 0
      %2834 = vmatpush1.bf16.xpose.msra.mxu0 0
      %2835 = vmatprep.subr.bf16.mxu0 0
      %2836 = vmatpush1.bf16.xpose.msra.mxu0 %v2825
      %2837 = vmatprep.subr.bf16.mxu0 0
      %2838 = vmatpush1.bf16.xpose.msra.mxu0 %v2822
      %2839 = vmatprep.subr.bf16.mxu0 0
      %2840 = vmatpush1.bf16.xpose.msra.mxu0 %v2819
      %2841 = vmatprep.subr.bf16.mxu0 0
      %2842 = vmatpush1.bf16.xpose.msra.mxu0 %v2816
      %2843 = vmatprep.subr.bf16.mxu0 0
      %2844 = vmatpush2.bf16.xpose.msra.mxu0 0
      %2845 = vmatprep.subr.bf16.mxu0 0
      %2846 = vmatpush2.bf16.xpose.msra.mxu0 0
      %2847 = vmatprep.subr.bf16.mxu0 0
      %2848 = vmatpush2.bf16.xpose.msra.mxu0 0
      %2849 = vmatprep.subr.bf16.mxu0 0
      %2850 = vmatpush2.bf16.xpose.msra.mxu0 0
      %2851 = vmatprep.subr.bf16.mxu0 0
      %2852 = vmatpush2.bf16.xpose.msra.mxu0 0
      %2853 = vmatprep.subr.bf16.mxu0 0
      %2854 = vmatpush2.bf16.xpose.msra.mxu0 0
      %2855 = vmatprep.subr.bf16.mxu0 0
      %2856 = vmatpush2.bf16.xpose.msra.mxu0 0
      %2857 = vmatprep.subr.bf16.mxu0 0
      %2858 = vmatpush2.bf16.xpose.msra.mxu0 0
      %2859 = vmatprep.mubr.bf16.mxu0 0
      %2860 = vmatmul.mubr.bf16.gmra.mxu0 %v2813
      %v2861 = vpop.f32.mrf.mxu0
      %v2862 = vadd.f32 0.0, %v2861
      %v2863 = vpop.f32.mrf.mxu0
      %v2864 = vpop.f32.mrf.mxu0
      %v2865 = vpop.f32.mrf.mxu0
      %2866 = vdwg.mxu0
      %v2867 = vmul.f32 %v2862, 0.35355338
      %v2868 = vsel %vm1719, %v2867, -inf
      %2869 = vmax.xlane.f32.xlu0 %v2868
      %v2870 = vpop.xlane.xlu0 %2869
      %v2871 = vsub.f32 %v2867, %v2870
      %v2872 = vmul.f32 %v2871, 1.442695
      %v2873 = vpow.pop %v2872
      %v2875 = vsel %vm1719, %v2873, 0
      %2877 = vmatprep.subr.mxu0 0.0
      %2878 = vmatpush1.msra.mxu0 0.0
      %2879 = vmatprep.subr.mxu0 0.0
      %2880 = vmatpush1.msra.mxu0 0.0
      %2881 = vmatprep.subr.mxu0 0.0
      %2882 = vmatpush1.msra.mxu0 0.0
      %2883 = vmatprep.subr.mxu0 0.0
      %2884 = vmatpush1.msra.mxu0 0.0
      %2885 = vmatprep.subr.mxu0 0.0
      %2886 = vmatpush1.msra.mxu0 0.0
      %2887 = vmatprep.subr.mxu0 0.0
      %2888 = vmatpush1.msra.mxu0 0.0
      %2889 = vmatprep.subr.mxu0 0.0
      %2890 = vmatpush1.msra.mxu0 0.0
      %2891 = vmatprep.subr.mxu0 0.0
      %2892 = vmatpush1.msra.mxu0 0.0
      %2893 = vmatprep.subr.mxu0 0.0
      %2894 = vmatpush1.msra.mxu0 %v1976
      %2895 = vmatprep.subr.mxu0 0.0
      %2896 = vmatpush1.msra.mxu0 %v1975
      %2897 = vmatprep.subr.mxu0 0.0
      %2898 = vmatpush1.msra.mxu0 %v1974
      %2899 = vmatprep.subr.mxu0 0.0
      %2900 = vmatpush1.msra.mxu0 %v1973
      %2901 = vmatprep.subr.mxu0 0.0
      %2902 = vmatpush1.msra.mxu0 %v1972
      %2903 = vmatprep.subr.mxu0 0.0
      %2904 = vmatpush1.msra.mxu0 %v1971
      %2905 = vmatprep.subr.mxu0 0.0
      %2906 = vmatpush1.msra.mxu0 %v1970
      %2907 = vmatprep.subr.mxu0 0.0
      %2908 = vmatpush1.msra.mxu0 %v1969
      %2909 = vmatprep.subr.mxu0 0.0
      %2910 = vmatpush2.msra.mxu0 0.0
      %2911 = vmatprep.subr.mxu0 0.0
      %2912 = vmatpush2.msra.mxu0 0.0
      %2913 = vmatprep.subr.mxu0 0.0
      %2914 = vmatpush2.msra.mxu0 0.0
      %2915 = vmatprep.subr.mxu0 0.0
      %2916 = vmatpush2.msra.mxu0 0.0
      %2917 = vmatprep.subr.mxu0 0.0
      %2918 = vmatpush2.msra.mxu0 0.0
      %2919 = vmatprep.subr.mxu0 0.0
      %2920 = vmatpush2.msra.mxu0 0.0
      %2921 = vmatprep.subr.mxu0 0.0
      %2922 = vmatpush2.msra.mxu0 0.0
      %2923 = vmatprep.subr.mxu0 0.0
      %2924 = vmatpush2.msra.mxu0 0.0
      %2925 = vmatprep.subr.mxu0 0.0
      %2926 = vmatpush2.msra.mxu0 0.0
      %2927 = vmatprep.subr.mxu0 0.0
      %2928 = vmatpush2.msra.mxu0 0.0
      %2929 = vmatprep.subr.mxu0 0.0
      %2930 = vmatpush2.msra.mxu0 0.0
      %2931 = vmatprep.subr.mxu0 0.0
      %2932 = vmatpush2.msra.mxu0 0.0
      %2933 = vmatprep.subr.mxu0 0.0
      %2934 = vmatpush2.msra.mxu0 0.0
      %2935 = vmatprep.subr.mxu0 0.0
      %2936 = vmatpush2.msra.mxu0 0.0
      %2937 = vmatprep.subr.mxu0 0.0
      %2938 = vmatpush2.msra.mxu0 0.0
      %2939 = vmatprep.subr.mxu0 0.0
      %2940 = vmatpush2.msra.mxu0 0.0
      %2941 = vmatprep.mubr.f32.mxu0 0.0
      %2942 = vmatmul.mubr.f32.gmra.mxu0 %v2875
      %v2943 = vpop.f32.mrf.mxu0
      %v2944 = vadd.f32 0.0, %v2943
      %v2945 = vpop.f32.mrf.mxu0
      %2946 = vdwg.mxu0
      %v2947 = vrcp.pop %v2944
      %v2948 = vmul.f32 %v2873, %v2947
      %v2949 = vpack.c.bf16 %v2948, %v2948
      %v2950 = vpack.c.bf16 %v2788, %v2787
      %v2951 = vpack.c.bf16 %v2790, %v2789
      %v2952 = vpack.c.bf16 %v2792, %v2791
      %v2953 = vpack.c.bf16 %v2794, %v2793
      %v2955 = vsel %vm1719, %v2949, 0
      %2957 = vmatprep.subr.bf16.mxu0 0
      %2958 = vmatpush1.bf16.msra.mxu0 0
      %2959 = vmatprep.subr.bf16.mxu0 0
      %2960 = vmatpush1.bf16.msra.mxu0 0
      %2961 = vmatprep.subr.bf16.mxu0 0
      %2962 = vmatpush1.bf16.msra.mxu0 0
      %2963 = vmatprep.subr.bf16.mxu0 0
      %2964 = vmatpush1.bf16.msra.mxu0 0
      %2965 = vmatprep.subr.bf16.mxu0 0
      %2966 = vmatpush1.bf16.msra.mxu0 %v2953
      %2967 = vmatprep.subr.bf16.mxu0 0
      %2968 = vmatpush1.bf16.msra.mxu0 %v2952
      %2969 = vmatprep.subr.bf16.mxu0 0
      %2970 = vmatpush1.bf16.msra.mxu0 %v2951
      %2971 = vmatprep.subr.bf16.mxu0 0
      %2972 = vmatpush1.bf16.msra.mxu0 %v2950
      %2973 = vmatprep.subr.bf16.mxu0 0
      %2974 = vmatpush2.bf16.msra.mxu0 0
      %2975 = vmatprep.subr.bf16.mxu0 0
      %2976 = vmatpush2.bf16.msra.mxu0 0
      %2977 = vmatprep.subr.bf16.mxu0 0
      %2978 = vmatpush2.bf16.msra.mxu0 0
      %2979 = vmatprep.subr.bf16.mxu0 0
      %2980 = vmatpush2.bf16.msra.mxu0 0
      %2981 = vmatprep.subr.bf16.mxu0 0
      %2982 = vmatpush2.bf16.msra.mxu0 0
      %2983 = vmatprep.subr.bf16.mxu0 0
      %2984 = vmatpush2.bf16.msra.mxu0 0
      %2985 = vmatprep.subr.bf16.mxu0 0
      %2986 = vmatpush2.bf16.msra.mxu0 0
      %2987 = vmatprep.subr.bf16.mxu0 0
      %2988 = vmatpush2.bf16.msra.mxu0 0
      %2989 = vmatprep.mubr.bf16.mxu0 0
      %2990 = vmatmul.mubr.bf16.gmra.mxu0 %v2955
      %v2991 = vpop.f32.mrf.mxu0
      %v2992 = vadd.f32 0.0, %v2991
      %v2993 = vpop.f32.mrf.mxu0
      %v2994 = vpop.f32.mrf.mxu0
      %v2995 = vpop.f32.mrf.mxu0
      %2996 = vdwg.mxu0
      %s2997 = scalar_lea.vmem %s29, 32
      %v2998 = vld [vmem:[%s2997] sm:$0xf]
      %v2999 = vld [vmem:[%s2997 + $0x4] sm:$0xf]
      %v3000 = vld [vmem:[%s2997 + $0x8] sm:$0xf]
      %v3001 = vld [vmem:[%s2997 + $0xc] sm:$0xf]
      %v3002 = vld [vmem:[%s2997 + $0x10] sm:$0xf]
      %v3003 = vld [vmem:[%s2997 + $0x14] sm:$0xf]
      %v3004 = vld [vmem:[%s2997 + $0x18] sm:$0xf]
      %v3005 = vld [vmem:[%s2997 + $0x1c] sm:$0xf]
      %v3006 = vpack.c.bf16 %v2992, %v2992
      %s3007 = scalar_lea.vmem %s31, 1
      %v3008 = vld [vmem:[%s3007] sm:$0x1]
      %v3010 = vlaneseq
      %v3011 = vshrl.u32 %v3010, 7
      %v3012 = vsub.s32 0, %v3011
      %v3013 = vrot.slane %v3008, %v3012
      %v3023 = vunpack.c.l.b16 %v2998
      %v3024 = vunpack.c.l.b16 %v2999
      %v3025 = vunpack.c.l.b16 %v3000
      %v3026 = vunpack.c.l.b16 %v3001
      %v3027 = vunpack.c.l.b16 %v3002
      %v3028 = vunpack.c.l.b16 %v3003
      %v3029 = vunpack.c.l.b16 %v3004
      %v3030 = vunpack.c.l.b16 %v3005
      %v3031 = vpack.c.b16 %v3024, %v3023
      %v3032 = vpack.c.b16 %v3026, %v3025
      %v3033 = vpack.c.b16 %v3028, %v3027
      %v3034 = vpack.c.b16 %v3030, %v3029
      %v3040 = vsel %vm1719, %v3006, 0
      %3042 = vmatprep.subr.bf16.mxu0 0
      %3043 = vmatpush1.bf16.msra.mxu0 0
      %3044 = vmatprep.subr.bf16.mxu0 0
      %3045 = vmatpush1.bf16.msra.mxu0 0
      %3046 = vmatprep.subr.bf16.mxu0 0
      %3047 = vmatpush1.bf16.msra.mxu0 0
      %3048 = vmatprep.subr.bf16.mxu0 0
      %3049 = vmatpush1.bf16.msra.mxu0 0
      %3050 = vmatprep.subr.bf16.mxu0 0
      %3051 = vmatpush1.bf16.msra.mxu0 %v3034
      %3052 = vmatprep.subr.bf16.mxu0 0
      %3053 = vmatpush1.bf16.msra.mxu0 %v3033
      %3054 = vmatprep.subr.bf16.mxu0 0
      %3055 = vmatpush1.bf16.msra.mxu0 %v3032
      %3056 = vmatprep.subr.bf16.mxu0 0
      %3057 = vmatpush1.bf16.msra.mxu0 %v3031
      %3058 = vmatprep.subr.bf16.mxu0 0
      %3059 = vmatpush2.bf16.msra.mxu0 0
      %3060 = vmatprep.subr.bf16.mxu0 0
      %3061 = vmatpush2.bf16.msra.mxu0 0
      %3062 = vmatprep.subr.bf16.mxu0 0
      %3063 = vmatpush2.bf16.msra.mxu0 0
      %3064 = vmatprep.subr.bf16.mxu0 0
      %3065 = vmatpush2.bf16.msra.mxu0 0
      %3066 = vmatprep.subr.bf16.mxu0 0
      %3067 = vmatpush2.bf16.msra.mxu0 0
      %3068 = vmatprep.subr.bf16.mxu0 0
      %3069 = vmatpush2.bf16.msra.mxu0 0
      %3070 = vmatprep.subr.bf16.mxu0 0
      %3071 = vmatpush2.bf16.msra.mxu0 0
      %3072 = vmatprep.subr.bf16.mxu0 0
      %3073 = vmatpush2.bf16.msra.mxu0 0
      %3074 = vmatprep.mubr.bf16.mxu0 0
      %3075 = vmatmul.mubr.bf16.gmra.mxu0 %v3040
      %v3076 = vpop.f32.mrf.mxu0
      %v3077 = vadd.f32 %v3013, %v3076
      %v3078 = vpop.f32.mrf.mxu0
      %v3079 = vpop.f32.mrf.mxu0
      %v3080 = vpop.f32.mrf.mxu0
      %3081 = vdwg.mxu0
      %v3082 = vadd.f32 %v2671, %v3077
      %s3083 = scalar_lea.vmem %s33, 1
      %v3084 = vld [vmem:[%s3083] sm:$0x1]
      %s3085 = scalar_lea.vmem %s35, 1
      %v3086 = vld [vmem:[%s3085] sm:$0x1]
      %v3087 = vsel %vm1719, %v3082, 0.0
      %3088 = vadd.xlane.f32.xlu0 %v3087
      %v3089 = vpop.xlane.xlu0 %3088
      %v3090 = vmul.f32 %v3089, %v2421
      %v3091 = vsub.f32 %v3082, %v3090
      %v3092 = vmul.f32 %v3091, %v3091
      %v3093 = vsel %vm1719, %v3092, 0.0
      %3094 = vadd.xlane.f32.xlu0 %v3093
      %v3095 = vpop.xlane.xlu0 %3094
      %v3096 = vmul.f32 %v3095, %v2421
      %v3097 = vadd.f32 %v3096, 1e-05
      %v3098 = vrsqrt.pop %v3097
      %v3099 = vmul.f32 %v3091, %v3098
      %v3101 = vlaneseq
      %v3102 = vshrl.u32 %v3101, 7
      %v3103 = vsub.s32 0, %v3102
      %v3104 = vrot.slane %v3084, %v3103
      %v3106 = vmul.f32 %v3099, %v3104
      %v3108 = vlaneseq
      %v3109 = vshrl.u32 %v3108, 7
      %v3110 = vsub.s32 0, %v3109
      %v3111 = vrot.slane %v3086, %v3110
      %v3113 = vadd.f32 %v3106, %v3111
      %s3114 = scalar_lea.vmem %s37, 32
      %v3115 = vld [vmem:[%s3114] sm:$0xf]
      %v3116 = vld [vmem:[%s3114 + $0x4] sm:$0xf]
      %v3117 = vld [vmem:[%s3114 + $0x8] sm:$0xf]
      %v3118 = vld [vmem:[%s3114 + $0xc] sm:$0xf]
      %v3119 = vld [vmem:[%s3114 + $0x10] sm:$0xf]
      %v3120 = vld [vmem:[%s3114 + $0x14] sm:$0xf]
      %v3121 = vld [vmem:[%s3114 + $0x18] sm:$0xf]
      %v3122 = vld [vmem:[%s3114 + $0x1c] sm:$0xf]
      %v3123 = vpack.c.bf16 %v3113, %v3113
      %s3124 = scalar_lea.vmem %s39, 1
      %v3125 = vld [vmem:[%s3124] sm:$0x1]
      %v3127 = vlaneseq
      %v3128 = vshrl.u32 %v3127, 7
      %v3129 = vsub.s32 0, %v3128
      %v3130 = vrot.slane %v3125, %v3129
      %v3140 = vunpack.c.l.b16 %v3115
      %v3141 = vunpack.c.l.b16 %v3116
      %v3142 = vunpack.c.l.b16 %v3117
      %v3143 = vunpack.c.l.b16 %v3118
      %v3144 = vunpack.c.l.b16 %v3119
      %v3145 = vunpack.c.l.b16 %v3120
      %v3146 = vunpack.c.l.b16 %v3121
      %v3147 = vunpack.c.l.b16 %v3122
      %v3148 = vpack.c.b16 %v3141, %v3140
      %v3149 = vpack.c.b16 %v3143, %v3142
      %v3150 = vpack.c.b16 %v3145, %v3144
      %v3151 = vpack.c.b16 %v3147, %v3146
      %v3157 = vsel %vm1719, %v3123, 0
      %3159 = vmatprep.subr.bf16.mxu0 0
      %3160 = vmatpush1.bf16.msra.mxu0 0
      %3161 = vmatprep.subr.bf16.mxu0 0
      %3162 = vmatpush1.bf16.msra.mxu0 0
      %3163 = vmatprep.subr.bf16.mxu0 0
      %3164 = vmatpush1.bf16.msra.mxu0 0
      %3165 = vmatprep.subr.bf16.mxu0 0
      %3166 = vmatpush1.bf16.msra.mxu0 0
      %3167 = vmatprep.subr.bf16.mxu0 0
      %3168 = vmatpush1.bf16.msra.mxu0 %v3151
      %3169 = vmatprep.subr.bf16.mxu0 0
      %3170 = vmatpush1.bf16.msra.mxu0 %v3150
      %3171 = vmatprep.subr.bf16.mxu0 0
      %3172 = vmatpush1.bf16.msra.mxu0 %v3149
      %3173 = vmatprep.subr.bf16.mxu0 0
      %3174 = vmatpush1.bf16.msra.mxu0 %v3148
      %3175 = vmatprep.subr.bf16.mxu0 0
      %3176 = vmatpush2.bf16.msra.mxu0 0
      %3177 = vmatprep.subr.bf16.mxu0 0
      %3178 = vmatpush2.bf16.msra.mxu0 0
      %3179 = vmatprep.subr.bf16.mxu0 0
      %3180 = vmatpush2.bf16.msra.mxu0 0
      %3181 = vmatprep.subr.bf16.mxu0 0
      %3182 = vmatpush2.bf16.msra.mxu0 0
      %3183 = vmatprep.subr.bf16.mxu0 0
      %3184 = vmatpush2.bf16.msra.mxu0 0
      %3185 = vmatprep.subr.bf16.mxu0 0
      %3186 = vmatpush2.bf16.msra.mxu0 0
      %3187 = vmatprep.subr.bf16.mxu0 0
      %3188 = vmatpush2.bf16.msra.mxu0 0
      %3189 = vmatprep.subr.bf16.mxu0 0
      %3190 = vmatpush2.bf16.msra.mxu0 0
      %3191 = vmatprep.mubr.bf16.mxu0 0
      %3192 = vmatmul.mubr.bf16.gmra.mxu0 %v3157
      %v3193 = vpop.f32.mrf.mxu0
      %v3194 = vadd.f32 %v3130, %v3193
      %v3195 = vpop.f32.mrf.mxu0
      %v3196 = vpop.f32.mrf.mxu0
      %v3197 = vpop.f32.mrf.mxu0
      %3198 = vdwg.mxu0
      %v3199 = vmax.f32 %v3194, 0.0
      %s3200 = scalar_lea.vmem %s41, 64
      %v3201 = vld [vmem:[%s3200] sm:$0xf]
      %v3202 = vld [vmem:[%s3200 + $0x4] sm:$0xf]
      %v3203 = vld [vmem:[%s3200 + $0x8] sm:$0xf]
      %v3204 = vld [vmem:[%s3200 + $0xc] sm:$0xf]
      %v3205 = vld [vmem:[%s3200 + $0x10] sm:$0xf]
      %v3206 = vld [vmem:[%s3200 + $0x14] sm:$0xf]
      %v3207 = vld [vmem:[%s3200 + $0x18] sm:$0xf]
      %v3208 = vld [vmem:[%s3200 + $0x1c] sm:$0xf]
      %v3209 = vld [vmem:[%s3200 + $0x20] sm:$0xf]
      %v3210 = vld [vmem:[%s3200 + $0x24] sm:$0xf]
      %v3211 = vld [vmem:[%s3200 + $0x28] sm:$0xf]
      %v3212 = vld [vmem:[%s3200 + $0x2c] sm:$0xf]
      %v3213 = vld [vmem:[%s3200 + $0x30] sm:$0xf]
      %v3214 = vld [vmem:[%s3200 + $0x34] sm:$0xf]
      %v3215 = vld [vmem:[%s3200 + $0x38] sm:$0xf]
      %v3216 = vld [vmem:[%s3200 + $0x3c] sm:$0xf]
      %v3217 = vpack.c.bf16 %v3199, %v3199
      %s3218 = scalar_lea.vmem %s43, 1
      %v3219 = vld [vmem:[%s3218] sm:$0x1]
      %v3221 = vlaneseq
      %v3222 = vshrl.u32 %v3221, 7
      %v3223 = vsub.s32 0, %v3222
      %v3224 = vrot.slane %v3219, %v3223
      %v3242 = vunpack.c.l.b16 %v3201
      %v3243 = vunpack.c.l.b16 %v3202
      %v3244 = vunpack.c.l.b16 %v3203
      %v3245 = vunpack.c.l.b16 %v3204
      %v3246 = vunpack.c.l.b16 %v3205
      %v3247 = vunpack.c.l.b16 %v3206
      %v3248 = vunpack.c.l.b16 %v3207
      %v3249 = vunpack.c.l.b16 %v3208
      %v3250 = vunpack.c.l.b16 %v3209
      %v3251 = vunpack.c.l.b16 %v3210
      %v3252 = vunpack.c.l.b16 %v3211
      %v3253 = vunpack.c.l.b16 %v3212
      %v3254 = vunpack.c.l.b16 %v3213
      %v3255 = vunpack.c.l.b16 %v3214
      %v3256 = vunpack.c.l.b16 %v3215
      %v3257 = vunpack.c.l.b16 %v3216
      %v3258 = vpack.c.b16 %v3243, %v3242
      %v3259 = vpack.c.b16 %v3245, %v3244
      %v3260 = vpack.c.b16 %v3247, %v3246
      %v3261 = vpack.c.b16 %v3249, %v3248
      %v3262 = vpack.c.b16 %v3251, %v3250
      %v3263 = vpack.c.b16 %v3253, %v3252
      %v3264 = vpack.c.b16 %v3255, %v3254
      %v3265 = vpack.c.b16 %v3257, %v3256
      %3274 = vmatprep.subr.bf16.mxu0 0
      %3275 = vmatpush1.bf16.msra.mxu0 %v3265
      %3276 = vmatprep.subr.bf16.mxu0 0
      %3277 = vmatpush1.bf16.msra.mxu0 %v3264
      %3278 = vmatprep.subr.bf16.mxu0 0
      %3279 = vmatpush1.bf16.msra.mxu0 %v3263
      %3280 = vmatprep.subr.bf16.mxu0 0
      %3281 = vmatpush1.bf16.msra.mxu0 %v3262
      %3282 = vmatprep.subr.bf16.mxu0 0
      %3283 = vmatpush1.bf16.msra.mxu0 %v3261
      %3284 = vmatprep.subr.bf16.mxu0 0
      %3285 = vmatpush1.bf16.msra.mxu0 %v3260
      %3286 = vmatprep.subr.bf16.mxu0 0
      %3287 = vmatpush1.bf16.msra.mxu0 %v3259
      %3288 = vmatprep.subr.bf16.mxu0 0
      %3289 = vmatpush1.bf16.msra.mxu0 %v3258
      %3290 = vmatprep.subr.bf16.mxu0 0
      %3291 = vmatpush2.bf16.msra.mxu0 0
      %3292 = vmatprep.subr.bf16.mxu0 0
      %3293 = vmatpush2.bf16.msra.mxu0 0
      %3294 = vmatprep.subr.bf16.mxu0 0
      %3295 = vmatpush2.bf16.msra.mxu0 0
      %3296 = vmatprep.subr.bf16.mxu0 0
      %3297 = vmatpush2.bf16.msra.mxu0 0
      %3298 = vmatprep.subr.bf16.mxu0 0
      %3299 = vmatpush2.bf16.msra.mxu0 0
      %3300 = vmatprep.subr.bf16.mxu0 0
      %3301 = vmatpush2.bf16.msra.mxu0 0
      %3302 = vmatprep.subr.bf16.mxu0 0
      %3303 = vmatpush2.bf16.msra.mxu0 0
      %3304 = vmatprep.subr.bf16.mxu0 0
      %3305 = vmatpush2.bf16.msra.mxu0 0
      %3306 = vmatprep.mubr.bf16.mxu0 0
      %3307 = vmatmul.mubr.bf16.gmra.mxu0 %v3217
      %v3308 = vpop.f32.mrf.mxu0
      %v3309 = vadd.f32 %v3224, %v3308
      %v3310 = vpop.f32.mrf.mxu0
      %v3311 = vpop.f32.mrf.mxu0
      %v3312 = vpop.f32.mrf.mxu0
      %3313 = vdwg.mxu0
      %v3314 = vadd.f32 %v3113, %v3309
      %s3315 = scalar_lea.vmem %s45, 1
      %v3316 = vld [vmem:[%s3315] sm:$0x1]
      %s3317 = scalar_lea.vmem %s47, 1
      %v3318 = vld [vmem:[%s3317] sm:$0x1]
      %v3319 = vsel %vm1719, %v3314, 0.0
      %3320 = vadd.xlane.f32.xlu0 %v3319
      %v3321 = vpop.xlane.xlu0 %3320
      %v3322 = vmul.f32 %v3321, %v2421
      %v3323 = vsub.f32 %v3314, %v3322
      %v3324 = vmul.f32 %v3323, %v3323
      %v3325 = vsel %vm1719, %v3324, 0.0
      %3326 = vadd.xlane.f32.xlu0 %v3325
      %v3327 = vpop.xlane.xlu0 %3326
      %v3328 = vmul.f32 %v3327, %v2421
      %v3329 = vadd.f32 %v3328, 1e-05
      %v3330 = vrsqrt.pop %v3329
      %v3331 = vmul.f32 %v3323, %v3330
      %v3333 = vlaneseq
      %v3334 = vshrl.u32 %v3333, 7
      %v3335 = vsub.s32 0, %v3334
      %v3336 = vrot.slane %v3316, %v3335
      %v3338 = vmul.f32 %v3331, %v3336
      %v3340 = vlaneseq
      %v3341 = vshrl.u32 %v3340, 7
      %v3342 = vsub.s32 0, %v3341
      %v3343 = vrot.slane %v3318, %v3342
      %v3345 = vadd.f32 %v3338, %v3343
      %v3346 = vld [vmem:[%s49] sm:$0xf]
      %v3347 = vld [vmem:[%s49 + $0x4] sm:$0xf]
      %v3348 = vld [vmem:[%s49 + $0x8] sm:$0xf]
      %v3349 = vld [vmem:[%s49 + $0xc] sm:$0xf]
      %v3350 = vld [vmem:[%s49 + $0x10] sm:$0xf]
      %v3351 = vld [vmem:[%s49 + $0x14] sm:$0xf]
      %v3352 = vld [vmem:[%s49 + $0x18] sm:$0xf]
      %v3353 = vld [vmem:[%s49 + $0x1c] sm:$0xf]
      %v3354 = vpack.c.bf16 %v3345, %v3345
      %v3355 = vld [vmem:[#allocation2] sm:$0x1]
      %v3357 = vlaneseq
      %v3358 = vshrl.u32 %v3357, 7
      %v3359 = vsub.s32 0, %v3358
      %v3360 = vrot.slane %v3355, %v3359
      %v3370 = vunpack.c.l.b16 %v3346
      %v3371 = vunpack.c.l.b16 %v3347
      %v3372 = vunpack.c.l.b16 %v3348
      %v3373 = vunpack.c.l.b16 %v3349
      %v3374 = vunpack.c.l.b16 %v3350
      %v3375 = vunpack.c.l.b16 %v3351
      %v3376 = vunpack.c.l.b16 %v3352
      %v3377 = vunpack.c.l.b16 %v3353
      %v3378 = vpack.c.b16 %v3371, %v3370
      %v3379 = vpack.c.b16 %v3373, %v3372
      %v3380 = vpack.c.b16 %v3375, %v3374
      %v3381 = vpack.c.b16 %v3377, %v3376
      %v3387 = vsel %vm1719, %v3354, 0
      %3389 = vmatprep.subr.bf16.mxu0 0
      %3390 = vmatpush1.bf16.msra.mxu0 0
      %3391 = vmatprep.subr.bf16.mxu0 0
      %3392 = vmatpush1.bf16.msra.mxu0 0
      %3393 = vmatprep.subr.bf16.mxu0 0
      %3394 = vmatpush1.bf16.msra.mxu0 0
      %3395 = vmatprep.subr.bf16.mxu0 0
      %3396 = vmatpush1.bf16.msra.mxu0 0
      %3397 = vmatprep.subr.bf16.mxu0 0
      %3398 = vmatpush1.bf16.msra.mxu0 %v3381
      %3399 = vmatprep.subr.bf16.mxu0 0
      %3400 = vmatpush1.bf16.msra.mxu0 %v3380
      %3401 = vmatprep.subr.bf16.mxu0 0
      %3402 = vmatpush1.bf16.msra.mxu0 %v3379
      %3403 = vmatprep.subr.bf16.mxu0 0
      %3404 = vmatpush1.bf16.msra.mxu0 %v3378
      %3405 = vmatprep.subr.bf16.mxu0 0
      %3406 = vmatpush2.bf16.msra.mxu0 0
      %3407 = vmatprep.subr.bf16.mxu0 0
      %3408 = vmatpush2.bf16.msra.mxu0 0
      %3409 = vmatprep.subr.bf16.mxu0 0
      %3410 = vmatpush2.bf16.msra.mxu0 0
      %3411 = vmatprep.subr.bf16.mxu0 0
      %3412 = vmatpush2.bf16.msra.mxu0 0
      %3413 = vmatprep.subr.bf16.mxu0 0
      %3414 = vmatpush2.bf16.msra.mxu0 0
      %3415 = vmatprep.subr.bf16.mxu0 0
      %3416 = vmatpush2.bf16.msra.mxu0 0
      %3417 = vmatprep.subr.bf16.mxu0 0
      %3418 = vmatpush2.bf16.msra.mxu0 0
      %3419 = vmatprep.subr.bf16.mxu0 0
      %3420 = vmatpush2.bf16.msra.mxu0 0
      %3421 = vmatprep.mubr.bf16.mxu0 0
      %3422 = vmatmul.mubr.bf16.gmra.mxu0 %v3387
      %v3423 = vpop.f32.mrf.mxu0
      %v3424 = vadd.f32 %v3360, %v3423
      %v3425 = vpop.f32.mrf.mxu0
      %v3426 = vpop.f32.mrf.mxu0
      %v3427 = vpop.f32.mrf.mxu0
      %3428 = vdwg.mxu0
      %vm3429 = vcmask 7168
      %v3430 = vsel %vm3429, %v3424, -inf
      %v3431 = vrot.slane %v3430, 4
      %v3432 = vmax.f32 %v3430, %v3431
      %v3433 = vrot.slane %v3432, 2
      %v3434 = vmax.f32 %v3432, %v3433
      %v3435 = vrot.slane %v3434, 1
      %v3436 = vmax.f32 %v3434, %v3435
      %v3437 = vsub.f32 %v3424, %v3436
      %v3438 = vmul.f32 %v3437, 1.442695
      %v3439 = vpow.pop %v3438
      %v3440 = vsel %vm3429, %v3439, 0.0
      %v3441 = vrot.slane %v3440, 4
      %v3442 = vadd.f32 %v3440, %v3441
      %v3443 = vrot.slane %v3442, 2
      %v3444 = vadd.f32 %v3442, %v3443
      %v3445 = vrot.slane %v3444, 1
      %v3446 = vadd.f32 %v3444, %v3445
      %v3447 = vrcp.pop %v3446
      %v3448 = vmul.f32 %v3439, %v3447
      %3450 = vset.pattern.permute.xlu0 0
      %3451 = vperm.xlu0 %3450, %v3448
      %v3452 = vpop.permute.xlu0 %3451
      %v3454 = vmul.f32 %v3452, %v3345
      %v3455 = vsel %vm1719, %v3454, 0.0
      %v3456 = vrot.slane %v3455, 4
      %v3457 = vadd.f32 %v3455, %v3456
      %v3458 = vrot.slane %v3457, 2
      %v3459 = vadd.f32 %v3457, %v3458
      %v3460 = vrot.slane %v3459, 1
      %v3461 = vadd.f32 %v3459, %v3460
      %v3462 = vld [vmem:[%s53] sm:$0xf]
      %v3463 = vld [vmem:[%s53 + $0x4] sm:$0xf]
      %v3464 = vld [vmem:[%s53 + $0x8] sm:$0xf]
      %v3465 = vld [vmem:[%s53 + $0xc] sm:$0xf]
      %v3466 = vld [vmem:[%s53 + $0x10] sm:$0xf]
      %v3467 = vld [vmem:[%s53 + $0x14] sm:$0xf]
      %v3468 = vld [vmem:[%s53 + $0x18] sm:$0xf]
      %v3469 = vld [vmem:[%s53 + $0x1c] sm:$0xf]
      %v3470 = vpack.c.bf16 %v3461, %v3461
      %v3471 = vld [vmem:[%s55] sm:$0x1]
      %v3480 = vunpack.c.l.b16 %v3462
      %v3481 = vunpack.c.l.b16 %v3463
      %v3482 = vunpack.c.l.b16 %v3464
      %v3483 = vunpack.c.l.b16 %v3465
      %v3484 = vunpack.c.l.b16 %v3466
      %v3485 = vunpack.c.l.b16 %v3467
      %v3486 = vunpack.c.l.b16 %v3468
      %v3487 = vunpack.c.l.b16 %v3469
      %v3488 = vpack.c.b16 %v3481, %v3480
      %v3489 = vpack.c.b16 %v3483, %v3482
      %v3490 = vpack.c.b16 %v3485, %v3484
      %v3491 = vpack.c.b16 %v3487, %v3486
      %v3497 = vsel %vm1719, %v3470, 0
      %3499 = vmatprep.subr.bf16.mxu0 0
      %3500 = vmatpush1.bf16.msra.mxu0 0
      %3501 = vmatprep.subr.bf16.mxu0 0
      %3502 = vmatpush1.bf16.msra.mxu0 0
      %3503 = vmatprep.subr.bf16.mxu0 0
      %3504 = vmatpush1.bf16.msra.mxu0 0
      %3505 = vmatprep.subr.bf16.mxu0 0
      %3506 = vmatpush1.bf16.msra.mxu0 0
      %3507 = vmatprep.subr.bf16.mxu0 0
      %3508 = vmatpush1.bf16.msra.mxu0 %v3491
      %3509 = vmatprep.subr.bf16.mxu0 0
      %3510 = vmatpush1.bf16.msra.mxu0 %v3490
      %3511 = vmatprep.subr.bf16.mxu0 0
      %3512 = vmatpush1.bf16.msra.mxu0 %v3489
      %3513 = vmatprep.subr.bf16.mxu0 0
      %3514 = vmatpush1.bf16.msra.mxu0 %v3488
      %3515 = vmatprep.subr.bf16.mxu0 0
      %3516 = vmatpush2.bf16.msra.mxu0 0
      %3517 = vmatprep.subr.bf16.mxu0 0
      %3518 = vmatpush2.bf16.msra.mxu0 0
      %3519 = vmatprep.subr.bf16.mxu0 0
      %3520 = vmatpush2.bf16.msra.mxu0 0
      %3521 = vmatprep.subr.bf16.mxu0 0
      %3522 = vmatpush2.bf16.msra.mxu0 0
      %3523 = vmatprep.subr.bf16.mxu0 0
      %3524 = vmatpush2.bf16.msra.mxu0 0
      %3525 = vmatprep.subr.bf16.mxu0 0
      %3526 = vmatpush2.bf16.msra.mxu0 0
      %3527 = vmatprep.subr.bf16.mxu0 0
      %3528 = vmatpush2.bf16.msra.mxu0 0
      %3529 = vmatprep.subr.bf16.mxu0 0
      %3530 = vmatpush2.bf16.msra.mxu0 0
      %3531 = vmatprep.mubr.bf16.mxu0 0
      %3532 = vmatmul.mubr.bf16.gmra.mxu0 %v3497
      %v3533 = vpop.f32.mrf.mxu0
      %v3534 = vadd.f32 %v3471, %v3533
      %v3535 = vpop.f32.mrf.mxu0
      %v3536 = vpop.f32.mrf.mxu0
      %v3537 = vpop.f32.mrf.mxu0
      %3538 = vdwg.mxu0
      %v3539 = vld [vmem:[%s57] sm:$0x1]
      %v3540 = vld [vmem:[%s59] sm:$0x1]
      %vm3541 = vcmask 516096
      %v3542 = vsel %vm3541, %v3534, 0.0
      %3543 = vadd.xlane.f32.xlu0 %v3542
      %v3544 = vpop.xlane.xlu0 %3543
      %v3545 = vmul.f32 %v3544, %v2421
      %v3546 = vsub.f32 %v3534, %v3545
      %v3547 = vmul.f32 %v3546, %v3546
      %v3548 = vsel %vm3541, %v3547, 0.0
      %3549 = vadd.xlane.f32.xlu0 %v3548
      %v3550 = vpop.xlane.xlu0 %3549
      %v3551 = vmul.f32 %v3550, %v2421
      %v3552 = vadd.f32 %v3551, 1e-05
      %v3553 = vrsqrt.pop %v3552
      %v3554 = vmul.f32 %v3546, %v3553
      %v3555 = vmul.f32 %v3554, %v3539
      %v3556 = vadd.f32 %v3555, %v3540
      %v3557 = vmul.f32 %v3556, 0.70710677
      %v3558 = vand.u32 2147483647, %v3557
      %v3559 = vmul.f32 %v3558, 0.3275911
      %v3560 = vadd.f32 %v3559, 1.0
      %v3561 = vrcp.pop %v3560
      %v3562 = vmul.f32 1.0, %v3561
      %v3563 = vmul.f32 %v3562, 1.0614054
      %v3564 = vsub.f32 %v3563, 1.4531521
      %v3565 = vmul.f32 %v3564, %v3562
      %v3566 = vadd.f32 %v3565, 1.4214138
      %v3567 = vmul.f32 %v3566, %v3562
      %v3568 = vsub.f32 %v3567, 0.28449672
      %v3569 = vmul.f32 %v3568, %v3562
      %v3570 = vadd.f32 %v3569, 0.2548296
      %v3571 = vmul.f32 %v3570, %v3562
      %v3572 = vsub.f32 0.0, %v3558
      %v3573 = vmul.f32 %v3572, %v3558
      %v3574 = vmul.f32 %v3573, 1.442695
      %v3575 = vpow.pop %v3574
      %v3576 = vmul.f32 %v3571, %v3575
      %v3577 = vsub.f32 1.0, %v3576
      %vm3578 = vcmp.lt.f32.partialorder %v3557, 0.0
      %v3579 = vsub.f32 0.0, %v3577
      %v3580 = vsel %vm3578, %v3579, %v3577
      %v3581 = vmul.f32 %v3556, 0.5
      %v3582 = vadd.f32 %v3580, 1.0
      %v3583 = vmul.f32 %v3581, %v3582
      %v3584 = vld [vmem:[%s61] sm:$0xf]
      %v3585 = vld [vmem:[%s61 + $0x4] sm:$0xf]
      %v3586 = vld [vmem:[%s61 + $0x8] sm:$0xf]
      %v3587 = vld [vmem:[%s61 + $0xc] sm:$0xf]
      %v3588 = vld [vmem:[%s61 + $0x10] sm:$0xf]
      %v3589 = vld [vmem:[%s61 + $0x14] sm:$0xf]
      %v3590 = vld [vmem:[%s61 + $0x18] sm:$0xf]
      %v3591 = vld [vmem:[%s61 + $0x1c] sm:$0xf]
      %v3592 = vpack.c.bf16 %v3583, %v3583
      %v3593 = vld [vmem:[%s63] sm:$0x1]
      %v3602 = vunpack.c.l.b16 %v3584
      %v3603 = vunpack.c.l.b16 %v3585
      %v3604 = vunpack.c.l.b16 %v3586
      %v3605 = vunpack.c.l.b16 %v3587
      %v3606 = vunpack.c.l.b16 %v3588
      %v3607 = vunpack.c.l.b16 %v3589
      %v3608 = vunpack.c.l.b16 %v3590
      %v3609 = vunpack.c.l.b16 %v3591
      %v3610 = vpack.c.b16 %v3603, %v3602
      %v3611 = vpack.c.b16 %v3605, %v3604
      %v3612 = vpack.c.b16 %v3607, %v3606
      %v3613 = vpack.c.b16 %v3609, %v3608
      %v3619 = vsel %vm1719, %v3592, 0
      %3621 = vmatprep.subr.bf16.mxu0 0
      %3622 = vmatpush1.bf16.msra.mxu0 0
      %3623 = vmatprep.subr.bf16.mxu0 0
      %3624 = vmatpush1.bf16.msra.mxu0 0
      %3625 = vmatprep.subr.bf16.mxu0 0
      %3626 = vmatpush1.bf16.msra.mxu0 0
      %3627 = vmatprep.subr.bf16.mxu0 0
      %3628 = vmatpush1.bf16.msra.mxu0 0
      %3629 = vmatprep.subr.bf16.mxu0 0
      %3630 = vmatpush1.bf16.msra.mxu0 %v3613
      %3631 = vmatprep.subr.bf16.mxu0 0
      %3632 = vmatpush1.bf16.msra.mxu0 %v3612
      %3633 = vmatprep.subr.bf16.mxu0 0
      %3634 = vmatpush1.bf16.msra.mxu0 %v3611
      %3635 = vmatprep.subr.bf16.mxu0 0
      %3636 = vmatpush1.bf16.msra.mxu0 %v3610
      %3637 = vmatprep.subr.bf16.mxu0 0
      %3638 = vmatpush2.bf16.msra.mxu0 0
      %3639 = vmatprep.subr.bf16.mxu0 0
      %3640 = vmatpush2.bf16.msra.mxu0 0
      %3641 = vmatprep.subr.bf16.mxu0 0
      %3642 = vmatpush2.bf16.msra.mxu0 0
      %3643 = vmatprep.subr.bf16.mxu0 0
      %3644 = vmatpush2.bf16.msra.mxu0 0
      %3645 = vmatprep.subr.bf16.mxu0 0
      %3646 = vmatpush2.bf16.msra.mxu0 0
      %3647 = vmatprep.subr.bf16.mxu0 0
      %3648 = vmatpush2.bf16.msra.mxu0 0
      %3649 = vmatprep.subr.bf16.mxu0 0
      %3650 = vmatpush2.bf16.msra.mxu0 0
      %3651 = vmatprep.subr.bf16.mxu0 0
      %3652 = vmatpush2.bf16.msra.mxu0 0
      %3653 = vmatprep.mubr.bf16.mxu0 0
      %3654 = vmatmul.mubr.bf16.gmra.mxu0 %v3619
      %v3655 = vpop.f32.mrf.mxu0
      %v3656 = vadd.f32 %v3593, %v3655
      %v3657 = vpop.f32.mrf.mxu0
      %v3658 = vpop.f32.mrf.mxu0
      %v3659 = vpop.f32.mrf.mxu0
      %3660 = vdwg.mxu0
      %v3661 = vld [vmem:[%s65] sm:$0x1]
      %v3662 = vld [vmem:[%s67] sm:$0x1]
      %vm3663 = vcmask 253952
      %v3664 = vsel %vm3663, %v3656, 0.0
      %3665 = vadd.xlane.f32.xlu0 %v3664
      %v3666 = vpop.xlane.xlu0 %3665
      %v3667 = vrcp.pop 32.0
      %v3668 = vmul.f32 %v3666, %v3667
      %v3669 = vsub.f32 %v3656, %v3668
      %v3670 = vmul.f32 %v3669, %v3669
      %v3671 = vsel %vm3663, %v3670, 0.0
      %3672 = vadd.xlane.f32.xlu0 %v3671
      %v3673 = vpop.xlane.xlu0 %3672
      %v3674 = vmul.f32 %v3673, %v3667
      %v3675 = vadd.f32 %v3674, 1e-05
      %v3676 = vrsqrt.pop %v3675
      %v3677 = vmul.f32 %v3669, %v3676
      %v3678 = vmul.f32 %v3677, %v3661
      %v3679 = vadd.f32 %v3678, %v3662
      %v3680 = vmul.f32 %v3679, 0.70710677
      %v3681 = vand.u32 2147483647, %v3680
      %v3682 = vmul.f32 %v3681, 0.3275911
      %v3683 = vadd.f32 %v3682, 1.0
      %v3684 = vrcp.pop %v3683
      %v3685 = vmul.f32 1.0, %v3684
      %v3686 = vmul.f32 %v3685, 1.0614054
      %v3687 = vsub.f32 %v3686, 1.4531521
      %v3688 = vmul.f32 %v3687, %v3685
      %v3689 = vadd.f32 %v3688, 1.4214138
      %v3690 = vmul.f32 %v3689, %v3685
      %v3691 = vsub.f32 %v3690, 0.28449672
      %v3692 = vmul.f32 %v3691, %v3685
      %v3693 = vadd.f32 %v3692, 0.2548296
      %v3694 = vmul.f32 %v3693, %v3685
      %v3695 = vsub.f32 0.0, %v3681
      %v3696 = vmul.f32 %v3695, %v3681
      %v3697 = vmul.f32 %v3696, 1.442695
      %v3698 = vpow.pop %v3697
      %v3699 = vmul.f32 %v3694, %v3698
      %v3700 = vsub.f32 1.0, %v3699
      %vm3701 = vcmp.lt.f32.partialorder %v3680, 0.0
      %v3702 = vsub.f32 0.0, %v3700
      %v3703 = vsel %vm3701, %v3702, %v3700
      %v3704 = vmul.f32 %v3679, 0.5
      %v3705 = vadd.f32 %v3703, 1.0
      %v3706 = vmul.f32 %v3704, %v3705
      %v3707 = vld [vmem:[%s69] sm:$0xf]
      %v3708 = vld [vmem:[%s69 + $0x4] sm:$0xf]
      %v3709 = vld [vmem:[%s69 + $0x8] sm:$0xf]
      %v3710 = vld [vmem:[%s69 + $0xc] sm:$0xf]
      %v3711 = vpack.c.bf16 %v3706, %v3706
      %v3712 = vld [vmem:[%s71] sm:$0x1]
      %v3717 = vunpack.c.l.b16 %v3707
      %v3718 = vunpack.c.l.b16 %v3708
      %v3719 = vunpack.c.l.b16 %v3709
      %v3720 = vunpack.c.l.b16 %v3710
      %v3721 = vpack.c.b16 %v3718, %v3717
      %v3722 = vpack.c.b16 %v3720, %v3719
      %vm3725 = vcmask 261120
      %v3727 = vsel %vm3725, %v3711, 0
      %3729 = vmatprep.subr.bf16.mxu0 0
      %3730 = vmatpush1.bf16.msra.mxu0 0
      %3731 = vmatprep.subr.bf16.mxu0 0
      %3732 = vmatpush1.bf16.msra.mxu0 0
      %3733 = vmatprep.subr.bf16.mxu0 0
      %3734 = vmatpush1.bf16.msra.mxu0 0
      %3735 = vmatprep.subr.bf16.mxu0 0
      %3736 = vmatpush1.bf16.msra.mxu0 0
      %3737 = vmatprep.subr.bf16.mxu0 0
      %3738 = vmatpush1.bf16.msra.mxu0 0
      %3739 = vmatprep.subr.bf16.mxu0 0
      %3740 = vmatpush1.bf16.msra.mxu0 0
      %3741 = vmatprep.subr.bf16.mxu0 0
      %3742 = vmatpush1.bf16.msra.mxu0 %v3722
      %3743 = vmatprep.subr.bf16.mxu0 0
      %3744 = vmatpush1.bf16.msra.mxu0 %v3721
      %3745 = vmatprep.subr.bf16.mxu0 0
      %3746 = vmatpush2.bf16.msra.mxu0 0
      %3747 = vmatprep.subr.bf16.mxu0 0
      %3748 = vmatpush2.bf16.msra.mxu0 0
      %3749 = vmatprep.subr.bf16.mxu0 0
      %3750 = vmatpush2.bf16.msra.mxu0 0
      %3751 = vmatprep.subr.bf16.mxu0 0
      %3752 = vmatpush2.bf16.msra.mxu0 0
      %3753 = vmatprep.subr.bf16.mxu0 0
      %3754 = vmatpush2.bf16.msra.mxu0 0
      %3755 = vmatprep.subr.bf16.mxu0 0
      %3756 = vmatpush2.bf16.msra.mxu0 0
      %3757 = vmatprep.subr.bf16.mxu0 0
      %3758 = vmatpush2.bf16.msra.mxu0 0
      %3759 = vmatprep.subr.bf16.mxu0 0
      %3760 = vmatpush2.bf16.msra.mxu0 0
      %3761 = vmatprep.mubr.bf16.mxu0 0
      %3762 = vmatmul.mubr.bf16.gmra.mxu0 %v3727
      %v3763 = vpop.f32.mrf.mxu0
      %v3764 = vadd.f32 %v3712, %v3763
      %v3765 = vpop.f32.mrf.mxu0
      %v3766 = vpop.f32.mrf.mxu0
      %v3767 = vpop.f32.mrf.mxu0
      %3768 = vdwg.mxu0
      %v3769 = vld [vmem:[%s73] sm:$0x1]
      %v3770 = vld [vmem:[%s75] sm:$0x1]
      %vm3771 = vcmask 122880
      %v3772 = vsel %vm3771, %v3764, 0.0
      %3773 = vadd.xlane.f32.xlu0 %v3772
      %v3774 = vpop.xlane.xlu0 %3773
      %v3775 = vrcp.pop 16.0
      %v3776 = vmul.f32 %v3774, %v3775
      %v3777 = vsub.f32 %v3764, %v3776
      %v3778 = vmul.f32 %v3777, %v3777
      %v3779 = vsel %vm3771, %v3778, 0.0
      %3780 = vadd.xlane.f32.xlu0 %v3779
      %v3781 = vpop.xlane.xlu0 %3780
      %v3782 = vmul.f32 %v3781, %v3775
      %v3783 = vadd.f32 %v3782, 1e-05
      %v3784 = vrsqrt.pop %v3783
      %v3785 = vmul.f32 %v3777, %v3784
      %v3786 = vmul.f32 %v3785, %v3769
      %v3787 = vadd.f32 %v3786, %v3770
      %v3788 = vmul.f32 %v3787, 0.70710677
      %v3789 = vand.u32 2147483647, %v3788
      %v3790 = vmul.f32 %v3789, 0.3275911
      %v3791 = vadd.f32 %v3790, 1.0
      %v3792 = vrcp.pop %v3791
      %v3793 = vmul.f32 1.0, %v3792
      %v3794 = vmul.f32 %v3793, 1.0614054
      %v3795 = vsub.f32 %v3794, 1.4531521
      %v3796 = vmul.f32 %v3795, %v3793
      %v3797 = vadd.f32 %v3796, 1.4214138
      %v3798 = vmul.f32 %v3797, %v3793
      %v3799 = vsub.f32 %v3798, 0.28449672
      %v3800 = vmul.f32 %v3799, %v3793
      %v3801 = vadd.f32 %v3800, 0.2548296
      %v3802 = vmul.f32 %v3801, %v3793
      %v3803 = vsub.f32 0.0, %v3789
      %v3804 = vmul.f32 %v3803, %v3789
      %v3805 = vmul.f32 %v3804, 1.442695
      %v3806 = vpow.pop %v3805
      %v3807 = vmul.f32 %v3802, %v3806
      %v3808 = vsub.f32 1.0, %v3807
      %vm3809 = vcmp.lt.f32.partialorder %v3788, 0.0
      %v3810 = vsub.f32 0.0, %v3808
      %v3811 = vsel %vm3809, %v3810, %v3808
      %v3812 = vmul.f32 %v3787, 0.5
      %v3813 = vadd.f32 %v3811, 1.0
      %v3814 = vmul.f32 %v3812, %v3813
      %v3815 = vld [vmem:[%s77] sm:$0xf]
      %v3816 = vld [vmem:[%s77 + $0x4] sm:$0xf]
      %v3817 = vpack.c.bf16 %v3814, %v3814
      %v3818 = vld [vmem:[#allocation3] sm:$0x1]
      %v3821 = vunpack.c.l.b16 %v3815
      %v3822 = vunpack.c.l.b16 %v3816
      %v3823 = vpack.c.b16 %v3822, %v3821
      %vm3825 = vcmask 130048
      %v3827 = vsel %vm3825, %v3817, 0
      %3829 = vmatprep.subr.bf16.mxu0 0
      %3830 = vmatpush1.bf16.msra.mxu0 0
      %3831 = vmatprep.subr.bf16.mxu0 0
      %3832 = vmatpush1.bf16.msra.mxu0 0
      %3833 = vmatprep.subr.bf16.mxu0 0
      %3834 = vmatpush1.bf16.msra.mxu0 0
      %3835 = vmatprep.subr.bf16.mxu0 0
      %3836 = vmatpush1.bf16.msra.mxu0 0
      %3837 = vmatprep.subr.bf16.mxu0 0
      %3838 = vmatpush1.bf16.msra.mxu0 0
      %3839 = vmatprep.subr.bf16.mxu0 0
      %3840 = vmatpush1.bf16.msra.mxu0 0
      %3841 = vmatprep.subr.bf16.mxu0 0
      %3842 = vmatpush1.bf16.msra.mxu0 0
      %3843 = vmatprep.subr.bf16.mxu0 0
      %3844 = vmatpush1.bf16.msra.mxu0 %v3823
      %3845 = vmatprep.subr.bf16.mxu0 0
      %3846 = vmatpush2.bf16.msra.mxu0 0
      %3847 = vmatprep.subr.bf16.mxu0 0
      %3848 = vmatpush2.bf16.msra.mxu0 0
      %3849 = vmatprep.subr.bf16.mxu0 0
      %3850 = vmatpush2.bf16.msra.mxu0 0
      %3851 = vmatprep.subr.bf16.mxu0 0
      %3852 = vmatpush2.bf16.msra.mxu0 0
      %3853 = vmatprep.subr.bf16.mxu0 0
      %3854 = vmatpush2.bf16.msra.mxu0 0
      %3855 = vmatprep.subr.bf16.mxu0 0
      %3856 = vmatpush2.bf16.msra.mxu0 0
      %3857 = vmatprep.subr.bf16.mxu0 0
      %3858 = vmatpush2.bf16.msra.mxu0 0
      %3859 = vmatprep.subr.bf16.mxu0 0
      %3860 = vmatpush2.bf16.msra.mxu0 0
      %3861 = vmatprep.mubr.bf16.mxu0 0
      %3862 = vmatmul.mubr.bf16.gmra.mxu0 %v3827
      %v3863 = vpop.f32.mrf.mxu0
      %v3864 = vadd.f32 %v3818, %v3863
      %v3865 = vpop.f32.mrf.mxu0
      %v3866 = vpop.f32.mrf.mxu0
      %v3867 = vpop.f32.mrf.mxu0
      %3868 = vdwg.mxu0
      %v3869 = vtanh.pop %v3864
      %vm3870 = vcmask 0
      %3871 = vst.msk [vmem:[%s1207] sm:$0x1] %vm3870, %v3869
      %p3872 = scmp.lt.s32.totalorder %s96, 1
      %s3873 = scalar_select %p3872, %s96, 1
      %s3874 = scalar_lea.vmem %s81, %s3873
      // Predicated region
      $region181: #{meta_learning_transformer_forward.1} parent=179 // pred_check
        %p3875 = pneg %p959
      $region182: #{meta_learning_transformer_forward.1} parent=179 // pred_check_branch
        %3877 = sbr.rel (%p3875) target = $region184
      $region183: #{meta_learning_transformer_forward.1} parent=179 // pred_region
        _
      $region184: #{meta_learning_transformer_forward.1} parent=179 // pred_fallthru
        _
    $region180: #{meta_learning_transformer_forward.1} parent=5 // pred_fallthru
      _
    %p3878 = scmp.le.s32.totalorder 2, %s91
    // Predicated region
    $region185: #{meta_learning_transformer_forward.1} parent=5 // pred_check
      %p3879 = pneg %p3878
    $region186: #{meta_learning_transformer_forward.1} parent=5 // pred_check_branch
      %3881 = sbr.rel (%p3879) target = $region188
    $region187: #{meta_learning_transformer_forward.1} parent=5 // pred_region
      %s3882 = ssub.s32 %s91, 2
      // Predicated region
      $region189: #{meta_learning_transformer_forward.1} parent=187 // pred_check
        %p3883 = pneg %p965
      $region190: #{meta_learning_transformer_forward.1} parent=187 // pred_check_branch
        %3885 = sbr.rel (%p3883) target = $region192
      $region191: #{meta_learning_transformer_forward.1} parent=187 // pred_region
        %p3886 = scmp.lt.s32.totalorder %s97, 1
        %s3887 = scalar_select %p3886, %s97, 1
        %s3888 = scalar_lea.vmem %s81, %s3887
      $region192: #{meta_learning_transformer_forward.1} parent=187 // pred_fallthru
        _
    $region188: #{meta_learning_transformer_forward.1} parent=5 // pred_fallthru
      _
  $region6: #{meta_learning_transformer_forward.1} parent=0 // loop_footer
    %s95 = sadd.s32 1, %s91
  $region7: #{meta_learning_transformer_forward.1} parent=0 // loop_footer_branch
    %90 = sbr.rel target = $region3
  $region8: #{meta_learning_transformer_forward.1} parent=0 // loop_exit
    _

</llo_original>
